<compile_context>
chip_gen: v7x
topology: tpu7x:2x2x1
jax: 0.10.0
libtpu: 0.0.40
codegen_flags: <defaults>
</compile_context>

<pallas_src>
import functools
import math

import numpy as np

import jax
import jax.numpy as jnp
from jax.experimental import pallas as pl
from jax.experimental.pallas import tpu as pltpu

VMEM_SPEC = pl.BlockSpec(memory_space=pltpu.MemorySpace.VMEM)


# ----------------------------------------------------------------------------
# Fused kernel: L-layer LSTM (lstm_per3) over seq steps + final fc row.
# ----------------------------------------------------------------------------
def _lstm_per3_fc_kernel(x_ref, w0_ref, b0_ref, wh0_ref, wcat_ref, b_ref,
                         h0_ref, c0_ref, fcw_ref, fcb_ref, pred_ref,
                         *, seq, batch, L, H):
    # x_ref:    (seq*batch, 13)        time-major flattened input slice x[:, :, 26:39]
    # w0_ref:   (13, 4H)               layer-0 input weights (gate cols [i|f|o|g])
    # b0_ref:   (1, 4H)                layer-0 bias (b_ih + b_hh), folded into x-proj
    # wh0_ref:  (H, 4H)                layer-0 recurrent weights
    # wcat_ref: (L-1, 2H, 4H)          layers 1..L-1 fused [W_ih^T ; W_hh^T]
    # b_ref:    (L-1, 1, 4H)           layers 1..L-1 bias (b_ih + b_hh)
    # h0/c0:    (L, batch, H)          initial states (the module's h_1 / c_1)
    # fcw/fcb:  (H, O) / (1, O)
    # pred_ref: (batch, O)

    # Hoisted layer-0 input projection for all timesteps at once (bias folded).
    x_proj = (jnp.dot(x_ref[...], w0_ref[...], preferred_element_type=jnp.float32)
              + b0_ref[...])                                    # (seq*batch, 4H)
    wh0 = wh0_ref[...]                                          # (H, 4H)

    # Pre-broadcast biases once (JAX does not CSE broadcast_in_dim per cell).
    bias = [jnp.broadcast_to(b_ref[l], (batch, 4 * H)) for l in range(L - 1)]

    # h / c live in registers for the whole recurrence.
    h = [h0_ref[l] for l in range(L)]
    c = [c0_ref[l] for l in range(L)]

    def cell(gates, c_prev):
        sg = jax.nn.sigmoid(gates[:, :3 * H])     # one EUP pass over [i|f|o]
        g = jnp.tanh(gates[:, 3 * H:4 * H])
        i_g = sg[:, 0:H]
        f_g = sg[:, H:2 * H]
        o_g = sg[:, 2 * H:3 * H]
        c_new = f_g * c_prev + i_g * g
        return o_g * jnp.tanh(c_new), c_new

    for t in range(seq):
        # Layer 0: precomputed input projection + recurrent matmul.
        gates = (x_proj[t * batch:(t + 1) * batch, :]
                 + jnp.dot(h[0], wh0, preferred_element_type=jnp.float32))
        h[0], c[0] = cell(gates, c[0])
        # Layers 1..L-1: one fused matmul per cell on [h_below | h_self].
        for l in range(1, L):
            xh = jnp.concatenate([h[l - 1], h[l]], axis=-1)     # (batch, 2H)
            gates = (jnp.dot(xh, wcat_ref[l - 1],
                             preferred_element_type=jnp.float32)
                     + bias[l - 1])
            h[l], c[l] = cell(gates, c[l])

    # fc applied only to the single row the module actually returns:
    # pred[:, -1, :] == fc(output_x3[:, -1, :]).
    pred_ref[...] = (jnp.dot(h[L - 1], fcw_ref[...],
                             preferred_element_type=jnp.float32)
                     + fcb_ref[...])


# ----------------------------------------------------------------------------
# Host wrapper
# ----------------------------------------------------------------------------
def cnn_multi_lstm_forward(x, params, h_1, c_1):
    """x: (batch, seq, 39) -> pred: (batch, output_size).

    Mirrors CNNmultiLSTM.forward with the module's random initial state (h_1, c_1)
    passed in explicitly.  conv / main LSTM / lstm_per1 / lstm_per2 never reach the
    returned pred[:, -1, :] and are intentionally not computed.
    """
    batch, seq, _ = x.shape
    L, _, H = h_1.shape
    per3 = params["per3"]
    out_size = params["fc_wT"].shape[1]

    # Only lstm_per3's input slice matters; time-major, flattened for the hoisted
    # layer-0 projection (batch=8 rows keep every per-step slice sublane-aligned).
    x3 = jnp.transpose(x[:, :, 26:39], (1, 0, 2)).reshape(seq * batch, 13)

    kernel = functools.partial(_lstm_per3_fc_kernel,
                               seq=seq, batch=batch, L=L, H=H)
    return pl.pallas_call(
        kernel,
        out_shape=jax.ShapeDtypeStruct((batch, out_size), jnp.float32),
        in_specs=[VMEM_SPEC] * 10,
        out_specs=VMEM_SPEC,
    )(x3, per3["w0T"], per3["b0"], per3["wh0T"], per3["wcatT"], per3["b"],
      h_1, c_1, params["fc_wT"], params["fc_b"])


# ----------------------------------------------------------------------------
# Parameter init (PyTorch nn.LSTM / nn.Linear layouts) and packing helpers
# ----------------------------------------------------------------------------
def _uniform(key, shape, bound):
    return jax.random.uniform(key, shape, jnp.float32, -bound, bound)


def init_pt_lstm(keygen, input_size, H, L):
    """Per-layer PyTorch-layout nn.LSTM parameters (gate rows ordered i,f,g,o)."""
    bound = 1.0 / math.sqrt(H)
    layers = []
    for l in range(L):
        in_l = input_size if l == 0 else H
        layers.append(dict(
            w_ih=_uniform(next(keygen), (4 * H, in_l), bound),
            w_hh=_uniform(next(keygen), (4 * H, H), bound),
            b_ih=_uniform(next(keygen), (4 * H,), bound),
            b_hh=_uniform(next(keygen), (4 * H,), bound)))
    return layers


def _reorder_gates(a, H, axis=0):
    """PyTorch gate order along `axis` is (i, f, g, o); reorder to (i, f, o, g)."""
    i, f, g, o = (np.take(a, range(k * H, (k + 1) * H), axis=axis)
                  for k in range(4))
    return np.concatenate([i, f, o, g], axis=axis)


def pack_lstm_for_kernel(layers, H, L):
    """PyTorch per-layer params -> kernel layout.

    Layer 0: separate input weight (transposed, gate cols [i|f|o|g]) + folded bias
    and recurrent weight.  Layers >=1: fused [W_ih^T ; W_hh^T] of shape (2H, 4H) so
    each cell does a single matmul on concat([h_below, h_self])."""
    l0 = layers[0]
    w0T = _reorder_gates(np.asarray(l0["w_ih"]), H).T.astype(np.float32)
    b0 = _reorder_gates(np.asarray(l0["b_ih"]) + np.asarray(l0["b_hh"]),
                        H).reshape(1, 4 * H).astype(np.float32)
    wh0T = _reorder_gates(np.asarray(l0["w_hh"]), H).T.astype(np.float32)

    wcat = np.zeros((max(L - 1, 1), 2 * H, 4 * H), np.float32)
    b = np.zeros((max(L - 1, 1), 1, 4 * H), np.float32)
    for l in range(1, L):
        wcat[l - 1, :H, :] = _reorder_gates(np.asarray(layers[l]["w_ih"]), H).T
        wcat[l - 1, H:, :] = _reorder_gates(np.asarray(layers[l]["w_hh"]), H).T
        b[l - 1, 0, :] = _reorder_gates(
            np.asarray(layers[l]["b_ih"]) + np.asarray(layers[l]["b_hh"]), H)

    return dict(w0T=jnp.asarray(w0T), b0=jnp.asarray(b0), wh0T=jnp.asarray(wh0T),
                wcatT=jnp.asarray(wcat), b=jnp.asarray(b))


# ----------------------------------------------------------------------------
# Pure-JAX reference (PyTorch semantics) for a correctness check
# ----------------------------------------------------------------------------
def ref_forward(x, per3_layers, fc_w, fc_b, h_1, c_1):
    batch, seq, _ = x.shape
    H = h_1.shape[-1]
    L = len(per3_layers)
    h = [h_1[l] for l in range(L)]
    c = [c_1[l] for l in range(L)]
    top = None
    for t in range(seq):
        inp = x[:, t, 26:39]
        for l, p in enumerate(per3_layers):
            gates = (inp @ p["w_ih"].T + h[l] @ p["w_hh"].T
                     + p["b_ih"] + p["b_hh"])
            i = jax.nn.sigmoid(gates[:, 0:H])
            f = jax.nn.sigmoid(gates[:, H:2 * H])
            g = jnp.tanh(gates[:, 2 * H:3 * H])
            o = jax.nn.sigmoid(gates[:, 3 * H:4 * H])
            c[l] = f * c[l] + i * g
            h[l] = o * jnp.tanh(c[l])
            inp = h[l]
        top = inp
    return top @ fc_w.T + fc_b[None, :]


# ----------------------------------------------------------------------------
# Demo (shapes consistent with the module: 39 features split 11/15/13)
# ----------------------------------------------------------------------------
if __name__ == "__main__":
    batch = 8
    seq_length = 5
    in_channels = 39
    hidden_size = 12
    num_layers = 6
    output_size = 1

    keys = iter(jax.random.split(jax.random.PRNGKey(0), 64))

    # Only lstm_per3 (13 input features) and fc reach the module's output.
    lstm_per3 = init_pt_lstm(keys, 13, hidden_size, num_layers)

    params = {"per3": pack_lstm_for_kernel(lstm_per3, hidden_size, num_layers)}

    fc_bound = 1.0 / math.sqrt(hidden_size)
    fc_w = _uniform(next(keys), (output_size, hidden_size), fc_bound)   # (O, H)
    fc_b = _uniform(next(keys), (output_size,), fc_bound)               # (O,)
    params["fc_wT"] = jnp.transpose(fc_w)                               # (H, O)
    params["fc_b"] = fc_b.reshape(1, output_size)                       # (1, O)

    # Input and the (deterministic here) random initial state the module draws
    # and shares across lstm_per1/2/3.
    x = jax.random.normal(next(keys), (batch, seq_length, in_channels),
                          jnp.float32)
    h_1 = jax.random.normal(next(keys), (num_layers, batch, hidden_size),
                            jnp.float32)
    c_1 = jax.random.normal(next(keys), (num_layers, batch, hidden_size),
                            jnp.float32)

    fwd = jax.jit(cnn_multi_lstm_forward)
    pred = jax.block_until_ready(fwd(x, params, h_1, c_1))
    assert pred.shape == (batch, output_size)

    # Correctness check against the pure-JAX PyTorch-semantics reference.
    ref = ref_forward(x, lstm_per3, fc_w, fc_b, h_1, c_1)
    np.testing.assert_allclose(np.asarray(pred), np.asarray(ref),
                               rtol=1e-3, atol=1e-3)

    print("KERNEL_OK")
</pallas_src>

<mosaic_0001>
module attributes {stable_mosaic.version = 11 : i64} {
  func.func @_lstm_per3_fc_kernel(%arg0: memref<40x13xf32, #tpu.memory_space<vmem>>, %arg1: memref<13x48xf32, #tpu.memory_space<vmem>>, %arg2: memref<1x48xf32, #tpu.memory_space<vmem>>, %arg3: memref<12x48xf32, #tpu.memory_space<vmem>>, %arg4: memref<5x24x48xf32, #tpu.memory_space<vmem>>, %arg5: memref<5x1x48xf32, #tpu.memory_space<vmem>>, %arg6: memref<6x8x12xf32, #tpu.memory_space<vmem>>, %arg7: memref<6x8x12xf32, #tpu.memory_space<vmem>>, %arg8: memref<12x1xf32, #tpu.memory_space<vmem>>, %arg9: memref<1x1xf32, #tpu.memory_space<vmem>>, %arg10: memref<8x1xf32, #tpu.memory_space<vmem>>) attributes {dimension_semantics = [], scalar_prefetch = 0 : i64, scratch_operands = 0 : i64, tpu.core_type = #tpu.core_type<tc>} {
    %c0 = arith.constant 0 : index
    %c0_0 = arith.constant 0 : index
    %0 = vector.load %arg0[%c0, %c0_0] : memref<40x13xf32, #tpu.memory_space<vmem>>, vector<40x13xf32>
    %c0_1 = arith.constant 0 : index
    %c0_2 = arith.constant 0 : index
    %1 = vector.load %arg1[%c0_1, %c0_2] : memref<13x48xf32, #tpu.memory_space<vmem>>, vector<13x48xf32>
    %cst = arith.constant dense<0.000000e+00> : vector<40x48xf32>
    %2 = tpu.matmul %0, %1, %cst {dimension_numbers = #tpu.dot_dimension_numbers<[1], [0], [0], [1], [0, 0, 1, 1], [], []>} : vector<40x13xf32>, vector<13x48xf32>, vector<40x48xf32> -> vector<40x48xf32>
    %c0_3 = arith.constant 0 : index
    %c0_4 = arith.constant 0 : index
    %3 = vector.load %arg2[%c0_3, %c0_4] : memref<1x48xf32, #tpu.memory_space<vmem>>, vector<1x48xf32>
    %4 = vector.broadcast %3 : vector<1x48xf32> to vector<40x48xf32>
    %5 = arith.addf %2, %4 : vector<40x48xf32>
    %c0_5 = arith.constant 0 : index
    %c0_6 = arith.constant 0 : index
    %6 = vector.load %arg3[%c0_5, %c0_6] : memref<12x48xf32, #tpu.memory_space<vmem>>, vector<12x48xf32>
    %c0_7 = arith.constant 0 : index
    %c0_8 = arith.constant 0 : index
    %c0_9 = arith.constant 0 : index
    %7 = vector.load %arg5[%c0_7, %c0_8, %c0_9] : memref<5x1x48xf32, #tpu.memory_space<vmem>>, vector<1x1x48xf32>
    %8 = vector.shape_cast %7 : vector<1x1x48xf32> to vector<1x48xf32>
    %9 = vector.shape_cast %8 : vector<1x48xf32> to vector<1x48xf32>
    %10 = vector.broadcast %9 : vector<1x48xf32> to vector<8x48xf32>
    %c1 = arith.constant 1 : index
    %c0_10 = arith.constant 0 : index
    %c0_11 = arith.constant 0 : index
    %11 = vector.load %arg5[%c1, %c0_10, %c0_11] : memref<5x1x48xf32, #tpu.memory_space<vmem>>, vector<1x1x48xf32>
    %12 = vector.shape_cast %11 : vector<1x1x48xf32> to vector<1x48xf32>
    %13 = vector.shape_cast %12 : vector<1x48xf32> to vector<1x48xf32>
    %14 = vector.broadcast %13 : vector<1x48xf32> to vector<8x48xf32>
    %c2 = arith.constant 2 : index
    %c0_12 = arith.constant 0 : index
    %c0_13 = arith.constant 0 : index
    %15 = vector.load %arg5[%c2, %c0_12, %c0_13] : memref<5x1x48xf32, #tpu.memory_space<vmem>>, vector<1x1x48xf32>
    %16 = vector.shape_cast %15 : vector<1x1x48xf32> to vector<1x48xf32>
    %17 = vector.shape_cast %16 : vector<1x48xf32> to vector<1x48xf32>
    %18 = vector.broadcast %17 : vector<1x48xf32> to vector<8x48xf32>
    %c3 = arith.constant 3 : index
    %c0_14 = arith.constant 0 : index
    %c0_15 = arith.constant 0 : index
    %19 = vector.load %arg5[%c3, %c0_14, %c0_15] : memref<5x1x48xf32, #tpu.memory_space<vmem>>, vector<1x1x48xf32>
    %20 = vector.shape_cast %19 : vector<1x1x48xf32> to vector<1x48xf32>
    %21 = vector.shape_cast %20 : vector<1x48xf32> to vector<1x48xf32>
    %22 = vector.broadcast %21 : vector<1x48xf32> to vector<8x48xf32>
    %c4 = arith.constant 4 : index
    %c0_16 = arith.constant 0 : index
    %c0_17 = arith.constant 0 : index
    %23 = vector.load %arg5[%c4, %c0_16, %c0_17] : memref<5x1x48xf32, #tpu.memory_space<vmem>>, vector<1x1x48xf32>
    %24 = vector.shape_cast %23 : vector<1x1x48xf32> to vector<1x48xf32>
    %25 = vector.shape_cast %24 : vector<1x48xf32> to vector<1x48xf32>
    %26 = vector.broadcast %25 : vector<1x48xf32> to vector<8x48xf32>
    %c0_18 = arith.constant 0 : index
    %c0_19 = arith.constant 0 : index
    %c0_20 = arith.constant 0 : index
    %27 = vector.load %arg6[%c0_18, %c0_19, %c0_20] : memref<6x8x12xf32, #tpu.memory_space<vmem>>, vector<1x8x12xf32>
    %28 = vector.shape_cast %27 : vector<1x8x12xf32> to vector<8x12xf32>
    %c1_21 = arith.constant 1 : index
    %c0_22 = arith.constant 0 : index
    %c0_23 = arith.constant 0 : index
    %29 = vector.load %arg6[%c1_21, %c0_22, %c0_23] : memref<6x8x12xf32, #tpu.memory_space<vmem>>, vector<1x8x12xf32>
    %30 = vector.shape_cast %29 : vector<1x8x12xf32> to vector<8x12xf32>
    %c2_24 = arith.constant 2 : index
    %c0_25 = arith.constant 0 : index
    %c0_26 = arith.constant 0 : index
    %31 = vector.load %arg6[%c2_24, %c0_25, %c0_26] : memref<6x8x12xf32, #tpu.memory_space<vmem>>, vector<1x8x12xf32>
    %32 = vector.shape_cast %31 : vector<1x8x12xf32> to vector<8x12xf32>
    %c3_27 = arith.constant 3 : index
    %c0_28 = arith.constant 0 : index
    %c0_29 = arith.constant 0 : index
    %33 = vector.load %arg6[%c3_27, %c0_28, %c0_29] : memref<6x8x12xf32, #tpu.memory_space<vmem>>, vector<1x8x12xf32>
    %34 = vector.shape_cast %33 : vector<1x8x12xf32> to vector<8x12xf32>
    %c4_30 = arith.constant 4 : index
    %c0_31 = arith.constant 0 : index
    %c0_32 = arith.constant 0 : index
    %35 = vector.load %arg6[%c4_30, %c0_31, %c0_32] : memref<6x8x12xf32, #tpu.memory_space<vmem>>, vector<1x8x12xf32>
    %36 = vector.shape_cast %35 : vector<1x8x12xf32> to vector<8x12xf32>
    %c5 = arith.constant 5 : index
    %c0_33 = arith.constant 0 : index
    %c0_34 = arith.constant 0 : index
    %37 = vector.load %arg6[%c5, %c0_33, %c0_34] : memref<6x8x12xf32, #tpu.memory_space<vmem>>, vector<1x8x12xf32>
    %38 = vector.shape_cast %37 : vector<1x8x12xf32> to vector<8x12xf32>
    %c0_35 = arith.constant 0 : index
    %c0_36 = arith.constant 0 : index
    %c0_37 = arith.constant 0 : index
    %39 = vector.load %arg7[%c0_35, %c0_36, %c0_37] : memref<6x8x12xf32, #tpu.memory_space<vmem>>, vector<1x8x12xf32>
    %40 = vector.shape_cast %39 : vector<1x8x12xf32> to vector<8x12xf32>
    %c1_38 = arith.constant 1 : index
    %c0_39 = arith.constant 0 : index
    %c0_40 = arith.constant 0 : index
    %41 = vector.load %arg7[%c1_38, %c0_39, %c0_40] : memref<6x8x12xf32, #tpu.memory_space<vmem>>, vector<1x8x12xf32>
    %42 = vector.shape_cast %41 : vector<1x8x12xf32> to vector<8x12xf32>
    %c2_41 = arith.constant 2 : index
    %c0_42 = arith.constant 0 : index
    %c0_43 = arith.constant 0 : index
    %43 = vector.load %arg7[%c2_41, %c0_42, %c0_43] : memref<6x8x12xf32, #tpu.memory_space<vmem>>, vector<1x8x12xf32>
    %44 = vector.shape_cast %43 : vector<1x8x12xf32> to vector<8x12xf32>
    %c3_44 = arith.constant 3 : index
    %c0_45 = arith.constant 0 : index
    %c0_46 = arith.constant 0 : index
    %45 = vector.load %arg7[%c3_44, %c0_45, %c0_46] : memref<6x8x12xf32, #tpu.memory_space<vmem>>, vector<1x8x12xf32>
    %46 = vector.shape_cast %45 : vector<1x8x12xf32> to vector<8x12xf32>
    %c4_47 = arith.constant 4 : index
    %c0_48 = arith.constant 0 : index
    %c0_49 = arith.constant 0 : index
    %47 = vector.load %arg7[%c4_47, %c0_48, %c0_49] : memref<6x8x12xf32, #tpu.memory_space<vmem>>, vector<1x8x12xf32>
    %48 = vector.shape_cast %47 : vector<1x8x12xf32> to vector<8x12xf32>
    %c5_50 = arith.constant 5 : index
    %c0_51 = arith.constant 0 : index
    %c0_52 = arith.constant 0 : index
    %49 = vector.load %arg7[%c5_50, %c0_51, %c0_52] : memref<6x8x12xf32, #tpu.memory_space<vmem>>, vector<1x8x12xf32>
    %50 = vector.shape_cast %49 : vector<1x8x12xf32> to vector<8x12xf32>
    %51 = vector.extract_strided_slice %5 {offsets = [0, 0], sizes = [8, 48], strides = [1, 1]} : vector<40x48xf32> to vector<8x48xf32>
    %cst_53 = arith.constant dense<0.000000e+00> : vector<8x48xf32>
    %52 = tpu.matmul %28, %6, %cst_53 {dimension_numbers = #tpu.dot_dimension_numbers<[1], [0], [0], [1], [0, 0, 1, 1], [], []>} : vector<8x12xf32>, vector<12x48xf32>, vector<8x48xf32> -> vector<8x48xf32>
    %53 = arith.addf %51, %52 : vector<8x48xf32>
    %54 = vector.extract_strided_slice %53 {offsets = [0, 0], sizes = [8, 36], strides = [1, 1]} : vector<8x48xf32> to vector<8x36xf32>
    %55 = arith.negf %54 : vector<8x36xf32>
    %56 = math.exp %55 : vector<8x36xf32>
    %cst_54 = arith.constant 1.000000e+00 : f32
    %57 = vector.broadcast %cst_54 : f32 to vector<8x36xf32>
    %58 = arith.addf %57, %56 : vector<8x36xf32>
    %59 = arith.divf %57, %58 : vector<8x36xf32>
    %60 = vector.extract_strided_slice %53 {offsets = [0, 36], sizes = [8, 12], strides = [1, 1]} : vector<8x48xf32> to vector<8x12xf32>
    %61 = math.tanh %60 : vector<8x12xf32>
    %62 = vector.extract_strided_slice %59 {offsets = [0, 0], sizes = [8, 12], strides = [1, 1]} : vector<8x36xf32> to vector<8x12xf32>
    %63 = vector.extract_strided_slice %59 {offsets = [0, 12], sizes = [8, 12], strides = [1, 1]} : vector<8x36xf32> to vector<8x12xf32>
    %64 = vector.extract_strided_slice %59 {offsets = [0, 24], sizes = [8, 12], strides = [1, 1]} : vector<8x36xf32> to vector<8x12xf32>
    %65 = arith.mulf %63, %40 : vector<8x12xf32>
    %66 = arith.mulf %62, %61 : vector<8x12xf32>
    %67 = arith.addf %65, %66 : vector<8x12xf32>
    %68 = math.tanh %67 : vector<8x12xf32>
    %69 = arith.mulf %64, %68 : vector<8x12xf32>
    %70 = tpu.concatenate %69, %30 in 1 : vector<8x12xf32>, vector<8x12xf32> -> vector<8x24xf32>
    %c0_55 = arith.constant 0 : index
    %c0_56 = arith.constant 0 : index
    %c0_57 = arith.constant 0 : index
    %71 = vector.load %arg4[%c0_55, %c0_56, %c0_57] : memref<5x24x48xf32, #tpu.memory_space<vmem>>, vector<1x24x48xf32>
    %72 = vector.shape_cast %71 : vector<1x24x48xf32> to vector<24x48xf32>
    %cst_58 = arith.constant dense<0.000000e+00> : vector<8x48xf32>
    %73 = tpu.matmul %70, %72, %cst_58 {dimension_numbers = #tpu.dot_dimension_numbers<[1], [0], [0], [1], [0, 0, 1, 1], [], []>} : vector<8x24xf32>, vector<24x48xf32>, vector<8x48xf32> -> vector<8x48xf32>
    %74 = arith.addf %73, %10 : vector<8x48xf32>
    %75 = vector.extract_strided_slice %74 {offsets = [0, 0], sizes = [8, 36], strides = [1, 1]} : vector<8x48xf32> to vector<8x36xf32>
    %76 = arith.negf %75 : vector<8x36xf32>
    %77 = math.exp %76 : vector<8x36xf32>
    %cst_59 = arith.constant 1.000000e+00 : f32
    %78 = vector.broadcast %cst_59 : f32 to vector<8x36xf32>
    %79 = arith.addf %78, %77 : vector<8x36xf32>
    %80 = arith.divf %78, %79 : vector<8x36xf32>
    %81 = vector.extract_strided_slice %74 {offsets = [0, 36], sizes = [8, 12], strides = [1, 1]} : vector<8x48xf32> to vector<8x12xf32>
    %82 = math.tanh %81 : vector<8x12xf32>
    %83 = vector.extract_strided_slice %80 {offsets = [0, 0], sizes = [8, 12], strides = [1, 1]} : vector<8x36xf32> to vector<8x12xf32>
    %84 = vector.extract_strided_slice %80 {offsets = [0, 12], sizes = [8, 12], strides = [1, 1]} : vector<8x36xf32> to vector<8x12xf32>
    %85 = vector.extract_strided_slice %80 {offsets = [0, 24], sizes = [8, 12], strides = [1, 1]} : vector<8x36xf32> to vector<8x12xf32>
    %86 = arith.mulf %84, %42 : vector<8x12xf32>
    %87 = arith.mulf %83, %82 : vector<8x12xf32>
    %88 = arith.addf %86, %87 : vector<8x12xf32>
    %89 = math.tanh %88 : vector<8x12xf32>
    %90 = arith.mulf %85, %89 : vector<8x12xf32>
    %91 = tpu.concatenate %90, %32 in 1 : vector<8x12xf32>, vector<8x12xf32> -> vector<8x24xf32>
    %c1_60 = arith.constant 1 : index
    %c0_61 = arith.constant 0 : index
    %c0_62 = arith.constant 0 : index
    %92 = vector.load %arg4[%c1_60, %c0_61, %c0_62] : memref<5x24x48xf32, #tpu.memory_space<vmem>>, vector<1x24x48xf32>
    %93 = vector.shape_cast %92 : vector<1x24x48xf32> to vector<24x48xf32>
    %cst_63 = arith.constant dense<0.000000e+00> : vector<8x48xf32>
    %94 = tpu.matmul %91, %93, %cst_63 {dimension_numbers = #tpu.dot_dimension_numbers<[1], [0], [0], [1], [0, 0, 1, 1], [], []>} : vector<8x24xf32>, vector<24x48xf32>, vector<8x48xf32> -> vector<8x48xf32>
    %95 = arith.addf %94, %14 : vector<8x48xf32>
    %96 = vector.extract_strided_slice %95 {offsets = [0, 0], sizes = [8, 36], strides = [1, 1]} : vector<8x48xf32> to vector<8x36xf32>
    %97 = arith.negf %96 : vector<8x36xf32>
    %98 = math.exp %97 : vector<8x36xf32>
    %cst_64 = arith.constant 1.000000e+00 : f32
    %99 = vector.broadcast %cst_64 : f32 to vector<8x36xf32>
    %100 = arith.addf %99, %98 : vector<8x36xf32>
    %101 = arith.divf %99, %100 : vector<8x36xf32>
    %102 = vector.extract_strided_slice %95 {offsets = [0, 36], sizes = [8, 12], strides = [1, 1]} : vector<8x48xf32> to vector<8x12xf32>
    %103 = math.tanh %102 : vector<8x12xf32>
    %104 = vector.extract_strided_slice %101 {offsets = [0, 0], sizes = [8, 12], strides = [1, 1]} : vector<8x36xf32> to vector<8x12xf32>
    %105 = vector.extract_strided_slice %101 {offsets = [0, 12], sizes = [8, 12], strides = [1, 1]} : vector<8x36xf32> to vector<8x12xf32>
    %106 = vector.extract_strided_slice %101 {offsets = [0, 24], sizes = [8, 12], strides = [1, 1]} : vector<8x36xf32> to vector<8x12xf32>
    %107 = arith.mulf %105, %44 : vector<8x12xf32>
    %108 = arith.mulf %104, %103 : vector<8x12xf32>
    %109 = arith.addf %107, %108 : vector<8x12xf32>
    %110 = math.tanh %109 : vector<8x12xf32>
    %111 = arith.mulf %106, %110 : vector<8x12xf32>
    %112 = tpu.concatenate %111, %34 in 1 : vector<8x12xf32>, vector<8x12xf32> -> vector<8x24xf32>
    %c2_65 = arith.constant 2 : index
    %c0_66 = arith.constant 0 : index
    %c0_67 = arith.constant 0 : index
    %113 = vector.load %arg4[%c2_65, %c0_66, %c0_67] : memref<5x24x48xf32, #tpu.memory_space<vmem>>, vector<1x24x48xf32>
    %114 = vector.shape_cast %113 : vector<1x24x48xf32> to vector<24x48xf32>
    %cst_68 = arith.constant dense<0.000000e+00> : vector<8x48xf32>
    %115 = tpu.matmul %112, %114, %cst_68 {dimension_numbers = #tpu.dot_dimension_numbers<[1], [0], [0], [1], [0, 0, 1, 1], [], []>} : vector<8x24xf32>, vector<24x48xf32>, vector<8x48xf32> -> vector<8x48xf32>
    %116 = arith.addf %115, %18 : vector<8x48xf32>
    %117 = vector.extract_strided_slice %116 {offsets = [0, 0], sizes = [8, 36], strides = [1, 1]} : vector<8x48xf32> to vector<8x36xf32>
    %118 = arith.negf %117 : vector<8x36xf32>
    %119 = math.exp %118 : vector<8x36xf32>
    %cst_69 = arith.constant 1.000000e+00 : f32
    %120 = vector.broadcast %cst_69 : f32 to vector<8x36xf32>
    %121 = arith.addf %120, %119 : vector<8x36xf32>
    %122 = arith.divf %120, %121 : vector<8x36xf32>
    %123 = vector.extract_strided_slice %116 {offsets = [0, 36], sizes = [8, 12], strides = [1, 1]} : vector<8x48xf32> to vector<8x12xf32>
    %124 = math.tanh %123 : vector<8x12xf32>
    %125 = vector.extract_strided_slice %122 {offsets = [0, 0], sizes = [8, 12], strides = [1, 1]} : vector<8x36xf32> to vector<8x12xf32>
    %126 = vector.extract_strided_slice %122 {offsets = [0, 12], sizes = [8, 12], strides = [1, 1]} : vector<8x36xf32> to vector<8x12xf32>
    %127 = vector.extract_strided_slice %122 {offsets = [0, 24], sizes = [8, 12], strides = [1, 1]} : vector<8x36xf32> to vector<8x12xf32>
    %128 = arith.mulf %126, %46 : vector<8x12xf32>
    %129 = arith.mulf %125, %124 : vector<8x12xf32>
    %130 = arith.addf %128, %129 : vector<8x12xf32>
    %131 = math.tanh %130 : vector<8x12xf32>
    %132 = arith.mulf %127, %131 : vector<8x12xf32>
    %133 = tpu.concatenate %132, %36 in 1 : vector<8x12xf32>, vector<8x12xf32> -> vector<8x24xf32>
    %c3_70 = arith.constant 3 : index
    %c0_71 = arith.constant 0 : index
    %c0_72 = arith.constant 0 : index
    %134 = vector.load %arg4[%c3_70, %c0_71, %c0_72] : memref<5x24x48xf32, #tpu.memory_space<vmem>>, vector<1x24x48xf32>
    %135 = vector.shape_cast %134 : vector<1x24x48xf32> to vector<24x48xf32>
    %cst_73 = arith.constant dense<0.000000e+00> : vector<8x48xf32>
    %136 = tpu.matmul %133, %135, %cst_73 {dimension_numbers = #tpu.dot_dimension_numbers<[1], [0], [0], [1], [0, 0, 1, 1], [], []>} : vector<8x24xf32>, vector<24x48xf32>, vector<8x48xf32> -> vector<8x48xf32>
    %137 = arith.addf %136, %22 : vector<8x48xf32>
    %138 = vector.extract_strided_slice %137 {offsets = [0, 0], sizes = [8, 36], strides = [1, 1]} : vector<8x48xf32> to vector<8x36xf32>
    %139 = arith.negf %138 : vector<8x36xf32>
    %140 = math.exp %139 : vector<8x36xf32>
    %cst_74 = arith.constant 1.000000e+00 : f32
    %141 = vector.broadcast %cst_74 : f32 to vector<8x36xf32>
    %142 = arith.addf %141, %140 : vector<8x36xf32>
    %143 = arith.divf %141, %142 : vector<8x36xf32>
    %144 = vector.extract_strided_slice %137 {offsets = [0, 36], sizes = [8, 12], strides = [1, 1]} : vector<8x48xf32> to vector<8x12xf32>
    %145 = math.tanh %144 : vector<8x12xf32>
    %146 = vector.extract_strided_slice %143 {offsets = [0, 0], sizes = [8, 12], strides = [1, 1]} : vector<8x36xf32> to vector<8x12xf32>
    %147 = vector.extract_strided_slice %143 {offsets = [0, 12], sizes = [8, 12], strides = [1, 1]} : vector<8x36xf32> to vector<8x12xf32>
    %148 = vector.extract_strided_slice %143 {offsets = [0, 24], sizes = [8, 12], strides = [1, 1]} : vector<8x36xf32> to vector<8x12xf32>
    %149 = arith.mulf %147, %48 : vector<8x12xf32>
    %150 = arith.mulf %146, %145 : vector<8x12xf32>
    %151 = arith.addf %149, %150 : vector<8x12xf32>
    %152 = math.tanh %151 : vector<8x12xf32>
    %153 = arith.mulf %148, %152 : vector<8x12xf32>
    %154 = tpu.concatenate %153, %38 in 1 : vector<8x12xf32>, vector<8x12xf32> -> vector<8x24xf32>
    %c4_75 = arith.constant 4 : index
    %c0_76 = arith.constant 0 : index
    %c0_77 = arith.constant 0 : index
    %155 = vector.load %arg4[%c4_75, %c0_76, %c0_77] : memref<5x24x48xf32, #tpu.memory_space<vmem>>, vector<1x24x48xf32>
    %156 = vector.shape_cast %155 : vector<1x24x48xf32> to vector<24x48xf32>
    %cst_78 = arith.constant dense<0.000000e+00> : vector<8x48xf32>
    %157 = tpu.matmul %154, %156, %cst_78 {dimension_numbers = #tpu.dot_dimension_numbers<[1], [0], [0], [1], [0, 0, 1, 1], [], []>} : vector<8x24xf32>, vector<24x48xf32>, vector<8x48xf32> -> vector<8x48xf32>
    %158 = arith.addf %157, %26 : vector<8x48xf32>
    %159 = vector.extract_strided_slice %158 {offsets = [0, 0], sizes = [8, 36], strides = [1, 1]} : vector<8x48xf32> to vector<8x36xf32>
    %160 = arith.negf %159 : vector<8x36xf32>
    %161 = math.exp %160 : vector<8x36xf32>
    %cst_79 = arith.constant 1.000000e+00 : f32
    %162 = vector.broadcast %cst_79 : f32 to vector<8x36xf32>
    %163 = arith.addf %162, %161 : vector<8x36xf32>
    %164 = arith.divf %162, %163 : vector<8x36xf32>
    %165 = vector.extract_strided_slice %158 {offsets = [0, 36], sizes = [8, 12], strides = [1, 1]} : vector<8x48xf32> to vector<8x12xf32>
    %166 = math.tanh %165 : vector<8x12xf32>
    %167 = vector.extract_strided_slice %164 {offsets = [0, 0], sizes = [8, 12], strides = [1, 1]} : vector<8x36xf32> to vector<8x12xf32>
    %168 = vector.extract_strided_slice %164 {offsets = [0, 12], sizes = [8, 12], strides = [1, 1]} : vector<8x36xf32> to vector<8x12xf32>
    %169 = vector.extract_strided_slice %164 {offsets = [0, 24], sizes = [8, 12], strides = [1, 1]} : vector<8x36xf32> to vector<8x12xf32>
    %170 = arith.mulf %168, %50 : vector<8x12xf32>
    %171 = arith.mulf %167, %166 : vector<8x12xf32>
    %172 = arith.addf %170, %171 : vector<8x12xf32>
    %173 = math.tanh %172 : vector<8x12xf32>
    %174 = arith.mulf %169, %173 : vector<8x12xf32>
    %175 = vector.extract_strided_slice %5 {offsets = [8, 0], sizes = [8, 48], strides = [1, 1]} : vector<40x48xf32> to vector<8x48xf32>
    %cst_80 = arith.constant dense<0.000000e+00> : vector<8x48xf32>
    %176 = tpu.matmul %69, %6, %cst_80 {dimension_numbers = #tpu.dot_dimension_numbers<[1], [0], [0], [1], [0, 0, 1, 1], [], []>} : vector<8x12xf32>, vector<12x48xf32>, vector<8x48xf32> -> vector<8x48xf32>
    %177 = arith.addf %175, %176 : vector<8x48xf32>
    %178 = vector.extract_strided_slice %177 {offsets = [0, 0], sizes = [8, 36], strides = [1, 1]} : vector<8x48xf32> to vector<8x36xf32>
    %179 = arith.negf %178 : vector<8x36xf32>
    %180 = math.exp %179 : vector<8x36xf32>
    %cst_81 = arith.constant 1.000000e+00 : f32
    %181 = vector.broadcast %cst_81 : f32 to vector<8x36xf32>
    %182 = arith.addf %181, %180 : vector<8x36xf32>
    %183 = arith.divf %181, %182 : vector<8x36xf32>
    %184 = vector.extract_strided_slice %177 {offsets = [0, 36], sizes = [8, 12], strides = [1, 1]} : vector<8x48xf32> to vector<8x12xf32>
    %185 = math.tanh %184 : vector<8x12xf32>
    %186 = vector.extract_strided_slice %183 {offsets = [0, 0], sizes = [8, 12], strides = [1, 1]} : vector<8x36xf32> to vector<8x12xf32>
    %187 = vector.extract_strided_slice %183 {offsets = [0, 12], sizes = [8, 12], strides = [1, 1]} : vector<8x36xf32> to vector<8x12xf32>
    %188 = vector.extract_strided_slice %183 {offsets = [0, 24], sizes = [8, 12], strides = [1, 1]} : vector<8x36xf32> to vector<8x12xf32>
    %189 = arith.mulf %187, %67 : vector<8x12xf32>
    %190 = arith.mulf %186, %185 : vector<8x12xf32>
    %191 = arith.addf %189, %190 : vector<8x12xf32>
    %192 = math.tanh %191 : vector<8x12xf32>
    %193 = arith.mulf %188, %192 : vector<8x12xf32>
    %194 = tpu.concatenate %193, %90 in 1 : vector<8x12xf32>, vector<8x12xf32> -> vector<8x24xf32>
    %c0_82 = arith.constant 0 : index
    %c0_83 = arith.constant 0 : index
    %c0_84 = arith.constant 0 : index
    %195 = vector.load %arg4[%c0_82, %c0_83, %c0_84] : memref<5x24x48xf32, #tpu.memory_space<vmem>>, vector<1x24x48xf32>
    %196 = vector.shape_cast %195 : vector<1x24x48xf32> to vector<24x48xf32>
    %cst_85 = arith.constant dense<0.000000e+00> : vector<8x48xf32>
    %197 = tpu.matmul %194, %196, %cst_85 {dimension_numbers = #tpu.dot_dimension_numbers<[1], [0], [0], [1], [0, 0, 1, 1], [], []>} : vector<8x24xf32>, vector<24x48xf32>, vector<8x48xf32> -> vector<8x48xf32>
    %198 = arith.addf %197, %10 : vector<8x48xf32>
    %199 = vector.extract_strided_slice %198 {offsets = [0, 0], sizes = [8, 36], strides = [1, 1]} : vector<8x48xf32> to vector<8x36xf32>
    %200 = arith.negf %199 : vector<8x36xf32>
    %201 = math.exp %200 : vector<8x36xf32>
    %cst_86 = arith.constant 1.000000e+00 : f32
    %202 = vector.broadcast %cst_86 : f32 to vector<8x36xf32>
    %203 = arith.addf %202, %201 : vector<8x36xf32>
    %204 = arith.divf %202, %203 : vector<8x36xf32>
    %205 = vector.extract_strided_slice %198 {offsets = [0, 36], sizes = [8, 12], strides = [1, 1]} : vector<8x48xf32> to vector<8x12xf32>
    %206 = math.tanh %205 : vector<8x12xf32>
    %207 = vector.extract_strided_slice %204 {offsets = [0, 0], sizes = [8, 12], strides = [1, 1]} : vector<8x36xf32> to vector<8x12xf32>
    %208 = vector.extract_strided_slice %204 {offsets = [0, 12], sizes = [8, 12], strides = [1, 1]} : vector<8x36xf32> to vector<8x12xf32>
    %209 = vector.extract_strided_slice %204 {offsets = [0, 24], sizes = [8, 12], strides = [1, 1]} : vector<8x36xf32> to vector<8x12xf32>
    %210 = arith.mulf %208, %88 : vector<8x12xf32>
    %211 = arith.mulf %207, %206 : vector<8x12xf32>
    %212 = arith.addf %210, %211 : vector<8x12xf32>
    %213 = math.tanh %212 : vector<8x12xf32>
    %214 = arith.mulf %209, %213 : vector<8x12xf32>
    %215 = tpu.concatenate %214, %111 in 1 : vector<8x12xf32>, vector<8x12xf32> -> vector<8x24xf32>
    %c1_87 = arith.constant 1 : index
    %c0_88 = arith.constant 0 : index
    %c0_89 = arith.constant 0 : index
    %216 = vector.load %arg4[%c1_87, %c0_88, %c0_89] : memref<5x24x48xf32, #tpu.memory_space<vmem>>, vector<1x24x48xf32>
    %217 = vector.shape_cast %216 : vector<1x24x48xf32> to vector<24x48xf32>
    %cst_90 = arith.constant dense<0.000000e+00> : vector<8x48xf32>
    %218 = tpu.matmul %215, %217, %cst_90 {dimension_numbers = #tpu.dot_dimension_numbers<[1], [0], [0], [1], [0, 0, 1, 1], [], []>} : vector<8x24xf32>, vector<24x48xf32>, vector<8x48xf32> -> vector<8x48xf32>
    %219 = arith.addf %218, %14 : vector<8x48xf32>
    %220 = vector.extract_strided_slice %219 {offsets = [0, 0], sizes = [8, 36], strides = [1, 1]} : vector<8x48xf32> to vector<8x36xf32>
    %221 = arith.negf %220 : vector<8x36xf32>
    %222 = math.exp %221 : vector<8x36xf32>
    %cst_91 = arith.constant 1.000000e+00 : f32
    %223 = vector.broadcast %cst_91 : f32 to vector<8x36xf32>
    %224 = arith.addf %223, %222 : vector<8x36xf32>
    %225 = arith.divf %223, %224 : vector<8x36xf32>
    %226 = vector.extract_strided_slice %219 {offsets = [0, 36], sizes = [8, 12], strides = [1, 1]} : vector<8x48xf32> to vector<8x12xf32>
    %227 = math.tanh %226 : vector<8x12xf32>
    %228 = vector.extract_strided_slice %225 {offsets = [0, 0], sizes = [8, 12], strides = [1, 1]} : vector<8x36xf32> to vector<8x12xf32>
    %229 = vector.extract_strided_slice %225 {offsets = [0, 12], sizes = [8, 12], strides = [1, 1]} : vector<8x36xf32> to vector<8x12xf32>
    %230 = vector.extract_strided_slice %225 {offsets = [0, 24], sizes = [8, 12], strides = [1, 1]} : vector<8x36xf32> to vector<8x12xf32>
    %231 = arith.mulf %229, %109 : vector<8x12xf32>
    %232 = arith.mulf %228, %227 : vector<8x12xf32>
    %233 = arith.addf %231, %232 : vector<8x12xf32>
    %234 = math.tanh %233 : vector<8x12xf32>
    %235 = arith.mulf %230, %234 : vector<8x12xf32>
    %236 = tpu.concatenate %235, %132 in 1 : vector<8x12xf32>, vector<8x12xf32> -> vector<8x24xf32>
    %c2_92 = arith.constant 2 : index
    %c0_93 = arith.constant 0 : index
    %c0_94 = arith.constant 0 : index
    %237 = vector.load %arg4[%c2_92, %c0_93, %c0_94] : memref<5x24x48xf32, #tpu.memory_space<vmem>>, vector<1x24x48xf32>
    %238 = vector.shape_cast %237 : vector<1x24x48xf32> to vector<24x48xf32>
    %cst_95 = arith.constant dense<0.000000e+00> : vector<8x48xf32>
    %239 = tpu.matmul %236, %238, %cst_95 {dimension_numbers = #tpu.dot_dimension_numbers<[1], [0], [0], [1], [0, 0, 1, 1], [], []>} : vector<8x24xf32>, vector<24x48xf32>, vector<8x48xf32> -> vector<8x48xf32>
    %240 = arith.addf %239, %18 : vector<8x48xf32>
    %241 = vector.extract_strided_slice %240 {offsets = [0, 0], sizes = [8, 36], strides = [1, 1]} : vector<8x48xf32> to vector<8x36xf32>
    %242 = arith.negf %241 : vector<8x36xf32>
    %243 = math.exp %242 : vector<8x36xf32>
    %cst_96 = arith.constant 1.000000e+00 : f32
    %244 = vector.broadcast %cst_96 : f32 to vector<8x36xf32>
    %245 = arith.addf %244, %243 : vector<8x36xf32>
    %246 = arith.divf %244, %245 : vector<8x36xf32>
    %247 = vector.extract_strided_slice %240 {offsets = [0, 36], sizes = [8, 12], strides = [1, 1]} : vector<8x48xf32> to vector<8x12xf32>
    %248 = math.tanh %247 : vector<8x12xf32>
    %249 = vector.extract_strided_slice %246 {offsets = [0, 0], sizes = [8, 12], strides = [1, 1]} : vector<8x36xf32> to vector<8x12xf32>
    %250 = vector.extract_strided_slice %246 {offsets = [0, 12], sizes = [8, 12], strides = [1, 1]} : vector<8x36xf32> to vector<8x12xf32>
    %251 = vector.extract_strided_slice %246 {offsets = [0, 24], sizes = [8, 12], strides = [1, 1]} : vector<8x36xf32> to vector<8x12xf32>
    %252 = arith.mulf %250, %130 : vector<8x12xf32>
    %253 = arith.mulf %249, %248 : vector<8x12xf32>
    %254 = arith.addf %252, %253 : vector<8x12xf32>
    %255 = math.tanh %254 : vector<8x12xf32>
    %256 = arith.mulf %251, %255 : vector<8x12xf32>
    %257 = tpu.concatenate %256, %153 in 1 : vector<8x12xf32>, vector<8x12xf32> -> vector<8x24xf32>
    %c3_97 = arith.constant 3 : index
    %c0_98 = arith.constant 0 : index
    %c0_99 = arith.constant 0 : index
    %258 = vector.load %arg4[%c3_97, %c0_98, %c0_99] : memref<5x24x48xf32, #tpu.memory_space<vmem>>, vector<1x24x48xf32>
    %259 = vector.shape_cast %258 : vector<1x24x48xf32> to vector<24x48xf32>
    %cst_100 = arith.constant dense<0.000000e+00> : vector<8x48xf32>
    %260 = tpu.matmul %257, %259, %cst_100 {dimension_numbers = #tpu.dot_dimension_numbers<[1], [0], [0], [1], [0, 0, 1, 1], [], []>} : vector<8x24xf32>, vector<24x48xf32>, vector<8x48xf32> -> vector<8x48xf32>
    %261 = arith.addf %260, %22 : vector<8x48xf32>
    %262 = vector.extract_strided_slice %261 {offsets = [0, 0], sizes = [8, 36], strides = [1, 1]} : vector<8x48xf32> to vector<8x36xf32>
    %263 = arith.negf %262 : vector<8x36xf32>
    %264 = math.exp %263 : vector<8x36xf32>
    %cst_101 = arith.constant 1.000000e+00 : f32
    %265 = vector.broadcast %cst_101 : f32 to vector<8x36xf32>
    %266 = arith.addf %265, %264 : vector<8x36xf32>
    %267 = arith.divf %265, %266 : vector<8x36xf32>
    %268 = vector.extract_strided_slice %261 {offsets = [0, 36], sizes = [8, 12], strides = [1, 1]} : vector<8x48xf32> to vector<8x12xf32>
    %269 = math.tanh %268 : vector<8x12xf32>
    %270 = vector.extract_strided_slice %267 {offsets = [0, 0], sizes = [8, 12], strides = [1, 1]} : vector<8x36xf32> to vector<8x12xf32>
    %271 = vector.extract_strided_slice %267 {offsets = [0, 12], sizes = [8, 12], strides = [1, 1]} : vector<8x36xf32> to vector<8x12xf32>
    %272 = vector.extract_strided_slice %267 {offsets = [0, 24], sizes = [8, 12], strides = [1, 1]} : vector<8x36xf32> to vector<8x12xf32>
    %273 = arith.mulf %271, %151 : vector<8x12xf32>
    %274 = arith.mulf %270, %269 : vector<8x12xf32>
    %275 = arith.addf %273, %274 : vector<8x12xf32>
    %276 = math.tanh %275 : vector<8x12xf32>
    %277 = arith.mulf %272, %276 : vector<8x12xf32>
    %278 = tpu.concatenate %277, %174 in 1 : vector<8x12xf32>, vector<8x12xf32> -> vector<8x24xf32>
    %c4_102 = arith.constant 4 : index
    %c0_103 = arith.constant 0 : index
    %c0_104 = arith.constant 0 : index
    %279 = vector.load %arg4[%c4_102, %c0_103, %c0_104] : memref<5x24x48xf32, #tpu.memory_space<vmem>>, vector<1x24x48xf32>
    %280 = vector.shape_cast %279 : vector<1x24x48xf32> to vector<24x48xf32>
    %cst_105 = arith.constant dense<0.000000e+00> : vector<8x48xf32>
    %281 = tpu.matmul %278, %280, %cst_105 {dimension_numbers = #tpu.dot_dimension_numbers<[1], [0], [0], [1], [0, 0, 1, 1], [], []>} : vector<8x24xf32>, vector<24x48xf32>, vector<8x48xf32> -> vector<8x48xf32>
    %282 = arith.addf %281, %26 : vector<8x48xf32>
    %283 = vector.extract_strided_slice %282 {offsets = [0, 0], sizes = [8, 36], strides = [1, 1]} : vector<8x48xf32> to vector<8x36xf32>
    %284 = arith.negf %283 : vector<8x36xf32>
    %285 = math.exp %284 : vector<8x36xf32>
    %cst_106 = arith.constant 1.000000e+00 : f32
    %286 = vector.broadcast %cst_106 : f32 to vector<8x36xf32>
    %287 = arith.addf %286, %285 : vector<8x36xf32>
    %288 = arith.divf %286, %287 : vector<8x36xf32>
    %289 = vector.extract_strided_slice %282 {offsets = [0, 36], sizes = [8, 12], strides = [1, 1]} : vector<8x48xf32> to vector<8x12xf32>
    %290 = math.tanh %289 : vector<8x12xf32>
    %291 = vector.extract_strided_slice %288 {offsets = [0, 0], sizes = [8, 12], strides = [1, 1]} : vector<8x36xf32> to vector<8x12xf32>
    %292 = vector.extract_strided_slice %288 {offsets = [0, 12], sizes = [8, 12], strides = [1, 1]} : vector<8x36xf32> to vector<8x12xf32>
    %293 = vector.extract_strided_slice %288 {offsets = [0, 24], sizes = [8, 12], strides = [1, 1]} : vector<8x36xf32> to vector<8x12xf32>
    %294 = arith.mulf %292, %172 : vector<8x12xf32>
    %295 = arith.mulf %291, %290 : vector<8x12xf32>
    %296 = arith.addf %294, %295 : vector<8x12xf32>
    %297 = math.tanh %296 : vector<8x12xf32>
    %298 = arith.mulf %293, %297 : vector<8x12xf32>
    %299 = vector.extract_strided_slice %5 {offsets = [16, 0], sizes = [8, 48], strides = [1, 1]} : vector<40x48xf32> to vector<8x48xf32>
    %cst_107 = arith.constant dense<0.000000e+00> : vector<8x48xf32>
    %300 = tpu.matmul %193, %6, %cst_107 {dimension_numbers = #tpu.dot_dimension_numbers<[1], [0], [0], [1], [0, 0, 1, 1], [], []>} : vector<8x12xf32>, vector<12x48xf32>, vector<8x48xf32> -> vector<8x48xf32>
    %301 = arith.addf %299, %300 : vector<8x48xf32>
    %302 = vector.extract_strided_slice %301 {offsets = [0, 0], sizes = [8, 36], strides = [1, 1]} : vector<8x48xf32> to vector<8x36xf32>
    %303 = arith.negf %302 : vector<8x36xf32>
    %304 = math.exp %303 : vector<8x36xf32>
    %cst_108 = arith.constant 1.000000e+00 : f32
    %305 = vector.broadcast %cst_108 : f32 to vector<8x36xf32>
    %306 = arith.addf %305, %304 : vector<8x36xf32>
    %307 = arith.divf %305, %306 : vector<8x36xf32>
    %308 = vector.extract_strided_slice %301 {offsets = [0, 36], sizes = [8, 12], strides = [1, 1]} : vector<8x48xf32> to vector<8x12xf32>
    %309 = math.tanh %308 : vector<8x12xf32>
    %310 = vector.extract_strided_slice %307 {offsets = [0, 0], sizes = [8, 12], strides = [1, 1]} : vector<8x36xf32> to vector<8x12xf32>
    %311 = vector.extract_strided_slice %307 {offsets = [0, 12], sizes = [8, 12], strides = [1, 1]} : vector<8x36xf32> to vector<8x12xf32>
    %312 = vector.extract_strided_slice %307 {offsets = [0, 24], sizes = [8, 12], strides = [1, 1]} : vector<8x36xf32> to vector<8x12xf32>
    %313 = arith.mulf %311, %191 : vector<8x12xf32>
    %314 = arith.mulf %310, %309 : vector<8x12xf32>
    %315 = arith.addf %313, %314 : vector<8x12xf32>
    %316 = math.tanh %315 : vector<8x12xf32>
    %317 = arith.mulf %312, %316 : vector<8x12xf32>
    %318 = tpu.concatenate %317, %214 in 1 : vector<8x12xf32>, vector<8x12xf32> -> vector<8x24xf32>
    %c0_109 = arith.constant 0 : index
    %c0_110 = arith.constant 0 : index
    %c0_111 = arith.constant 0 : index
    %319 = vector.load %arg4[%c0_109, %c0_110, %c0_111] : memref<5x24x48xf32, #tpu.memory_space<vmem>>, vector<1x24x48xf32>
    %320 = vector.shape_cast %319 : vector<1x24x48xf32> to vector<24x48xf32>
    %cst_112 = arith.constant dense<0.000000e+00> : vector<8x48xf32>
    %321 = tpu.matmul %318, %320, %cst_112 {dimension_numbers = #tpu.dot_dimension_numbers<[1], [0], [0], [1], [0, 0, 1, 1], [], []>} : vector<8x24xf32>, vector<24x48xf32>, vector<8x48xf32> -> vector<8x48xf32>
    %322 = arith.addf %321, %10 : vector<8x48xf32>
    %323 = vector.extract_strided_slice %322 {offsets = [0, 0], sizes = [8, 36], strides = [1, 1]} : vector<8x48xf32> to vector<8x36xf32>
    %324 = arith.negf %323 : vector<8x36xf32>
    %325 = math.exp %324 : vector<8x36xf32>
    %cst_113 = arith.constant 1.000000e+00 : f32
    %326 = vector.broadcast %cst_113 : f32 to vector<8x36xf32>
    %327 = arith.addf %326, %325 : vector<8x36xf32>
    %328 = arith.divf %326, %327 : vector<8x36xf32>
    %329 = vector.extract_strided_slice %322 {offsets = [0, 36], sizes = [8, 12], strides = [1, 1]} : vector<8x48xf32> to vector<8x12xf32>
    %330 = math.tanh %329 : vector<8x12xf32>
    %331 = vector.extract_strided_slice %328 {offsets = [0, 0], sizes = [8, 12], strides = [1, 1]} : vector<8x36xf32> to vector<8x12xf32>
    %332 = vector.extract_strided_slice %328 {offsets = [0, 12], sizes = [8, 12], strides = [1, 1]} : vector<8x36xf32> to vector<8x12xf32>
    %333 = vector.extract_strided_slice %328 {offsets = [0, 24], sizes = [8, 12], strides = [1, 1]} : vector<8x36xf32> to vector<8x12xf32>
    %334 = arith.mulf %332, %212 : vector<8x12xf32>
    %335 = arith.mulf %331, %330 : vector<8x12xf32>
    %336 = arith.addf %334, %335 : vector<8x12xf32>
    %337 = math.tanh %336 : vector<8x12xf32>
    %338 = arith.mulf %333, %337 : vector<8x12xf32>
    %339 = tpu.concatenate %338, %235 in 1 : vector<8x12xf32>, vector<8x12xf32> -> vector<8x24xf32>
    %c1_114 = arith.constant 1 : index
    %c0_115 = arith.constant 0 : index
    %c0_116 = arith.constant 0 : index
    %340 = vector.load %arg4[%c1_114, %c0_115, %c0_116] : memref<5x24x48xf32, #tpu.memory_space<vmem>>, vector<1x24x48xf32>
    %341 = vector.shape_cast %340 : vector<1x24x48xf32> to vector<24x48xf32>
    %cst_117 = arith.constant dense<0.000000e+00> : vector<8x48xf32>
    %342 = tpu.matmul %339, %341, %cst_117 {dimension_numbers = #tpu.dot_dimension_numbers<[1], [0], [0], [1], [0, 0, 1, 1], [], []>} : vector<8x24xf32>, vector<24x48xf32>, vector<8x48xf32> -> vector<8x48xf32>
    %343 = arith.addf %342, %14 : vector<8x48xf32>
    %344 = vector.extract_strided_slice %343 {offsets = [0, 0], sizes = [8, 36], strides = [1, 1]} : vector<8x48xf32> to vector<8x36xf32>
    %345 = arith.negf %344 : vector<8x36xf32>
    %346 = math.exp %345 : vector<8x36xf32>
    %cst_118 = arith.constant 1.000000e+00 : f32
    %347 = vector.broadcast %cst_118 : f32 to vector<8x36xf32>
    %348 = arith.addf %347, %346 : vector<8x36xf32>
    %349 = arith.divf %347, %348 : vector<8x36xf32>
    %350 = vector.extract_strided_slice %343 {offsets = [0, 36], sizes = [8, 12], strides = [1, 1]} : vector<8x48xf32> to vector<8x12xf32>
    %351 = math.tanh %350 : vector<8x12xf32>
    %352 = vector.extract_strided_slice %349 {offsets = [0, 0], sizes = [8, 12], strides = [1, 1]} : vector<8x36xf32> to vector<8x12xf32>
    %353 = vector.extract_strided_slice %349 {offsets = [0, 12], sizes = [8, 12], strides = [1, 1]} : vector<8x36xf32> to vector<8x12xf32>
    %354 = vector.extract_strided_slice %349 {offsets = [0, 24], sizes = [8, 12], strides = [1, 1]} : vector<8x36xf32> to vector<8x12xf32>
    %355 = arith.mulf %353, %233 : vector<8x12xf32>
    %356 = arith.mulf %352, %351 : vector<8x12xf32>
    %357 = arith.addf %355, %356 : vector<8x12xf32>
    %358 = math.tanh %357 : vector<8x12xf32>
    %359 = arith.mulf %354, %358 : vector<8x12xf32>
    %360 = tpu.concatenate %359, %256 in 1 : vector<8x12xf32>, vector<8x12xf32> -> vector<8x24xf32>
    %c2_119 = arith.constant 2 : index
    %c0_120 = arith.constant 0 : index
    %c0_121 = arith.constant 0 : index
    %361 = vector.load %arg4[%c2_119, %c0_120, %c0_121] : memref<5x24x48xf32, #tpu.memory_space<vmem>>, vector<1x24x48xf32>
    %362 = vector.shape_cast %361 : vector<1x24x48xf32> to vector<24x48xf32>
    %cst_122 = arith.constant dense<0.000000e+00> : vector<8x48xf32>
    %363 = tpu.matmul %360, %362, %cst_122 {dimension_numbers = #tpu.dot_dimension_numbers<[1], [0], [0], [1], [0, 0, 1, 1], [], []>} : vector<8x24xf32>, vector<24x48xf32>, vector<8x48xf32> -> vector<8x48xf32>
    %364 = arith.addf %363, %18 : vector<8x48xf32>
    %365 = vector.extract_strided_slice %364 {offsets = [0, 0], sizes = [8, 36], strides = [1, 1]} : vector<8x48xf32> to vector<8x36xf32>
    %366 = arith.negf %365 : vector<8x36xf32>
    %367 = math.exp %366 : vector<8x36xf32>
    %cst_123 = arith.constant 1.000000e+00 : f32
    %368 = vector.broadcast %cst_123 : f32 to vector<8x36xf32>
    %369 = arith.addf %368, %367 : vector<8x36xf32>
    %370 = arith.divf %368, %369 : vector<8x36xf32>
    %371 = vector.extract_strided_slice %364 {offsets = [0, 36], sizes = [8, 12], strides = [1, 1]} : vector<8x48xf32> to vector<8x12xf32>
    %372 = math.tanh %371 : vector<8x12xf32>
    %373 = vector.extract_strided_slice %370 {offsets = [0, 0], sizes = [8, 12], strides = [1, 1]} : vector<8x36xf32> to vector<8x12xf32>
    %374 = vector.extract_strided_slice %370 {offsets = [0, 12], sizes = [8, 12], strides = [1, 1]} : vector<8x36xf32> to vector<8x12xf32>
    %375 = vector.extract_strided_slice %370 {offsets = [0, 24], sizes = [8, 12], strides = [1, 1]} : vector<8x36xf32> to vector<8x12xf32>
    %376 = arith.mulf %374, %254 : vector<8x12xf32>
    %377 = arith.mulf %373, %372 : vector<8x12xf32>
    %378 = arith.addf %376, %377 : vector<8x12xf32>
    %379 = math.tanh %378 : vector<8x12xf32>
    %380 = arith.mulf %375, %379 : vector<8x12xf32>
    %381 = tpu.concatenate %380, %277 in 1 : vector<8x12xf32>, vector<8x12xf32> -> vector<8x24xf32>
    %c3_124 = arith.constant 3 : index
    %c0_125 = arith.constant 0 : index
    %c0_126 = arith.constant 0 : index
    %382 = vector.load %arg4[%c3_124, %c0_125, %c0_126] : memref<5x24x48xf32, #tpu.memory_space<vmem>>, vector<1x24x48xf32>
    %383 = vector.shape_cast %382 : vector<1x24x48xf32> to vector<24x48xf32>
    %cst_127 = arith.constant dense<0.000000e+00> : vector<8x48xf32>
    %384 = tpu.matmul %381, %383, %cst_127 {dimension_numbers = #tpu.dot_dimension_numbers<[1], [0], [0], [1], [0, 0, 1, 1], [], []>} : vector<8x24xf32>, vector<24x48xf32>, vector<8x48xf32> -> vector<8x48xf32>
    %385 = arith.addf %384, %22 : vector<8x48xf32>
    %386 = vector.extract_strided_slice %385 {offsets = [0, 0], sizes = [8, 36], strides = [1, 1]} : vector<8x48xf32> to vector<8x36xf32>
    %387 = arith.negf %386 : vector<8x36xf32>
    %388 = math.exp %387 : vector<8x36xf32>
    %cst_128 = arith.constant 1.000000e+00 : f32
    %389 = vector.broadcast %cst_128 : f32 to vector<8x36xf32>
    %390 = arith.addf %389, %388 : vector<8x36xf32>
    %391 = arith.divf %389, %390 : vector<8x36xf32>
    %392 = vector.extract_strided_slice %385 {offsets = [0, 36], sizes = [8, 12], strides = [1, 1]} : vector<8x48xf32> to vector<8x12xf32>
    %393 = math.tanh %392 : vector<8x12xf32>
    %394 = vector.extract_strided_slice %391 {offsets = [0, 0], sizes = [8, 12], strides = [1, 1]} : vector<8x36xf32> to vector<8x12xf32>
    %395 = vector.extract_strided_slice %391 {offsets = [0, 12], sizes = [8, 12], strides = [1, 1]} : vector<8x36xf32> to vector<8x12xf32>
    %396 = vector.extract_strided_slice %391 {offsets = [0, 24], sizes = [8, 12], strides = [1, 1]} : vector<8x36xf32> to vector<8x12xf32>
    %397 = arith.mulf %395, %275 : vector<8x12xf32>
    %398 = arith.mulf %394, %393 : vector<8x12xf32>
    %399 = arith.addf %397, %398 : vector<8x12xf32>
    %400 = math.tanh %399 : vector<8x12xf32>
    %401 = arith.mulf %396, %400 : vector<8x12xf32>
    %402 = tpu.concatenate %401, %298 in 1 : vector<8x12xf32>, vector<8x12xf32> -> vector<8x24xf32>
    %c4_129 = arith.constant 4 : index
    %c0_130 = arith.constant 0 : index
    %c0_131 = arith.constant 0 : index
    %403 = vector.load %arg4[%c4_129, %c0_130, %c0_131] : memref<5x24x48xf32, #tpu.memory_space<vmem>>, vector<1x24x48xf32>
    %404 = vector.shape_cast %403 : vector<1x24x48xf32> to vector<24x48xf32>
    %cst_132 = arith.constant dense<0.000000e+00> : vector<8x48xf32>
    %405 = tpu.matmul %402, %404, %cst_132 {dimension_numbers = #tpu.dot_dimension_numbers<[1], [0], [0], [1], [0, 0, 1, 1], [], []>} : vector<8x24xf32>, vector<24x48xf32>, vector<8x48xf32> -> vector<8x48xf32>
    %406 = arith.addf %405, %26 : vector<8x48xf32>
    %407 = vector.extract_strided_slice %406 {offsets = [0, 0], sizes = [8, 36], strides = [1, 1]} : vector<8x48xf32> to vector<8x36xf32>
    %408 = arith.negf %407 : vector<8x36xf32>
    %409 = math.exp %408 : vector<8x36xf32>
    %cst_133 = arith.constant 1.000000e+00 : f32
    %410 = vector.broadcast %cst_133 : f32 to vector<8x36xf32>
    %411 = arith.addf %410, %409 : vector<8x36xf32>
    %412 = arith.divf %410, %411 : vector<8x36xf32>
    %413 = vector.extract_strided_slice %406 {offsets = [0, 36], sizes = [8, 12], strides = [1, 1]} : vector<8x48xf32> to vector<8x12xf32>
    %414 = math.tanh %413 : vector<8x12xf32>
    %415 = vector.extract_strided_slice %412 {offsets = [0, 0], sizes = [8, 12], strides = [1, 1]} : vector<8x36xf32> to vector<8x12xf32>
    %416 = vector.extract_strided_slice %412 {offsets = [0, 12], sizes = [8, 12], strides = [1, 1]} : vector<8x36xf32> to vector<8x12xf32>
    %417 = vector.extract_strided_slice %412 {offsets = [0, 24], sizes = [8, 12], strides = [1, 1]} : vector<8x36xf32> to vector<8x12xf32>
    %418 = arith.mulf %416, %296 : vector<8x12xf32>
    %419 = arith.mulf %415, %414 : vector<8x12xf32>
    %420 = arith.addf %418, %419 : vector<8x12xf32>
    %421 = math.tanh %420 : vector<8x12xf32>
    %422 = arith.mulf %417, %421 : vector<8x12xf32>
    %423 = vector.extract_strided_slice %5 {offsets = [24, 0], sizes = [8, 48], strides = [1, 1]} : vector<40x48xf32> to vector<8x48xf32>
    %cst_134 = arith.constant dense<0.000000e+00> : vector<8x48xf32>
    %424 = tpu.matmul %317, %6, %cst_134 {dimension_numbers = #tpu.dot_dimension_numbers<[1], [0], [0], [1], [0, 0, 1, 1], [], []>} : vector<8x12xf32>, vector<12x48xf32>, vector<8x48xf32> -> vector<8x48xf32>
    %425 = arith.addf %423, %424 : vector<8x48xf32>
    %426 = vector.extract_strided_slice %425 {offsets = [0, 0], sizes = [8, 36], strides = [1, 1]} : vector<8x48xf32> to vector<8x36xf32>
    %427 = arith.negf %426 : vector<8x36xf32>
    %428 = math.exp %427 : vector<8x36xf32>
    %cst_135 = arith.constant 1.000000e+00 : f32
    %429 = vector.broadcast %cst_135 : f32 to vector<8x36xf32>
    %430 = arith.addf %429, %428 : vector<8x36xf32>
    %431 = arith.divf %429, %430 : vector<8x36xf32>
    %432 = vector.extract_strided_slice %425 {offsets = [0, 36], sizes = [8, 12], strides = [1, 1]} : vector<8x48xf32> to vector<8x12xf32>
    %433 = math.tanh %432 : vector<8x12xf32>
    %434 = vector.extract_strided_slice %431 {offsets = [0, 0], sizes = [8, 12], strides = [1, 1]} : vector<8x36xf32> to vector<8x12xf32>
    %435 = vector.extract_strided_slice %431 {offsets = [0, 12], sizes = [8, 12], strides = [1, 1]} : vector<8x36xf32> to vector<8x12xf32>
    %436 = vector.extract_strided_slice %431 {offsets = [0, 24], sizes = [8, 12], strides = [1, 1]} : vector<8x36xf32> to vector<8x12xf32>
    %437 = arith.mulf %435, %315 : vector<8x12xf32>
    %438 = arith.mulf %434, %433 : vector<8x12xf32>
    %439 = arith.addf %437, %438 : vector<8x12xf32>
    %440 = math.tanh %439 : vector<8x12xf32>
    %441 = arith.mulf %436, %440 : vector<8x12xf32>
    %442 = tpu.concatenate %441, %338 in 1 : vector<8x12xf32>, vector<8x12xf32> -> vector<8x24xf32>
    %c0_136 = arith.constant 0 : index
    %c0_137 = arith.constant 0 : index
    %c0_138 = arith.constant 0 : index
    %443 = vector.load %arg4[%c0_136, %c0_137, %c0_138] : memref<5x24x48xf32, #tpu.memory_space<vmem>>, vector<1x24x48xf32>
    %444 = vector.shape_cast %443 : vector<1x24x48xf32> to vector<24x48xf32>
    %cst_139 = arith.constant dense<0.000000e+00> : vector<8x48xf32>
    %445 = tpu.matmul %442, %444, %cst_139 {dimension_numbers = #tpu.dot_dimension_numbers<[1], [0], [0], [1], [0, 0, 1, 1], [], []>} : vector<8x24xf32>, vector<24x48xf32>, vector<8x48xf32> -> vector<8x48xf32>
    %446 = arith.addf %445, %10 : vector<8x48xf32>
    %447 = vector.extract_strided_slice %446 {offsets = [0, 0], sizes = [8, 36], strides = [1, 1]} : vector<8x48xf32> to vector<8x36xf32>
    %448 = arith.negf %447 : vector<8x36xf32>
    %449 = math.exp %448 : vector<8x36xf32>
    %cst_140 = arith.constant 1.000000e+00 : f32
    %450 = vector.broadcast %cst_140 : f32 to vector<8x36xf32>
    %451 = arith.addf %450, %449 : vector<8x36xf32>
    %452 = arith.divf %450, %451 : vector<8x36xf32>
    %453 = vector.extract_strided_slice %446 {offsets = [0, 36], sizes = [8, 12], strides = [1, 1]} : vector<8x48xf32> to vector<8x12xf32>
    %454 = math.tanh %453 : vector<8x12xf32>
    %455 = vector.extract_strided_slice %452 {offsets = [0, 0], sizes = [8, 12], strides = [1, 1]} : vector<8x36xf32> to vector<8x12xf32>
    %456 = vector.extract_strided_slice %452 {offsets = [0, 12], sizes = [8, 12], strides = [1, 1]} : vector<8x36xf32> to vector<8x12xf32>
    %457 = vector.extract_strided_slice %452 {offsets = [0, 24], sizes = [8, 12], strides = [1, 1]} : vector<8x36xf32> to vector<8x12xf32>
    %458 = arith.mulf %456, %336 : vector<8x12xf32>
    %459 = arith.mulf %455, %454 : vector<8x12xf32>
    %460 = arith.addf %458, %459 : vector<8x12xf32>
    %461 = math.tanh %460 : vector<8x12xf32>
    %462 = arith.mulf %457, %461 : vector<8x12xf32>
    %463 = tpu.concatenate %462, %359 in 1 : vector<8x12xf32>, vector<8x12xf32> -> vector<8x24xf32>
    %c1_141 = arith.constant 1 : index
    %c0_142 = arith.constant 0 : index
    %c0_143 = arith.constant 0 : index
    %464 = vector.load %arg4[%c1_141, %c0_142, %c0_143] : memref<5x24x48xf32, #tpu.memory_space<vmem>>, vector<1x24x48xf32>
    %465 = vector.shape_cast %464 : vector<1x24x48xf32> to vector<24x48xf32>
    %cst_144 = arith.constant dense<0.000000e+00> : vector<8x48xf32>
    %466 = tpu.matmul %463, %465, %cst_144 {dimension_numbers = #tpu.dot_dimension_numbers<[1], [0], [0], [1], [0, 0, 1, 1], [], []>} : vector<8x24xf32>, vector<24x48xf32>, vector<8x48xf32> -> vector<8x48xf32>
    %467 = arith.addf %466, %14 : vector<8x48xf32>
    %468 = vector.extract_strided_slice %467 {offsets = [0, 0], sizes = [8, 36], strides = [1, 1]} : vector<8x48xf32> to vector<8x36xf32>
    %469 = arith.negf %468 : vector<8x36xf32>
    %470 = math.exp %469 : vector<8x36xf32>
    %cst_145 = arith.constant 1.000000e+00 : f32
    %471 = vector.broadcast %cst_145 : f32 to vector<8x36xf32>
    %472 = arith.addf %471, %470 : vector<8x36xf32>
    %473 = arith.divf %471, %472 : vector<8x36xf32>
    %474 = vector.extract_strided_slice %467 {offsets = [0, 36], sizes = [8, 12], strides = [1, 1]} : vector<8x48xf32> to vector<8x12xf32>
    %475 = math.tanh %474 : vector<8x12xf32>
    %476 = vector.extract_strided_slice %473 {offsets = [0, 0], sizes = [8, 12], strides = [1, 1]} : vector<8x36xf32> to vector<8x12xf32>
    %477 = vector.extract_strided_slice %473 {offsets = [0, 12], sizes = [8, 12], strides = [1, 1]} : vector<8x36xf32> to vector<8x12xf32>
    %478 = vector.extract_strided_slice %473 {offsets = [0, 24], sizes = [8, 12], strides = [1, 1]} : vector<8x36xf32> to vector<8x12xf32>
    %479 = arith.mulf %477, %357 : vector<8x12xf32>
    %480 = arith.mulf %476, %475 : vector<8x12xf32>
    %481 = arith.addf %479, %480 : vector<8x12xf32>
    %482 = math.tanh %481 : vector<8x12xf32>
    %483 = arith.mulf %478, %482 : vector<8x12xf32>
    %484 = tpu.concatenate %483, %380 in 1 : vector<8x12xf32>, vector<8x12xf32> -> vector<8x24xf32>
    %c2_146 = arith.constant 2 : index
    %c0_147 = arith.constant 0 : index
    %c0_148 = arith.constant 0 : index
    %485 = vector.load %arg4[%c2_146, %c0_147, %c0_148] : memref<5x24x48xf32, #tpu.memory_space<vmem>>, vector<1x24x48xf32>
    %486 = vector.shape_cast %485 : vector<1x24x48xf32> to vector<24x48xf32>
    %cst_149 = arith.constant dense<0.000000e+00> : vector<8x48xf32>
    %487 = tpu.matmul %484, %486, %cst_149 {dimension_numbers = #tpu.dot_dimension_numbers<[1], [0], [0], [1], [0, 0, 1, 1], [], []>} : vector<8x24xf32>, vector<24x48xf32>, vector<8x48xf32> -> vector<8x48xf32>
    %488 = arith.addf %487, %18 : vector<8x48xf32>
    %489 = vector.extract_strided_slice %488 {offsets = [0, 0], sizes = [8, 36], strides = [1, 1]} : vector<8x48xf32> to vector<8x36xf32>
    %490 = arith.negf %489 : vector<8x36xf32>
    %491 = math.exp %490 : vector<8x36xf32>
    %cst_150 = arith.constant 1.000000e+00 : f32
    %492 = vector.broadcast %cst_150 : f32 to vector<8x36xf32>
    %493 = arith.addf %492, %491 : vector<8x36xf32>
    %494 = arith.divf %492, %493 : vector<8x36xf32>
    %495 = vector.extract_strided_slice %488 {offsets = [0, 36], sizes = [8, 12], strides = [1, 1]} : vector<8x48xf32> to vector<8x12xf32>
    %496 = math.tanh %495 : vector<8x12xf32>
    %497 = vector.extract_strided_slice %494 {offsets = [0, 0], sizes = [8, 12], strides = [1, 1]} : vector<8x36xf32> to vector<8x12xf32>
    %498 = vector.extract_strided_slice %494 {offsets = [0, 12], sizes = [8, 12], strides = [1, 1]} : vector<8x36xf32> to vector<8x12xf32>
    %499 = vector.extract_strided_slice %494 {offsets = [0, 24], sizes = [8, 12], strides = [1, 1]} : vector<8x36xf32> to vector<8x12xf32>
    %500 = arith.mulf %498, %378 : vector<8x12xf32>
    %501 = arith.mulf %497, %496 : vector<8x12xf32>
    %502 = arith.addf %500, %501 : vector<8x12xf32>
    %503 = math.tanh %502 : vector<8x12xf32>
    %504 = arith.mulf %499, %503 : vector<8x12xf32>
    %505 = tpu.concatenate %504, %401 in 1 : vector<8x12xf32>, vector<8x12xf32> -> vector<8x24xf32>
    %c3_151 = arith.constant 3 : index
    %c0_152 = arith.constant 0 : index
    %c0_153 = arith.constant 0 : index
    %506 = vector.load %arg4[%c3_151, %c0_152, %c0_153] : memref<5x24x48xf32, #tpu.memory_space<vmem>>, vector<1x24x48xf32>
    %507 = vector.shape_cast %506 : vector<1x24x48xf32> to vector<24x48xf32>
    %cst_154 = arith.constant dense<0.000000e+00> : vector<8x48xf32>
    %508 = tpu.matmul %505, %507, %cst_154 {dimension_numbers = #tpu.dot_dimension_numbers<[1], [0], [0], [1], [0, 0, 1, 1], [], []>} : vector<8x24xf32>, vector<24x48xf32>, vector<8x48xf32> -> vector<8x48xf32>
    %509 = arith.addf %508, %22 : vector<8x48xf32>
    %510 = vector.extract_strided_slice %509 {offsets = [0, 0], sizes = [8, 36], strides = [1, 1]} : vector<8x48xf32> to vector<8x36xf32>
    %511 = arith.negf %510 : vector<8x36xf32>
    %512 = math.exp %511 : vector<8x36xf32>
    %cst_155 = arith.constant 1.000000e+00 : f32
    %513 = vector.broadcast %cst_155 : f32 to vector<8x36xf32>
    %514 = arith.addf %513, %512 : vector<8x36xf32>
    %515 = arith.divf %513, %514 : vector<8x36xf32>
    %516 = vector.extract_strided_slice %509 {offsets = [0, 36], sizes = [8, 12], strides = [1, 1]} : vector<8x48xf32> to vector<8x12xf32>
    %517 = math.tanh %516 : vector<8x12xf32>
    %518 = vector.extract_strided_slice %515 {offsets = [0, 0], sizes = [8, 12], strides = [1, 1]} : vector<8x36xf32> to vector<8x12xf32>
    %519 = vector.extract_strided_slice %515 {offsets = [0, 12], sizes = [8, 12], strides = [1, 1]} : vector<8x36xf32> to vector<8x12xf32>
    %520 = vector.extract_strided_slice %515 {offsets = [0, 24], sizes = [8, 12], strides = [1, 1]} : vector<8x36xf32> to vector<8x12xf32>
    %521 = arith.mulf %519, %399 : vector<8x12xf32>
    %522 = arith.mulf %518, %517 : vector<8x12xf32>
    %523 = arith.addf %521, %522 : vector<8x12xf32>
    %524 = math.tanh %523 : vector<8x12xf32>
    %525 = arith.mulf %520, %524 : vector<8x12xf32>
    %526 = tpu.concatenate %525, %422 in 1 : vector<8x12xf32>, vector<8x12xf32> -> vector<8x24xf32>
    %c4_156 = arith.constant 4 : index
    %c0_157 = arith.constant 0 : index
    %c0_158 = arith.constant 0 : index
    %527 = vector.load %arg4[%c4_156, %c0_157, %c0_158] : memref<5x24x48xf32, #tpu.memory_space<vmem>>, vector<1x24x48xf32>
    %528 = vector.shape_cast %527 : vector<1x24x48xf32> to vector<24x48xf32>
    %cst_159 = arith.constant dense<0.000000e+00> : vector<8x48xf32>
    %529 = tpu.matmul %526, %528, %cst_159 {dimension_numbers = #tpu.dot_dimension_numbers<[1], [0], [0], [1], [0, 0, 1, 1], [], []>} : vector<8x24xf32>, vector<24x48xf32>, vector<8x48xf32> -> vector<8x48xf32>
    %530 = arith.addf %529, %26 : vector<8x48xf32>
    %531 = vector.extract_strided_slice %530 {offsets = [0, 0], sizes = [8, 36], strides = [1, 1]} : vector<8x48xf32> to vector<8x36xf32>
    %532 = arith.negf %531 : vector<8x36xf32>
    %533 = math.exp %532 : vector<8x36xf32>
    %cst_160 = arith.constant 1.000000e+00 : f32
    %534 = vector.broadcast %cst_160 : f32 to vector<8x36xf32>
    %535 = arith.addf %534, %533 : vector<8x36xf32>
    %536 = arith.divf %534, %535 : vector<8x36xf32>
    %537 = vector.extract_strided_slice %530 {offsets = [0, 36], sizes = [8, 12], strides = [1, 1]} : vector<8x48xf32> to vector<8x12xf32>
    %538 = math.tanh %537 : vector<8x12xf32>
    %539 = vector.extract_strided_slice %536 {offsets = [0, 0], sizes = [8, 12], strides = [1, 1]} : vector<8x36xf32> to vector<8x12xf32>
    %540 = vector.extract_strided_slice %536 {offsets = [0, 12], sizes = [8, 12], strides = [1, 1]} : vector<8x36xf32> to vector<8x12xf32>
    %541 = vector.extract_strided_slice %536 {offsets = [0, 24], sizes = [8, 12], strides = [1, 1]} : vector<8x36xf32> to vector<8x12xf32>
    %542 = arith.mulf %540, %420 : vector<8x12xf32>
    %543 = arith.mulf %539, %538 : vector<8x12xf32>
    %544 = arith.addf %542, %543 : vector<8x12xf32>
    %545 = math.tanh %544 : vector<8x12xf32>
    %546 = arith.mulf %541, %545 : vector<8x12xf32>
    %547 = vector.extract_strided_slice %5 {offsets = [32, 0], sizes = [8, 48], strides = [1, 1]} : vector<40x48xf32> to vector<8x48xf32>
    %cst_161 = arith.constant dense<0.000000e+00> : vector<8x48xf32>
    %548 = tpu.matmul %441, %6, %cst_161 {dimension_numbers = #tpu.dot_dimension_numbers<[1], [0], [0], [1], [0, 0, 1, 1], [], []>} : vector<8x12xf32>, vector<12x48xf32>, vector<8x48xf32> -> vector<8x48xf32>
    %549 = arith.addf %547, %548 : vector<8x48xf32>
    %550 = vector.extract_strided_slice %549 {offsets = [0, 0], sizes = [8, 36], strides = [1, 1]} : vector<8x48xf32> to vector<8x36xf32>
    %551 = arith.negf %550 : vector<8x36xf32>
    %552 = math.exp %551 : vector<8x36xf32>
    %cst_162 = arith.constant 1.000000e+00 : f32
    %553 = vector.broadcast %cst_162 : f32 to vector<8x36xf32>
    %554 = arith.addf %553, %552 : vector<8x36xf32>
    %555 = arith.divf %553, %554 : vector<8x36xf32>
    %556 = vector.extract_strided_slice %549 {offsets = [0, 36], sizes = [8, 12], strides = [1, 1]} : vector<8x48xf32> to vector<8x12xf32>
    %557 = math.tanh %556 : vector<8x12xf32>
    %558 = vector.extract_strided_slice %555 {offsets = [0, 0], sizes = [8, 12], strides = [1, 1]} : vector<8x36xf32> to vector<8x12xf32>
    %559 = vector.extract_strided_slice %555 {offsets = [0, 12], sizes = [8, 12], strides = [1, 1]} : vector<8x36xf32> to vector<8x12xf32>
    %560 = vector.extract_strided_slice %555 {offsets = [0, 24], sizes = [8, 12], strides = [1, 1]} : vector<8x36xf32> to vector<8x12xf32>
    %561 = arith.mulf %559, %439 : vector<8x12xf32>
    %562 = arith.mulf %558, %557 : vector<8x12xf32>
    %563 = arith.addf %561, %562 : vector<8x12xf32>
    %564 = math.tanh %563 : vector<8x12xf32>
    %565 = arith.mulf %560, %564 : vector<8x12xf32>
    %566 = tpu.concatenate %565, %462 in 1 : vector<8x12xf32>, vector<8x12xf32> -> vector<8x24xf32>
    %c0_163 = arith.constant 0 : index
    %c0_164 = arith.constant 0 : index
    %c0_165 = arith.constant 0 : index
    %567 = vector.load %arg4[%c0_163, %c0_164, %c0_165] : memref<5x24x48xf32, #tpu.memory_space<vmem>>, vector<1x24x48xf32>
    %568 = vector.shape_cast %567 : vector<1x24x48xf32> to vector<24x48xf32>
    %cst_166 = arith.constant dense<0.000000e+00> : vector<8x48xf32>
    %569 = tpu.matmul %566, %568, %cst_166 {dimension_numbers = #tpu.dot_dimension_numbers<[1], [0], [0], [1], [0, 0, 1, 1], [], []>} : vector<8x24xf32>, vector<24x48xf32>, vector<8x48xf32> -> vector<8x48xf32>
    %570 = arith.addf %569, %10 : vector<8x48xf32>
    %571 = vector.extract_strided_slice %570 {offsets = [0, 0], sizes = [8, 36], strides = [1, 1]} : vector<8x48xf32> to vector<8x36xf32>
    %572 = arith.negf %571 : vector<8x36xf32>
    %573 = math.exp %572 : vector<8x36xf32>
    %cst_167 = arith.constant 1.000000e+00 : f32
    %574 = vector.broadcast %cst_167 : f32 to vector<8x36xf32>
    %575 = arith.addf %574, %573 : vector<8x36xf32>
    %576 = arith.divf %574, %575 : vector<8x36xf32>
    %577 = vector.extract_strided_slice %570 {offsets = [0, 36], sizes = [8, 12], strides = [1, 1]} : vector<8x48xf32> to vector<8x12xf32>
    %578 = math.tanh %577 : vector<8x12xf32>
    %579 = vector.extract_strided_slice %576 {offsets = [0, 0], sizes = [8, 12], strides = [1, 1]} : vector<8x36xf32> to vector<8x12xf32>
    %580 = vector.extract_strided_slice %576 {offsets = [0, 12], sizes = [8, 12], strides = [1, 1]} : vector<8x36xf32> to vector<8x12xf32>
    %581 = vector.extract_strided_slice %576 {offsets = [0, 24], sizes = [8, 12], strides = [1, 1]} : vector<8x36xf32> to vector<8x12xf32>
    %582 = arith.mulf %580, %460 : vector<8x12xf32>
    %583 = arith.mulf %579, %578 : vector<8x12xf32>
    %584 = arith.addf %582, %583 : vector<8x12xf32>
    %585 = math.tanh %584 : vector<8x12xf32>
    %586 = arith.mulf %581, %585 : vector<8x12xf32>
    %587 = tpu.concatenate %586, %483 in 1 : vector<8x12xf32>, vector<8x12xf32> -> vector<8x24xf32>
    %c1_168 = arith.constant 1 : index
    %c0_169 = arith.constant 0 : index
    %c0_170 = arith.constant 0 : index
    %588 = vector.load %arg4[%c1_168, %c0_169, %c0_170] : memref<5x24x48xf32, #tpu.memory_space<vmem>>, vector<1x24x48xf32>
    %589 = vector.shape_cast %588 : vector<1x24x48xf32> to vector<24x48xf32>
    %cst_171 = arith.constant dense<0.000000e+00> : vector<8x48xf32>
    %590 = tpu.matmul %587, %589, %cst_171 {dimension_numbers = #tpu.dot_dimension_numbers<[1], [0], [0], [1], [0, 0, 1, 1], [], []>} : vector<8x24xf32>, vector<24x48xf32>, vector<8x48xf32> -> vector<8x48xf32>
    %591 = arith.addf %590, %14 : vector<8x48xf32>
    %592 = vector.extract_strided_slice %591 {offsets = [0, 0], sizes = [8, 36], strides = [1, 1]} : vector<8x48xf32> to vector<8x36xf32>
    %593 = arith.negf %592 : vector<8x36xf32>
    %594 = math.exp %593 : vector<8x36xf32>
    %cst_172 = arith.constant 1.000000e+00 : f32
    %595 = vector.broadcast %cst_172 : f32 to vector<8x36xf32>
    %596 = arith.addf %595, %594 : vector<8x36xf32>
    %597 = arith.divf %595, %596 : vector<8x36xf32>
    %598 = vector.extract_strided_slice %591 {offsets = [0, 36], sizes = [8, 12], strides = [1, 1]} : vector<8x48xf32> to vector<8x12xf32>
    %599 = math.tanh %598 : vector<8x12xf32>
    %600 = vector.extract_strided_slice %597 {offsets = [0, 0], sizes = [8, 12], strides = [1, 1]} : vector<8x36xf32> to vector<8x12xf32>
    %601 = vector.extract_strided_slice %597 {offsets = [0, 12], sizes = [8, 12], strides = [1, 1]} : vector<8x36xf32> to vector<8x12xf32>
    %602 = vector.extract_strided_slice %597 {offsets = [0, 24], sizes = [8, 12], strides = [1, 1]} : vector<8x36xf32> to vector<8x12xf32>
    %603 = arith.mulf %601, %481 : vector<8x12xf32>
    %604 = arith.mulf %600, %599 : vector<8x12xf32>
    %605 = arith.addf %603, %604 : vector<8x12xf32>
    %606 = math.tanh %605 : vector<8x12xf32>
    %607 = arith.mulf %602, %606 : vector<8x12xf32>
    %608 = tpu.concatenate %607, %504 in 1 : vector<8x12xf32>, vector<8x12xf32> -> vector<8x24xf32>
    %c2_173 = arith.constant 2 : index
    %c0_174 = arith.constant 0 : index
    %c0_175 = arith.constant 0 : index
    %609 = vector.load %arg4[%c2_173, %c0_174, %c0_175] : memref<5x24x48xf32, #tpu.memory_space<vmem>>, vector<1x24x48xf32>
    %610 = vector.shape_cast %609 : vector<1x24x48xf32> to vector<24x48xf32>
    %cst_176 = arith.constant dense<0.000000e+00> : vector<8x48xf32>
    %611 = tpu.matmul %608, %610, %cst_176 {dimension_numbers = #tpu.dot_dimension_numbers<[1], [0], [0], [1], [0, 0, 1, 1], [], []>} : vector<8x24xf32>, vector<24x48xf32>, vector<8x48xf32> -> vector<8x48xf32>
    %612 = arith.addf %611, %18 : vector<8x48xf32>
    %613 = vector.extract_strided_slice %612 {offsets = [0, 0], sizes = [8, 36], strides = [1, 1]} : vector<8x48xf32> to vector<8x36xf32>
    %614 = arith.negf %613 : vector<8x36xf32>
    %615 = math.exp %614 : vector<8x36xf32>
    %cst_177 = arith.constant 1.000000e+00 : f32
    %616 = vector.broadcast %cst_177 : f32 to vector<8x36xf32>
    %617 = arith.addf %616, %615 : vector<8x36xf32>
    %618 = arith.divf %616, %617 : vector<8x36xf32>
    %619 = vector.extract_strided_slice %612 {offsets = [0, 36], sizes = [8, 12], strides = [1, 1]} : vector<8x48xf32> to vector<8x12xf32>
    %620 = math.tanh %619 : vector<8x12xf32>
    %621 = vector.extract_strided_slice %618 {offsets = [0, 0], sizes = [8, 12], strides = [1, 1]} : vector<8x36xf32> to vector<8x12xf32>
    %622 = vector.extract_strided_slice %618 {offsets = [0, 12], sizes = [8, 12], strides = [1, 1]} : vector<8x36xf32> to vector<8x12xf32>
    %623 = vector.extract_strided_slice %618 {offsets = [0, 24], sizes = [8, 12], strides = [1, 1]} : vector<8x36xf32> to vector<8x12xf32>
    %624 = arith.mulf %622, %502 : vector<8x12xf32>
    %625 = arith.mulf %621, %620 : vector<8x12xf32>
    %626 = arith.addf %624, %625 : vector<8x12xf32>
    %627 = math.tanh %626 : vector<8x12xf32>
    %628 = arith.mulf %623, %627 : vector<8x12xf32>
    %629 = tpu.concatenate %628, %525 in 1 : vector<8x12xf32>, vector<8x12xf32> -> vector<8x24xf32>
    %c3_178 = arith.constant 3 : index
    %c0_179 = arith.constant 0 : index
    %c0_180 = arith.constant 0 : index
    %630 = vector.load %arg4[%c3_178, %c0_179, %c0_180] : memref<5x24x48xf32, #tpu.memory_space<vmem>>, vector<1x24x48xf32>
    %631 = vector.shape_cast %630 : vector<1x24x48xf32> to vector<24x48xf32>
    %cst_181 = arith.constant dense<0.000000e+00> : vector<8x48xf32>
    %632 = tpu.matmul %629, %631, %cst_181 {dimension_numbers = #tpu.dot_dimension_numbers<[1], [0], [0], [1], [0, 0, 1, 1], [], []>} : vector<8x24xf32>, vector<24x48xf32>, vector<8x48xf32> -> vector<8x48xf32>
    %633 = arith.addf %632, %22 : vector<8x48xf32>
    %634 = vector.extract_strided_slice %633 {offsets = [0, 0], sizes = [8, 36], strides = [1, 1]} : vector<8x48xf32> to vector<8x36xf32>
    %635 = arith.negf %634 : vector<8x36xf32>
    %636 = math.exp %635 : vector<8x36xf32>
    %cst_182 = arith.constant 1.000000e+00 : f32
    %637 = vector.broadcast %cst_182 : f32 to vector<8x36xf32>
    %638 = arith.addf %637, %636 : vector<8x36xf32>
    %639 = arith.divf %637, %638 : vector<8x36xf32>
    %640 = vector.extract_strided_slice %633 {offsets = [0, 36], sizes = [8, 12], strides = [1, 1]} : vector<8x48xf32> to vector<8x12xf32>
    %641 = math.tanh %640 : vector<8x12xf32>
    %642 = vector.extract_strided_slice %639 {offsets = [0, 0], sizes = [8, 12], strides = [1, 1]} : vector<8x36xf32> to vector<8x12xf32>
    %643 = vector.extract_strided_slice %639 {offsets = [0, 12], sizes = [8, 12], strides = [1, 1]} : vector<8x36xf32> to vector<8x12xf32>
    %644 = vector.extract_strided_slice %639 {offsets = [0, 24], sizes = [8, 12], strides = [1, 1]} : vector<8x36xf32> to vector<8x12xf32>
    %645 = arith.mulf %643, %523 : vector<8x12xf32>
    %646 = arith.mulf %642, %641 : vector<8x12xf32>
    %647 = arith.addf %645, %646 : vector<8x12xf32>
    %648 = math.tanh %647 : vector<8x12xf32>
    %649 = arith.mulf %644, %648 : vector<8x12xf32>
    %650 = tpu.concatenate %649, %546 in 1 : vector<8x12xf32>, vector<8x12xf32> -> vector<8x24xf32>
    %c4_183 = arith.constant 4 : index
    %c0_184 = arith.constant 0 : index
    %c0_185 = arith.constant 0 : index
    %651 = vector.load %arg4[%c4_183, %c0_184, %c0_185] : memref<5x24x48xf32, #tpu.memory_space<vmem>>, vector<1x24x48xf32>
    %652 = vector.shape_cast %651 : vector<1x24x48xf32> to vector<24x48xf32>
    %cst_186 = arith.constant dense<0.000000e+00> : vector<8x48xf32>
    %653 = tpu.matmul %650, %652, %cst_186 {dimension_numbers = #tpu.dot_dimension_numbers<[1], [0], [0], [1], [0, 0, 1, 1], [], []>} : vector<8x24xf32>, vector<24x48xf32>, vector<8x48xf32> -> vector<8x48xf32>
    %654 = arith.addf %653, %26 : vector<8x48xf32>
    %655 = vector.extract_strided_slice %654 {offsets = [0, 0], sizes = [8, 36], strides = [1, 1]} : vector<8x48xf32> to vector<8x36xf32>
    %656 = arith.negf %655 : vector<8x36xf32>
    %657 = math.exp %656 : vector<8x36xf32>
    %cst_187 = arith.constant 1.000000e+00 : f32
    %658 = vector.broadcast %cst_187 : f32 to vector<8x36xf32>
    %659 = arith.addf %658, %657 : vector<8x36xf32>
    %660 = arith.divf %658, %659 : vector<8x36xf32>
    %661 = vector.extract_strided_slice %654 {offsets = [0, 36], sizes = [8, 12], strides = [1, 1]} : vector<8x48xf32> to vector<8x12xf32>
    %662 = math.tanh %661 : vector<8x12xf32>
    %663 = vector.extract_strided_slice %660 {offsets = [0, 0], sizes = [8, 12], strides = [1, 1]} : vector<8x36xf32> to vector<8x12xf32>
    %664 = vector.extract_strided_slice %660 {offsets = [0, 12], sizes = [8, 12], strides = [1, 1]} : vector<8x36xf32> to vector<8x12xf32>
    %665 = vector.extract_strided_slice %660 {offsets = [0, 24], sizes = [8, 12], strides = [1, 1]} : vector<8x36xf32> to vector<8x12xf32>
    %666 = arith.mulf %664, %544 : vector<8x12xf32>
    %667 = arith.mulf %663, %662 : vector<8x12xf32>
    %668 = arith.addf %666, %667 : vector<8x12xf32>
    %669 = math.tanh %668 : vector<8x12xf32>
    %670 = arith.mulf %665, %669 : vector<8x12xf32>
    %c0_188 = arith.constant 0 : index
    %c0_189 = arith.constant 0 : index
    %671 = vector.load %arg8[%c0_188, %c0_189] : memref<12x1xf32, #tpu.memory_space<vmem>>, vector<12x1xf32>
    %cst_190 = arith.constant dense<0.000000e+00> : vector<8x1xf32>
    %672 = tpu.matmul %670, %671, %cst_190 {dimension_numbers = #tpu.dot_dimension_numbers<[1], [0], [0], [1], [0, 0, 1, 1], [], []>} : vector<8x12xf32>, vector<12x1xf32>, vector<8x1xf32> -> vector<8x1xf32>
    %c0_191 = arith.constant 0 : index
    %c0_192 = arith.constant 0 : index
    %673 = vector.load %arg9[%c0_191, %c0_192] : memref<1x1xf32, #tpu.memory_space<vmem>>, vector<1x1xf32>
    %674 = vector.broadcast %673 : vector<1x1xf32> to vector<8x1xf32>
    %675 = arith.addf %672, %674 : vector<8x1xf32>
    %c0_193 = arith.constant 0 : index
    %c0_194 = arith.constant 0 : index
    %676 = vector.load %arg10[%c0_193, %c0_194] : memref<8x1xf32, #tpu.memory_space<vmem>>, vector<8x1xf32>
    tpu.vector_store %arg10[%c0_193, %c0_194], %675 {strides = array<i32>} : memref<8x1xf32, #tpu.memory_space<vmem>>, vector<8x1xf32>,
    return
  }
}

</mosaic_0001>

<llo_original>
// kernel: cnn_multi_lstm_forward.1
$region0: #{cnn_multi_lstm_forward.1}
  #allocation0 [shape = 'u32[]', space=smem, size = 0x4, offset = 0x4, fixed_abs, tag = 'smem constant byte address 0x4 - core index']
  #allocation1 [shape = 'u32[144,128]{1,0:T(1,128)}', space=vmem, size = 0x12000, scoped, tag = 'internal scratch']
  #allocation2 [shape = 'f32[1,1]{1,0:T(1,128)S(1)}', space=vmem, size = 0x200, scoped, tag = 'scoped memory for cnn_multi_lstm_forward.1']
  %s0 = inlined_call_operand.vmem [shape: f32[40,13], index: 0, kind: input, shape index: {}]
  %s1 = inlined_call_operand.vmem [shape: f32[13,48], index: 1, kind: input, shape index: {}]
  %s2 = inlined_call_operand.hbm [shape: f32[1,48], index: 2, kind: input, shape index: {}]
  %s3 = inlined_call_operand.hbm [shape: f32[12,48], index: 3, kind: input, shape index: {}]
  %s4 = inlined_call_operand.hbm [shape: f32[5,24,48], index: 4, kind: input, shape index: {}]
  %s5 = inlined_call_operand.hbm [shape: f32[5,1,48], index: 5, kind: input, shape index: {}]
  %s6 = inlined_call_operand.vmem [shape: f32[6,8,12], index: 6, kind: input, shape index: {}]
  %s7 = inlined_call_operand.vmem [shape: f32[6,8,12], index: 7, kind: input, shape index: {}]
  %s8 = inlined_call_operand.vmem [shape: f32[12,1], index: 8, kind: input, shape index: {}]
  %s9 = inlined_call_operand.<no memory space> [shape: f32[1,1], index: 9, kind: input, shape index: {}]
  %s10 = inlined_call_operand.vmem [shape: f32[8,1], index: 10, kind: output, shape index: {}]
  %s11 = sld [smem:[#allocation0]]
  $region66: #{cnn_multi_lstm_forward.1} parent=0
    _
  %s13 = ssub.s32 1, %s11
  %s14 = scalar_select 0, %s13, %s11
  %v15 = vstv %s9
  %16 = vst [vmem:[#allocation2] sm:$0x1] %v15
  $region1: #{cnn_multi_lstm_forward.1} parent=0
    #allocation3 [shape = 'u8[512]{0}', space=vmem, size = 0x400, scoped, tag = 'input window, operand 2, single buffered']
    #allocation4 [shape = 's32[1]{0}', space=sflag, size = 0x4, scoped, tag = 'scoped memory for cnn_multi_lstm_forward.1']
    #allocation5 [shape = 'u8[8192]{0}', space=vmem, size = 0x2000, scoped, tag = 'input window, operand 3, single buffered']
    #allocation6 [shape = 's32[1]{0}', space=sflag, size = 0x4, scoped, tag = 'scoped memory for cnn_multi_lstm_forward.1']
    #allocation7 [shape = 'u8[61440]{0}', space=vmem, size = 0xf000, scoped, tag = 'input window, operand 4, single buffered']
    #allocation8 [shape = 'u8[2560]{0}', space=vmem, size = 0xc00, scoped, tag = 'input window, operand 5, single buffered']
    #allocation9 [shape = 's32[1]{0}', space=sflag, size = 0x4, scoped, tag = 'scoped memory for cnn_multi_lstm_forward.1']
    %17 = vsyncpa [#allocation4], 0
    %18 = vsyncpa [#allocation6], 0
    %19 = vsyncpa [#allocation9], 0
    // Predicated region
    $region2: #{cnn_multi_lstm_forward.1} parent=1 // pred_check
      _
    $region3: #{cnn_multi_lstm_forward.1} parent=1 // pred_check_branch
      %21 = sbr.rel (0) target = $region5
    $region4: #{cnn_multi_lstm_forward.1} parent=1 // pred_region
      _
    $region5: #{cnn_multi_lstm_forward.1} parent=1 // pred_fallthru
      _
    // Predicated region
    $region6: #{cnn_multi_lstm_forward.1} parent=1 // pred_check
      _
    $region7: #{cnn_multi_lstm_forward.1} parent=1 // pred_check_branch
      %23 = sbr.rel (0) target = $region9
    $region8: #{cnn_multi_lstm_forward.1} parent=1 // pred_region
      _
    $region9: #{cnn_multi_lstm_forward.1} parent=1 // pred_fallthru
      _
    // Predicated region
    $region10: #{cnn_multi_lstm_forward.1} parent=1 // pred_check
      _
    $region11: #{cnn_multi_lstm_forward.1} parent=1 // pred_check_branch
      %25 = sbr.rel (0) target = $region13
    $region12: #{cnn_multi_lstm_forward.1} parent=1 // pred_region
      %s27 = ssub.s32 16, 16
      %28 = vsyncadd [#allocation4], %s27
      %s30 = sshll.u32 [#allocation3], 4
      %s31 = int_to_ptr.vmem [resolvable:$true] %s30
      %33 = dma.hbm_to_vmem [thread:$0]  %s2, 16, %s31, [#allocation4]
    $region13: #{cnn_multi_lstm_forward.1} parent=1 // pred_fallthru
      _
    // Predicated region
    $region14: #{cnn_multi_lstm_forward.1} parent=1 // pred_check
      _
    $region15: #{cnn_multi_lstm_forward.1} parent=1 // pred_check_branch
      %35 = sbr.rel (0) target = $region17
    $region16: #{cnn_multi_lstm_forward.1} parent=1 // pred_region
      %s37 = ssub.s32 256, 256
      %38 = vsyncadd [#allocation6], %s37
      %s39 = sshll.u32 [#allocation5], 4
      %s40 = int_to_ptr.vmem [resolvable:$true] %s39
      %45 = dma.hbm_to_vmem [thread:$0]  %s3, 256, %s40, [#allocation6], 128, 128, 8
    $region17: #{cnn_multi_lstm_forward.1} parent=1 // pred_fallthru
      _
    // Predicated region
    $region18: #{cnn_multi_lstm_forward.1} parent=1 // pred_check
      _
    $region19: #{cnn_multi_lstm_forward.1} parent=1 // pred_check_branch
      %47 = sbr.rel (0) target = $region21
    $region20: #{cnn_multi_lstm_forward.1} parent=1 // pred_region
      %s49 = ssub.s32 1920, 1920
      %50 = vsyncadd [#allocation6], %s49
      %s51 = sshll.u32 [#allocation7], 4
      %s52 = int_to_ptr.vmem [resolvable:$true] %s51
      %57 = dma.hbm_to_vmem [thread:$0]  %s4, 1920, %s52, [#allocation6], 128, 128, 8
    $region21: #{cnn_multi_lstm_forward.1} parent=1 // pred_fallthru
      _
    // Predicated region
    $region22: #{cnn_multi_lstm_forward.1} parent=1 // pred_check
      _
    $region23: #{cnn_multi_lstm_forward.1} parent=1 // pred_check_branch
      %59 = sbr.rel (0) target = $region25
    $region24: #{cnn_multi_lstm_forward.1} parent=1 // pred_region
      %s61 = ssub.s32 80, 80
      %62 = vsyncadd [#allocation9], %s61
      %s63 = sshll.u32 [#allocation8], 4
      %s64 = int_to_ptr.vmem [resolvable:$true] %s63
      %69 = dma.hbm_to_vmem [thread:$0]  %s5, 80, %s64, [#allocation9], 16, 16, 1
    $region25: #{cnn_multi_lstm_forward.1} parent=1 // pred_fallthru
      _
    // Predicated region
    $region26: #{cnn_multi_lstm_forward.1} parent=1 // pred_check
      _
    $region27: #{cnn_multi_lstm_forward.1} parent=1 // pred_check_branch
      %71 = sbr.rel (0) target = $region29
    $region28: #{cnn_multi_lstm_forward.1} parent=1 // pred_region
      _
    $region29: #{cnn_multi_lstm_forward.1} parent=1 // pred_fallthru
      _
    // Predicated region
    $region30: #{cnn_multi_lstm_forward.1} parent=1 // pred_check
      _
    $region31: #{cnn_multi_lstm_forward.1} parent=1 // pred_check_branch
      %73 = sbr.rel (0) target = $region33
    $region32: #{cnn_multi_lstm_forward.1} parent=1 // pred_region
      _
    $region33: #{cnn_multi_lstm_forward.1} parent=1 // pred_fallthru
      _
    // Predicated region
    $region34: #{cnn_multi_lstm_forward.1} parent=1 // pred_check
      _
    $region35: #{cnn_multi_lstm_forward.1} parent=1 // pred_check_branch
      %75 = sbr.rel (0) target = $region37
    $region36: #{cnn_multi_lstm_forward.1} parent=1 // pred_region
      _
    $region37: #{cnn_multi_lstm_forward.1} parent=1 // pred_fallthru
      _
    // Predicated region
    $region38: #{cnn_multi_lstm_forward.1} parent=1 // pred_check
      _
    $region39: #{cnn_multi_lstm_forward.1} parent=1 // pred_check_branch
      %77 = sbr.rel (0) target = $region41
    $region40: #{cnn_multi_lstm_forward.1} parent=1 // pred_region
      _
    $region41: #{cnn_multi_lstm_forward.1} parent=1 // pred_fallthru
      _
    // Predicated region
    $region42: #{cnn_multi_lstm_forward.1} parent=1 // pred_check
      _
    $region43: #{cnn_multi_lstm_forward.1} parent=1 // pred_check_branch
      %79 = sbr.rel (0) target = $region45
    $region44: #{cnn_multi_lstm_forward.1} parent=1 // pred_region
      %80 = dma.done [#allocation4], 16
    $region45: #{cnn_multi_lstm_forward.1} parent=1 // pred_fallthru
      _
    // Predicated region
    $region46: #{cnn_multi_lstm_forward.1} parent=1 // pred_check
      _
    $region47: #{cnn_multi_lstm_forward.1} parent=1 // pred_check_branch
      %82 = sbr.rel (0) target = $region49
    $region48: #{cnn_multi_lstm_forward.1} parent=1 // pred_region
      %83 = dma.done [#allocation6], 256
    $region49: #{cnn_multi_lstm_forward.1} parent=1 // pred_fallthru
      _
    // Predicated region
    $region50: #{cnn_multi_lstm_forward.1} parent=1 // pred_check
      _
    $region51: #{cnn_multi_lstm_forward.1} parent=1 // pred_check_branch
      %85 = sbr.rel (0) target = $region53
    $region52: #{cnn_multi_lstm_forward.1} parent=1 // pred_region
      %86 = dma.done [#allocation6], 1920
    $region53: #{cnn_multi_lstm_forward.1} parent=1 // pred_fallthru
      _
    // Predicated region
    $region54: #{cnn_multi_lstm_forward.1} parent=1 // pred_check
      _
    $region55: #{cnn_multi_lstm_forward.1} parent=1 // pred_check_branch
      %88 = sbr.rel (0) target = $region57
    $region56: #{cnn_multi_lstm_forward.1} parent=1 // pred_region
      %89 = dma.done [#allocation9], 80
    $region57: #{cnn_multi_lstm_forward.1} parent=1 // pred_fallthru
      _
    %v90 = vld [vmem:[%s0] sm:$0xff]
    %v91 = vld [vmem:[%s0 + $0x8] sm:$0xff]
    %v92 = vld [vmem:[%s0 + $0x10] sm:$0xff]
    %v93 = vld [vmem:[%s0 + $0x18] sm:$0xff]
    %v94 = vld [vmem:[%s0 + $0x20] sm:$0xff]
    %v95 = vld [vmem:[%s1] sm:$0xff]
    %v96 = vld [vmem:[%s1 + $0x8] sm:$0x1f]
    %v97 = vld [vmem:[#allocation3] sm:$0x1]
    %v99 = vlaneseq
    %v100 = vshrl.u32 %v99, 7
    %v101 = vsub.s32 0, %v100
    %v102 = vrot.slane %v97, %v101
    %vm104 = vcmask 105472
    %v106 = vsel %vm104, %v90, 0
    %v109 = vsel %vm104, %v91, 0
    %v112 = vsel %vm104, %v92, 0
    %v115 = vsel %vm104, %v93, 0
    %v118 = vsel %vm104, %v94, 0
    %vm120 = vcmask 1044480
    %v122 = vsel %vm120, %v96, 0
    %124 = vmatprep.subr.mxu0 0.0
    %125 = vmatpush1.msra.mxu0 %v95
    %126 = vmatprep.subr.mxu0 0.0
    %127 = vmatpush1.msra.mxu0 %v122
    %128 = vmatprep.subr.mxu0 0.0
    %129 = vmatpush1.msra.mxu0 0.0
    %130 = vmatprep.subr.mxu0 0.0
    %131 = vmatpush1.msra.mxu0 0.0
    %132 = vmatprep.subr.mxu0 0.0
    %133 = vmatpush1.msra.mxu0 0.0
    %134 = vmatprep.subr.mxu0 0.0
    %135 = vmatpush1.msra.mxu0 0.0
    %136 = vmatprep.subr.mxu0 0.0
    %137 = vmatpush1.msra.mxu0 0.0
    %138 = vmatprep.subr.mxu0 0.0
    %139 = vmatpush1.msra.mxu0 0.0
    %140 = vmatprep.subr.mxu0 0.0
    %141 = vmatpush1.msra.mxu0 0.0
    %142 = vmatprep.subr.mxu0 0.0
    %143 = vmatpush1.msra.mxu0 0.0
    %144 = vmatprep.subr.mxu0 0.0
    %145 = vmatpush1.msra.mxu0 0.0
    %146 = vmatprep.subr.mxu0 0.0
    %147 = vmatpush1.msra.mxu0 0.0
    %148 = vmatprep.subr.mxu0 0.0
    %149 = vmatpush1.msra.mxu0 0.0
    %150 = vmatprep.subr.mxu0 0.0
    %151 = vmatpush1.msra.mxu0 0.0
    %152 = vmatprep.subr.mxu0 0.0
    %153 = vmatpush1.msra.mxu0 0.0
    %154 = vmatprep.subr.mxu0 0.0
    %155 = vmatpush1.msra.mxu0 0.0
    %156 = vmatprep.subr.mxu0 0.0
    %157 = vmatpush1.msra.mxu0 0.0
    %158 = vmatprep.subr.mxu0 0.0
    %159 = vmatpush1.msra.mxu0 0.0
    %160 = vmatprep.subr.mxu0 0.0
    %161 = vmatpush1.msra.mxu0 0.0
    %162 = vmatprep.subr.mxu0 0.0
    %163 = vmatpush1.msra.mxu0 0.0
    %164 = vmatprep.subr.mxu0 0.0
    %165 = vmatpush1.msra.mxu0 0.0
    %166 = vmatprep.subr.mxu0 0.0
    %167 = vmatpush1.msra.mxu0 0.0
    %168 = vmatprep.subr.mxu0 0.0
    %169 = vmatpush1.msra.mxu0 0.0
    %170 = vmatprep.subr.mxu0 0.0
    %171 = vmatpush1.msra.mxu0 0.0
    %172 = vmatprep.subr.mxu0 0.0
    %173 = vmatpush1.msra.mxu0 0.0
    %174 = vmatprep.subr.mxu0 0.0
    %175 = vmatpush1.msra.mxu0 0.0
    %176 = vmatprep.subr.mxu0 0.0
    %177 = vmatpush1.msra.mxu0 0.0
    %178 = vmatprep.subr.mxu0 0.0
    %179 = vmatpush1.msra.mxu0 0.0
    %180 = vmatprep.subr.mxu0 0.0
    %181 = vmatpush1.msra.mxu0 0.0
    %182 = vmatprep.subr.mxu0 0.0
    %183 = vmatpush1.msra.mxu0 0.0
    %184 = vmatprep.subr.mxu0 0.0
    %185 = vmatpush1.msra.mxu0 0.0
    %186 = vmatprep.subr.mxu0 0.0
    %187 = vmatpush1.msra.mxu0 0.0
    %188 = vmatprep.mubr.f32.mxu0 0.0
    %189 = vmatmul.mubr.f32.gmra.mrb[0].mxu0 %v106
    %v190 = vpop.f32.mrb[0].mxu0
    %v191 = vadd.f32 %v102, %v190
    %v192 = vpop.f32.mrb[0].mxu0
    %193 = vmatprep.mubr.f32.mxu0 0.0
    %194 = vmatmul.mubr.f32.gmra.mrb[0].mxu0 %v109
    %v195 = vpop.f32.mrb[0].mxu0
    %v196 = vadd.f32 %v102, %v195
    %v197 = vpop.f32.mrb[0].mxu0
    %198 = vmatprep.mubr.f32.mxu0 0.0
    %199 = vmatmul.mubr.f32.gmra.mrb[0].mxu0 %v112
    %v200 = vpop.f32.mrb[0].mxu0
    %v201 = vadd.f32 %v102, %v200
    %v202 = vpop.f32.mrb[0].mxu0
    %203 = vmatprep.mubr.f32.mxu0 0.0
    %204 = vmatmul.mubr.f32.gmra.mrb[0].mxu0 %v115
    %v205 = vpop.f32.mrb[0].mxu0
    %v206 = vadd.f32 %v102, %v205
    %v207 = vpop.f32.mrb[0].mxu0
    %208 = vmatprep.mubr.f32.mxu0 0.0
    %209 = vmatmul.mubr.f32.gmra.mrb[0].mxu0 %v118
    %v210 = vpop.f32.mrb[0].mxu0
    %v211 = vadd.f32 %v102, %v210
    %v212 = vpop.f32.mrb[0].mxu0
    %213 = vdwg.mxu0
    %v214 = vld [vmem:[#allocation5] sm:$0xff]
    %v215 = vld [vmem:[#allocation5 + $0x8] sm:$0xf]
    %v216 = vld [vmem:[#allocation8] sm:$0x1]
    %v218 = vlaneseq
    %v219 = vshrl.u32 %v218, 7
    %v220 = vsub.s32 0, %v219
    %v221 = vrot.slane %v216, %v220
    %s223 = scalar_lea.vmem [#allocation8], 1
    %v224 = vld [vmem:[%s223] sm:$0x1]
    %v226 = vlaneseq
    %v227 = vshrl.u32 %v226, 7
    %v228 = vsub.s32 0, %v227
    %v229 = vrot.slane %v224, %v228
    %s231 = scalar_lea.vmem [#allocation8], 2
    %v232 = vld [vmem:[%s231] sm:$0x1]
    %v234 = vlaneseq
    %v235 = vshrl.u32 %v234, 7
    %v236 = vsub.s32 0, %v235
    %v237 = vrot.slane %v232, %v236
    %s239 = scalar_lea.vmem [#allocation8], 3
    %v240 = vld [vmem:[%s239] sm:$0x1]
    %v242 = vlaneseq
    %v243 = vshrl.u32 %v242, 7
    %v244 = vsub.s32 0, %v243
    %v245 = vrot.slane %v240, %v244
    %s247 = scalar_lea.vmem [#allocation8], 4
    %v248 = vld [vmem:[%s247] sm:$0x1]
    %v250 = vlaneseq
    %v251 = vshrl.u32 %v250, 7
    %v252 = vsub.s32 0, %v251
    %v253 = vrot.slane %v248, %v252
    %v255 = vld [vmem:[%s6] sm:$0xff]
    %s256 = scalar_lea.vmem %s6, 8
    %v257 = vld [vmem:[%s256] sm:$0xff]
    %s258 = scalar_lea.vmem %s6, 16
    %v259 = vld [vmem:[%s258] sm:$0xff]
    %s260 = scalar_lea.vmem %s6, 24
    %v261 = vld [vmem:[%s260] sm:$0xff]
    %s262 = scalar_lea.vmem %s6, 32
    %v263 = vld [vmem:[%s262] sm:$0xff]
    %s264 = scalar_lea.vmem %s6, 40
    %v265 = vld [vmem:[%s264] sm:$0xff]
    %v266 = vld [vmem:[%s7] sm:$0xff]
    %s267 = scalar_lea.vmem %s7, 8
    %v268 = vld [vmem:[%s267] sm:$0xff]
    %s269 = scalar_lea.vmem %s7, 16
    %v270 = vld [vmem:[%s269] sm:$0xff]
    %s271 = scalar_lea.vmem %s7, 24
    %v272 = vld [vmem:[%s271] sm:$0xff]
    %s273 = scalar_lea.vmem %s7, 32
    %v274 = vld [vmem:[%s273] sm:$0xff]
    %s275 = scalar_lea.vmem %s7, 40
    %v276 = vld [vmem:[%s275] sm:$0xff]
    %vm277 = vcmask 97280
    %v279 = vsel %vm277, %v255, 0
    %vm281 = vcmask 1043456
    %v283 = vsel %vm281, %v215, 0
    %285 = vmatprep.subr.mxu0 0.0
    %286 = vmatpush1.msra.mxu0 %v214
    %287 = vmatprep.subr.mxu0 0.0
    %288 = vmatpush1.msra.mxu0 %v283
    %289 = vmatprep.subr.mxu0 0.0
    %290 = vmatpush1.msra.mxu0 0.0
    %291 = vmatprep.subr.mxu0 0.0
    %292 = vmatpush1.msra.mxu0 0.0
    %293 = vmatprep.subr.mxu0 0.0
    %294 = vmatpush1.msra.mxu0 0.0
    %295 = vmatprep.subr.mxu0 0.0
    %296 = vmatpush1.msra.mxu0 0.0
    %297 = vmatprep.subr.mxu0 0.0
    %298 = vmatpush1.msra.mxu0 0.0
    %299 = vmatprep.subr.mxu0 0.0
    %300 = vmatpush1.msra.mxu0 0.0
    %301 = vmatprep.subr.mxu0 0.0
    %302 = vmatpush1.msra.mxu0 0.0
    %303 = vmatprep.subr.mxu0 0.0
    %304 = vmatpush1.msra.mxu0 0.0
    %305 = vmatprep.subr.mxu0 0.0
    %306 = vmatpush1.msra.mxu0 0.0
    %307 = vmatprep.subr.mxu0 0.0
    %308 = vmatpush1.msra.mxu0 0.0
    %309 = vmatprep.subr.mxu0 0.0
    %310 = vmatpush1.msra.mxu0 0.0
    %311 = vmatprep.subr.mxu0 0.0
    %312 = vmatpush1.msra.mxu0 0.0
    %313 = vmatprep.subr.mxu0 0.0
    %314 = vmatpush1.msra.mxu0 0.0
    %315 = vmatprep.subr.mxu0 0.0
    %316 = vmatpush1.msra.mxu0 0.0
    %317 = vmatprep.subr.mxu0 0.0
    %318 = vmatpush1.msra.mxu0 0.0
    %319 = vmatprep.subr.mxu0 0.0
    %320 = vmatpush1.msra.mxu0 0.0
    %321 = vmatprep.subr.mxu0 0.0
    %322 = vmatpush1.msra.mxu0 0.0
    %323 = vmatprep.subr.mxu0 0.0
    %324 = vmatpush1.msra.mxu0 0.0
    %325 = vmatprep.subr.mxu0 0.0
    %326 = vmatpush1.msra.mxu0 0.0
    %327 = vmatprep.subr.mxu0 0.0
    %328 = vmatpush1.msra.mxu0 0.0
    %329 = vmatprep.subr.mxu0 0.0
    %330 = vmatpush1.msra.mxu0 0.0
    %331 = vmatprep.subr.mxu0 0.0
    %332 = vmatpush1.msra.mxu0 0.0
    %333 = vmatprep.subr.mxu0 0.0
    %334 = vmatpush1.msra.mxu0 0.0
    %335 = vmatprep.subr.mxu0 0.0
    %336 = vmatpush1.msra.mxu0 0.0
    %337 = vmatprep.subr.mxu0 0.0
    %338 = vmatpush1.msra.mxu0 0.0
    %339 = vmatprep.subr.mxu0 0.0
    %340 = vmatpush1.msra.mxu0 0.0
    %341 = vmatprep.subr.mxu0 0.0
    %342 = vmatpush1.msra.mxu0 0.0
    %343 = vmatprep.subr.mxu0 0.0
    %344 = vmatpush1.msra.mxu0 0.0
    %345 = vmatprep.subr.mxu0 0.0
    %346 = vmatpush1.msra.mxu0 0.0
    %347 = vmatprep.subr.mxu0 0.0
    %348 = vmatpush1.msra.mxu0 0.0
    %349 = vmatprep.mubr.f32.mxu0 0.0
    %350 = vmatmul.mubr.f32.gmra.mrb[0].mxu0 %v279
    %v351 = vpop.f32.mrb[0].mxu0
    %v352 = vadd.f32 0.0, %v351
    %v353 = vpop.f32.mrb[0].mxu0
    %354 = vdwg.mxu0
    %v355 = vadd.f32 %v191, %v352
    %v356 = vxor.u32 %v355, 2147483648
    %v357 = vmul.f32 %v356, 1.442695
    %v358 = vpow.pop %v357
    %v359 = vadd.f32 %v358, 1.0
    %v360 = vrcp.pop %v359
    %v361 = vmul.f32 1.0, %v360
    %v362 = vtanh.pop %v355
    %364 = vrot.lane.b32.xlu0 %v266, 12
    %v365 = vpop.permute.xlu0 %364
    %v367 = vmul.f32 %v361, %v365
    %369 = vrot.lane.b32.xlu0 %v362, 92
    %v370 = vpop.permute.xlu0 %369
    %v372 = vmul.f32 %v361, %v370
    %374 = vrot.lane.b32.xlu0 %v372, 12
    %v375 = vpop.permute.xlu0 %374
    %v377 = vadd.f32 %v367, %v375
    %v378 = vtanh.pop %v377
    %380 = vrot.lane.b32.xlu0 %v378, 12
    %v381 = vpop.permute.xlu0 %380
    %v383 = vmul.f32 %v361, %v381
    %385 = vrot.lane.b32.xlu0 %v383, 104
    %v386 = vpop.permute.xlu0 %385
    %389 = vrot.lane.b32.xlu0 %v257, 12
    %v390 = vpop.permute.xlu0 %389
    %v392 = vsel %vm277, %v386, %v390
    %v393 = vld [vmem:[#allocation7] sm:$0xff]
    %v394 = vld [vmem:[#allocation7 + $0x8] sm:$0xff]
    %v395 = vld [vmem:[#allocation7 + $0x10] sm:$0xff]
    %vm396 = vcmask 195584
    %v398 = vsel %vm396, %v392, 0
    %400 = vmatprep.subr.mxu0 0.0
    %401 = vmatpush1.msra.mxu0 %v393
    %402 = vmatprep.subr.mxu0 0.0
    %403 = vmatpush1.msra.mxu0 %v394
    %404 = vmatprep.subr.mxu0 0.0
    %405 = vmatpush1.msra.mxu0 %v395
    %406 = vmatprep.subr.mxu0 0.0
    %407 = vmatpush1.msra.mxu0 0.0
    %408 = vmatprep.subr.mxu0 0.0
    %409 = vmatpush1.msra.mxu0 0.0
    %410 = vmatprep.subr.mxu0 0.0
    %411 = vmatpush1.msra.mxu0 0.0
    %412 = vmatprep.subr.mxu0 0.0
    %413 = vmatpush1.msra.mxu0 0.0
    %414 = vmatprep.subr.mxu0 0.0
    %415 = vmatpush1.msra.mxu0 0.0
    %416 = vmatprep.subr.mxu0 0.0
    %417 = vmatpush1.msra.mxu0 0.0
    %418 = vmatprep.subr.mxu0 0.0
    %419 = vmatpush1.msra.mxu0 0.0
    %420 = vmatprep.subr.mxu0 0.0
    %421 = vmatpush1.msra.mxu0 0.0
    %422 = vmatprep.subr.mxu0 0.0
    %423 = vmatpush1.msra.mxu0 0.0
    %424 = vmatprep.subr.mxu0 0.0
    %425 = vmatpush1.msra.mxu0 0.0
    %426 = vmatprep.subr.mxu0 0.0
    %427 = vmatpush1.msra.mxu0 0.0
    %428 = vmatprep.subr.mxu0 0.0
    %429 = vmatpush1.msra.mxu0 0.0
    %430 = vmatprep.subr.mxu0 0.0
    %431 = vmatpush1.msra.mxu0 0.0
    %432 = vmatprep.subr.mxu0 0.0
    %433 = vmatpush1.msra.mxu0 0.0
    %434 = vmatprep.subr.mxu0 0.0
    %435 = vmatpush1.msra.mxu0 0.0
    %436 = vmatprep.subr.mxu0 0.0
    %437 = vmatpush1.msra.mxu0 0.0
    %438 = vmatprep.subr.mxu0 0.0
    %439 = vmatpush1.msra.mxu0 0.0
    %440 = vmatprep.subr.mxu0 0.0
    %441 = vmatpush1.msra.mxu0 0.0
    %442 = vmatprep.subr.mxu0 0.0
    %443 = vmatpush1.msra.mxu0 0.0
    %444 = vmatprep.subr.mxu0 0.0
    %445 = vmatpush1.msra.mxu0 0.0
    %446 = vmatprep.subr.mxu0 0.0
    %447 = vmatpush1.msra.mxu0 0.0
    %448 = vmatprep.subr.mxu0 0.0
    %449 = vmatpush1.msra.mxu0 0.0
    %450 = vmatprep.subr.mxu0 0.0
    %451 = vmatpush1.msra.mxu0 0.0
    %452 = vmatprep.subr.mxu0 0.0
    %453 = vmatpush1.msra.mxu0 0.0
    %454 = vmatprep.subr.mxu0 0.0
    %455 = vmatpush1.msra.mxu0 0.0
    %456 = vmatprep.subr.mxu0 0.0
    %457 = vmatpush1.msra.mxu0 0.0
    %458 = vmatprep.subr.mxu0 0.0
    %459 = vmatpush1.msra.mxu0 0.0
    %460 = vmatprep.subr.mxu0 0.0
    %461 = vmatpush1.msra.mxu0 0.0
    %462 = vmatprep.subr.mxu0 0.0
    %463 = vmatpush1.msra.mxu0 0.0
    %464 = vmatprep.mubr.f32.mxu0 0.0
    %465 = vmatmul.mubr.f32.gmra.mrb[0].mxu0 %v398
    %v466 = vpop.f32.mrb[0].mxu0
    %v467 = vadd.f32 %v221, %v466
    %v468 = vpop.f32.mrb[0].mxu0
    %469 = vdwg.mxu0
    %v470 = vxor.u32 %v467, 2147483648
    %v471 = vmul.f32 %v470, 1.442695
    %v472 = vpow.pop %v471
    %v473 = vadd.f32 %v472, 1.0
    %v474 = vrcp.pop %v473
    %v475 = vmul.f32 1.0, %v474
    %v476 = vtanh.pop %v467
    %478 = vrot.lane.b32.xlu0 %v268, 12
    %v479 = vpop.permute.xlu0 %478
    %v481 = vmul.f32 %v475, %v479
    %483 = vrot.lane.b32.xlu0 %v476, 92
    %v484 = vpop.permute.xlu0 %483
    %v486 = vmul.f32 %v475, %v484
    %488 = vrot.lane.b32.xlu0 %v486, 12
    %v489 = vpop.permute.xlu0 %488
    %v491 = vadd.f32 %v481, %v489
    %v492 = vtanh.pop %v491
    %494 = vrot.lane.b32.xlu0 %v492, 12
    %v495 = vpop.permute.xlu0 %494
    %v497 = vmul.f32 %v475, %v495
    %499 = vrot.lane.b32.xlu0 %v497, 104
    %v500 = vpop.permute.xlu0 %499
    %503 = vrot.lane.b32.xlu0 %v259, 12
    %v504 = vpop.permute.xlu0 %503
    %v506 = vsel %vm277, %v500, %v504
    %s507 = scalar_lea.vmem [#allocation7], 24
    %v508 = vld [vmem:[%s507] sm:$0xff]
    %v509 = vld [vmem:[%s507 + $0x8] sm:$0xff]
    %v510 = vld [vmem:[%s507 + $0x10] sm:$0xff]
    %v512 = vsel %vm396, %v506, 0
    %514 = vmatprep.subr.mxu0 0.0
    %515 = vmatpush1.msra.mxu0 %v508
    %516 = vmatprep.subr.mxu0 0.0
    %517 = vmatpush1.msra.mxu0 %v509
    %518 = vmatprep.subr.mxu0 0.0
    %519 = vmatpush1.msra.mxu0 %v510
    %520 = vmatprep.subr.mxu0 0.0
    %521 = vmatpush1.msra.mxu0 0.0
    %522 = vmatprep.subr.mxu0 0.0
    %523 = vmatpush1.msra.mxu0 0.0
    %524 = vmatprep.subr.mxu0 0.0
    %525 = vmatpush1.msra.mxu0 0.0
    %526 = vmatprep.subr.mxu0 0.0
    %527 = vmatpush1.msra.mxu0 0.0
    %528 = vmatprep.subr.mxu0 0.0
    %529 = vmatpush1.msra.mxu0 0.0
    %530 = vmatprep.subr.mxu0 0.0
    %531 = vmatpush1.msra.mxu0 0.0
    %532 = vmatprep.subr.mxu0 0.0
    %533 = vmatpush1.msra.mxu0 0.0
    %534 = vmatprep.subr.mxu0 0.0
    %535 = vmatpush1.msra.mxu0 0.0
    %536 = vmatprep.subr.mxu0 0.0
    %537 = vmatpush1.msra.mxu0 0.0
    %538 = vmatprep.subr.mxu0 0.0
    %539 = vmatpush1.msra.mxu0 0.0
    %540 = vmatprep.subr.mxu0 0.0
    %541 = vmatpush1.msra.mxu0 0.0
    %542 = vmatprep.subr.mxu0 0.0
    %543 = vmatpush1.msra.mxu0 0.0
    %544 = vmatprep.subr.mxu0 0.0
    %545 = vmatpush1.msra.mxu0 0.0
    %546 = vmatprep.subr.mxu0 0.0
    %547 = vmatpush1.msra.mxu0 0.0
    %548 = vmatprep.subr.mxu0 0.0
    %549 = vmatpush1.msra.mxu0 0.0
    %550 = vmatprep.subr.mxu0 0.0
    %551 = vmatpush1.msra.mxu0 0.0
    %552 = vmatprep.subr.mxu0 0.0
    %553 = vmatpush1.msra.mxu0 0.0
    %554 = vmatprep.subr.mxu0 0.0
    %555 = vmatpush1.msra.mxu0 0.0
    %556 = vmatprep.subr.mxu0 0.0
    %557 = vmatpush1.msra.mxu0 0.0
    %558 = vmatprep.subr.mxu0 0.0
    %559 = vmatpush1.msra.mxu0 0.0
    %560 = vmatprep.subr.mxu0 0.0
    %561 = vmatpush1.msra.mxu0 0.0
    %562 = vmatprep.subr.mxu0 0.0
    %563 = vmatpush1.msra.mxu0 0.0
    %564 = vmatprep.subr.mxu0 0.0
    %565 = vmatpush1.msra.mxu0 0.0
    %566 = vmatprep.subr.mxu0 0.0
    %567 = vmatpush1.msra.mxu0 0.0
    %568 = vmatprep.subr.mxu0 0.0
    %569 = vmatpush1.msra.mxu0 0.0
    %570 = vmatprep.subr.mxu0 0.0
    %571 = vmatpush1.msra.mxu0 0.0
    %572 = vmatprep.subr.mxu0 0.0
    %573 = vmatpush1.msra.mxu0 0.0
    %574 = vmatprep.subr.mxu0 0.0
    %575 = vmatpush1.msra.mxu0 0.0
    %576 = vmatprep.subr.mxu0 0.0
    %577 = vmatpush1.msra.mxu0 0.0
    %578 = vmatprep.mubr.f32.mxu0 0.0
    %579 = vmatmul.mubr.f32.gmra.mrb[0].mxu0 %v512
    %v580 = vpop.f32.mrb[0].mxu0
    %v581 = vadd.f32 %v229, %v580
    %v582 = vpop.f32.mrb[0].mxu0
    %583 = vdwg.mxu0
    %v584 = vxor.u32 %v581, 2147483648
    %v585 = vmul.f32 %v584, 1.442695
    %v586 = vpow.pop %v585
    %v587 = vadd.f32 %v586, 1.0
    %v588 = vrcp.pop %v587
    %v589 = vmul.f32 1.0, %v588
    %v590 = vtanh.pop %v581
    %592 = vrot.lane.b32.xlu0 %v270, 12
    %v593 = vpop.permute.xlu0 %592
    %v595 = vmul.f32 %v589, %v593
    %597 = vrot.lane.b32.xlu0 %v590, 92
    %v598 = vpop.permute.xlu0 %597
    %v600 = vmul.f32 %v589, %v598
    %602 = vrot.lane.b32.xlu0 %v600, 12
    %v603 = vpop.permute.xlu0 %602
    %v605 = vadd.f32 %v595, %v603
    %v606 = vtanh.pop %v605
    %608 = vrot.lane.b32.xlu0 %v606, 12
    %v609 = vpop.permute.xlu0 %608
    %v611 = vmul.f32 %v589, %v609
    %613 = vrot.lane.b32.xlu0 %v611, 104
    %v614 = vpop.permute.xlu0 %613
    %617 = vrot.lane.b32.xlu0 %v261, 12
    %v618 = vpop.permute.xlu0 %617
    %v620 = vsel %vm277, %v614, %v618
    %s621 = scalar_lea.vmem [#allocation7], 48
    %v622 = vld [vmem:[%s621] sm:$0xff]
    %v623 = vld [vmem:[%s621 + $0x8] sm:$0xff]
    %v624 = vld [vmem:[%s621 + $0x10] sm:$0xff]
    %v626 = vsel %vm396, %v620, 0
    %628 = vmatprep.subr.mxu0 0.0
    %629 = vmatpush1.msra.mxu0 %v622
    %630 = vmatprep.subr.mxu0 0.0
    %631 = vmatpush1.msra.mxu0 %v623
    %632 = vmatprep.subr.mxu0 0.0
    %633 = vmatpush1.msra.mxu0 %v624
    %634 = vmatprep.subr.mxu0 0.0
    %635 = vmatpush1.msra.mxu0 0.0
    %636 = vmatprep.subr.mxu0 0.0
    %637 = vmatpush1.msra.mxu0 0.0
    %638 = vmatprep.subr.mxu0 0.0
    %639 = vmatpush1.msra.mxu0 0.0
    %640 = vmatprep.subr.mxu0 0.0
    %641 = vmatpush1.msra.mxu0 0.0
    %642 = vmatprep.subr.mxu0 0.0
    %643 = vmatpush1.msra.mxu0 0.0
    %644 = vmatprep.subr.mxu0 0.0
    %645 = vmatpush1.msra.mxu0 0.0
    %646 = vmatprep.subr.mxu0 0.0
    %647 = vmatpush1.msra.mxu0 0.0
    %648 = vmatprep.subr.mxu0 0.0
    %649 = vmatpush1.msra.mxu0 0.0
    %650 = vmatprep.subr.mxu0 0.0
    %651 = vmatpush1.msra.mxu0 0.0
    %652 = vmatprep.subr.mxu0 0.0
    %653 = vmatpush1.msra.mxu0 0.0
    %654 = vmatprep.subr.mxu0 0.0
    %655 = vmatpush1.msra.mxu0 0.0
    %656 = vmatprep.subr.mxu0 0.0
    %657 = vmatpush1.msra.mxu0 0.0
    %658 = vmatprep.subr.mxu0 0.0
    %659 = vmatpush1.msra.mxu0 0.0
    %660 = vmatprep.subr.mxu0 0.0
    %661 = vmatpush1.msra.mxu0 0.0
    %662 = vmatprep.subr.mxu0 0.0
    %663 = vmatpush1.msra.mxu0 0.0
    %664 = vmatprep.subr.mxu0 0.0
    %665 = vmatpush1.msra.mxu0 0.0
    %666 = vmatprep.subr.mxu0 0.0
    %667 = vmatpush1.msra.mxu0 0.0
    %668 = vmatprep.subr.mxu0 0.0
    %669 = vmatpush1.msra.mxu0 0.0
    %670 = vmatprep.subr.mxu0 0.0
    %671 = vmatpush1.msra.mxu0 0.0
    %672 = vmatprep.subr.mxu0 0.0
    %673 = vmatpush1.msra.mxu0 0.0
    %674 = vmatprep.subr.mxu0 0.0
    %675 = vmatpush1.msra.mxu0 0.0
    %676 = vmatprep.subr.mxu0 0.0
    %677 = vmatpush1.msra.mxu0 0.0
    %678 = vmatprep.subr.mxu0 0.0
    %679 = vmatpush1.msra.mxu0 0.0
    %680 = vmatprep.subr.mxu0 0.0
    %681 = vmatpush1.msra.mxu0 0.0
    %682 = vmatprep.subr.mxu0 0.0
    %683 = vmatpush1.msra.mxu0 0.0
    %684 = vmatprep.subr.mxu0 0.0
    %685 = vmatpush1.msra.mxu0 0.0
    %686 = vmatprep.subr.mxu0 0.0
    %687 = vmatpush1.msra.mxu0 0.0
    %688 = vmatprep.subr.mxu0 0.0
    %689 = vmatpush1.msra.mxu0 0.0
    %690 = vmatprep.subr.mxu0 0.0
    %691 = vmatpush1.msra.mxu0 0.0
    %692 = vmatprep.mubr.f32.mxu0 0.0
    %693 = vmatmul.mubr.f32.gmra.mrb[0].mxu0 %v626
    %v694 = vpop.f32.mrb[0].mxu0
    %v695 = vadd.f32 %v237, %v694
    %v696 = vpop.f32.mrb[0].mxu0
    %697 = vdwg.mxu0
    %v698 = vxor.u32 %v695, 2147483648
    %v699 = vmul.f32 %v698, 1.442695
    %v700 = vpow.pop %v699
    %v701 = vadd.f32 %v700, 1.0
    %v702 = vrcp.pop %v701
    %v703 = vmul.f32 1.0, %v702
    %v704 = vtanh.pop %v695
    %706 = vrot.lane.b32.xlu0 %v272, 12
    %v707 = vpop.permute.xlu0 %706
    %v709 = vmul.f32 %v703, %v707
    %711 = vrot.lane.b32.xlu0 %v704, 92
    %v712 = vpop.permute.xlu0 %711
    %v714 = vmul.f32 %v703, %v712
    %716 = vrot.lane.b32.xlu0 %v714, 12
    %v717 = vpop.permute.xlu0 %716
    %v719 = vadd.f32 %v709, %v717
    %v720 = vtanh.pop %v719
    %722 = vrot.lane.b32.xlu0 %v720, 12
    %v723 = vpop.permute.xlu0 %722
    %v725 = vmul.f32 %v703, %v723
    %727 = vrot.lane.b32.xlu0 %v725, 104
    %v728 = vpop.permute.xlu0 %727
    %731 = vrot.lane.b32.xlu0 %v263, 12
    %v732 = vpop.permute.xlu0 %731
    %v734 = vsel %vm277, %v728, %v732
    %s735 = scalar_lea.vmem [#allocation7], 72
    %v736 = vld [vmem:[%s735] sm:$0xff]
    %v737 = vld [vmem:[%s735 + $0x8] sm:$0xff]
    %v738 = vld [vmem:[%s735 + $0x10] sm:$0xff]
    %v740 = vsel %vm396, %v734, 0
    %742 = vmatprep.subr.mxu0 0.0
    %743 = vmatpush1.msra.mxu0 %v736
    %744 = vmatprep.subr.mxu0 0.0
    %745 = vmatpush1.msra.mxu0 %v737
    %746 = vmatprep.subr.mxu0 0.0
    %747 = vmatpush1.msra.mxu0 %v738
    %748 = vmatprep.subr.mxu0 0.0
    %749 = vmatpush1.msra.mxu0 0.0
    %750 = vmatprep.subr.mxu0 0.0
    %751 = vmatpush1.msra.mxu0 0.0
    %752 = vmatprep.subr.mxu0 0.0
    %753 = vmatpush1.msra.mxu0 0.0
    %754 = vmatprep.subr.mxu0 0.0
    %755 = vmatpush1.msra.mxu0 0.0
    %756 = vmatprep.subr.mxu0 0.0
    %757 = vmatpush1.msra.mxu0 0.0
    %758 = vmatprep.subr.mxu0 0.0
    %759 = vmatpush1.msra.mxu0 0.0
    %760 = vmatprep.subr.mxu0 0.0
    %761 = vmatpush1.msra.mxu0 0.0
    %762 = vmatprep.subr.mxu0 0.0
    %763 = vmatpush1.msra.mxu0 0.0
    %764 = vmatprep.subr.mxu0 0.0
    %765 = vmatpush1.msra.mxu0 0.0
    %766 = vmatprep.subr.mxu0 0.0
    %767 = vmatpush1.msra.mxu0 0.0
    %768 = vmatprep.subr.mxu0 0.0
    %769 = vmatpush1.msra.mxu0 0.0
    %770 = vmatprep.subr.mxu0 0.0
    %771 = vmatpush1.msra.mxu0 0.0
    %772 = vmatprep.subr.mxu0 0.0
    %773 = vmatpush1.msra.mxu0 0.0
    %774 = vmatprep.subr.mxu0 0.0
    %775 = vmatpush1.msra.mxu0 0.0
    %776 = vmatprep.subr.mxu0 0.0
    %777 = vmatpush1.msra.mxu0 0.0
    %778 = vmatprep.subr.mxu0 0.0
    %779 = vmatpush1.msra.mxu0 0.0
    %780 = vmatprep.subr.mxu0 0.0
    %781 = vmatpush1.msra.mxu0 0.0
    %782 = vmatprep.subr.mxu0 0.0
    %783 = vmatpush1.msra.mxu0 0.0
    %784 = vmatprep.subr.mxu0 0.0
    %785 = vmatpush1.msra.mxu0 0.0
    %786 = vmatprep.subr.mxu0 0.0
    %787 = vmatpush1.msra.mxu0 0.0
    %788 = vmatprep.subr.mxu0 0.0
    %789 = vmatpush1.msra.mxu0 0.0
    %790 = vmatprep.subr.mxu0 0.0
    %791 = vmatpush1.msra.mxu0 0.0
    %792 = vmatprep.subr.mxu0 0.0
    %793 = vmatpush1.msra.mxu0 0.0
    %794 = vmatprep.subr.mxu0 0.0
    %795 = vmatpush1.msra.mxu0 0.0
    %796 = vmatprep.subr.mxu0 0.0
    %797 = vmatpush1.msra.mxu0 0.0
    %798 = vmatprep.subr.mxu0 0.0
    %799 = vmatpush1.msra.mxu0 0.0
    %800 = vmatprep.subr.mxu0 0.0
    %801 = vmatpush1.msra.mxu0 0.0
    %802 = vmatprep.subr.mxu0 0.0
    %803 = vmatpush1.msra.mxu0 0.0
    %804 = vmatprep.subr.mxu0 0.0
    %805 = vmatpush1.msra.mxu0 0.0
    %806 = vmatprep.mubr.f32.mxu0 0.0
    %807 = vmatmul.mubr.f32.gmra.mrb[0].mxu0 %v740
    %v808 = vpop.f32.mrb[0].mxu0
    %v809 = vadd.f32 %v245, %v808
    %v810 = vpop.f32.mrb[0].mxu0
    %811 = vdwg.mxu0
    %v812 = vxor.u32 %v809, 2147483648
    %v813 = vmul.f32 %v812, 1.442695
    %v814 = vpow.pop %v813
    %v815 = vadd.f32 %v814, 1.0
    %v816 = vrcp.pop %v815
    %v817 = vmul.f32 1.0, %v816
    %v818 = vtanh.pop %v809
    %820 = vrot.lane.b32.xlu0 %v274, 12
    %v821 = vpop.permute.xlu0 %820
    %v823 = vmul.f32 %v817, %v821
    %825 = vrot.lane.b32.xlu0 %v818, 92
    %v826 = vpop.permute.xlu0 %825
    %v828 = vmul.f32 %v817, %v826
    %830 = vrot.lane.b32.xlu0 %v828, 12
    %v831 = vpop.permute.xlu0 %830
    %v833 = vadd.f32 %v823, %v831
    %v834 = vtanh.pop %v833
    %836 = vrot.lane.b32.xlu0 %v834, 12
    %v837 = vpop.permute.xlu0 %836
    %v839 = vmul.f32 %v817, %v837
    %841 = vrot.lane.b32.xlu0 %v839, 104
    %v842 = vpop.permute.xlu0 %841
    %845 = vrot.lane.b32.xlu0 %v265, 12
    %v846 = vpop.permute.xlu0 %845
    %v848 = vsel %vm277, %v842, %v846
    %s849 = scalar_lea.vmem [#allocation7], 96
    %v850 = vld [vmem:[%s849] sm:$0xff]
    %v851 = vld [vmem:[%s849 + $0x8] sm:$0xff]
    %v852 = vld [vmem:[%s849 + $0x10] sm:$0xff]
    %v854 = vsel %vm396, %v848, 0
    %856 = vmatprep.subr.mxu0 0.0
    %857 = vmatpush1.msra.mxu0 %v850
    %858 = vmatprep.subr.mxu0 0.0
    %859 = vmatpush1.msra.mxu0 %v851
    %860 = vmatprep.subr.mxu0 0.0
    %861 = vmatpush1.msra.mxu0 %v852
    %862 = vmatprep.subr.mxu0 0.0
    %863 = vmatpush1.msra.mxu0 0.0
    %864 = vmatprep.subr.mxu0 0.0
    %865 = vmatpush1.msra.mxu0 0.0
    %866 = vmatprep.subr.mxu0 0.0
    %867 = vmatpush1.msra.mxu0 0.0
    %868 = vmatprep.subr.mxu0 0.0
    %869 = vmatpush1.msra.mxu0 0.0
    %870 = vmatprep.subr.mxu0 0.0
    %871 = vmatpush1.msra.mxu0 0.0
    %872 = vmatprep.subr.mxu0 0.0
    %873 = vmatpush1.msra.mxu0 0.0
    %874 = vmatprep.subr.mxu0 0.0
    %875 = vmatpush1.msra.mxu0 0.0
    %876 = vmatprep.subr.mxu0 0.0
    %877 = vmatpush1.msra.mxu0 0.0
    %878 = vmatprep.subr.mxu0 0.0
    %879 = vmatpush1.msra.mxu0 0.0
    %880 = vmatprep.subr.mxu0 0.0
    %881 = vmatpush1.msra.mxu0 0.0
    %882 = vmatprep.subr.mxu0 0.0
    %883 = vmatpush1.msra.mxu0 0.0
    %884 = vmatprep.subr.mxu0 0.0
    %885 = vmatpush1.msra.mxu0 0.0
    %886 = vmatprep.subr.mxu0 0.0
    %887 = vmatpush1.msra.mxu0 0.0
    %888 = vmatprep.subr.mxu0 0.0
    %889 = vmatpush1.msra.mxu0 0.0
    %890 = vmatprep.subr.mxu0 0.0
    %891 = vmatpush1.msra.mxu0 0.0
    %892 = vmatprep.subr.mxu0 0.0
    %893 = vmatpush1.msra.mxu0 0.0
    %894 = vmatprep.subr.mxu0 0.0
    %895 = vmatpush1.msra.mxu0 0.0
    %896 = vmatprep.subr.mxu0 0.0
    %897 = vmatpush1.msra.mxu0 0.0
    %898 = vmatprep.subr.mxu0 0.0
    %899 = vmatpush1.msra.mxu0 0.0
    %900 = vmatprep.subr.mxu0 0.0
    %901 = vmatpush1.msra.mxu0 0.0
    %902 = vmatprep.subr.mxu0 0.0
    %903 = vmatpush1.msra.mxu0 0.0
    %904 = vmatprep.subr.mxu0 0.0
    %905 = vmatpush1.msra.mxu0 0.0
    %906 = vmatprep.subr.mxu0 0.0
    %907 = vmatpush1.msra.mxu0 0.0
    %908 = vmatprep.subr.mxu0 0.0
    %909 = vmatpush1.msra.mxu0 0.0
    %910 = vmatprep.subr.mxu0 0.0
    %911 = vmatpush1.msra.mxu0 0.0
    %912 = vmatprep.subr.mxu0 0.0
    %913 = vmatpush1.msra.mxu0 0.0
    %914 = vmatprep.subr.mxu0 0.0
    %915 = vmatpush1.msra.mxu0 0.0
    %916 = vmatprep.subr.mxu0 0.0
    %917 = vmatpush1.msra.mxu0 0.0
    %918 = vmatprep.subr.mxu0 0.0
    %919 = vmatpush1.msra.mxu0 0.0
    %920 = vmatprep.mubr.f32.mxu0 0.0
    %921 = vmatmul.mubr.f32.gmra.mrb[0].mxu0 %v854
    %v922 = vpop.f32.mrb[0].mxu0
    %v923 = vadd.f32 %v253, %v922
    %v924 = vpop.f32.mrb[0].mxu0
    %925 = vdwg.mxu0
    %v926 = vxor.u32 %v923, 2147483648
    %v927 = vmul.f32 %v926, 1.442695
    %v928 = vpow.pop %v927
    %v929 = vadd.f32 %v928, 1.0
    %v930 = vrcp.pop %v929
    %v931 = vmul.f32 1.0, %v930
    %v932 = vtanh.pop %v923
    %934 = vrot.lane.b32.xlu0 %v276, 12
    %v935 = vpop.permute.xlu0 %934
    %v937 = vmul.f32 %v931, %v935
    %939 = vrot.lane.b32.xlu0 %v932, 92
    %v940 = vpop.permute.xlu0 %939
    %v942 = vmul.f32 %v931, %v940
    %944 = vrot.lane.b32.xlu0 %v942, 12
    %v945 = vpop.permute.xlu0 %944
    %v947 = vadd.f32 %v937, %v945
    %v948 = vtanh.pop %v947
    %950 = vrot.lane.b32.xlu0 %v948, 12
    %v951 = vpop.permute.xlu0 %950
    %v953 = vmul.f32 %v931, %v951
    %v954 = vsel %vm277, %v386, 0
    %956 = vmatprep.subr.mxu0 0.0
    %957 = vmatpush1.msra.mxu0 %v214
    %958 = vmatprep.subr.mxu0 0.0
    %959 = vmatpush1.msra.mxu0 %v283
    %960 = vmatprep.subr.mxu0 0.0
    %961 = vmatpush1.msra.mxu0 0.0
    %962 = vmatprep.subr.mxu0 0.0
    %963 = vmatpush1.msra.mxu0 0.0
    %964 = vmatprep.subr.mxu0 0.0
    %965 = vmatpush1.msra.mxu0 0.0
    %966 = vmatprep.subr.mxu0 0.0
    %967 = vmatpush1.msra.mxu0 0.0
    %968 = vmatprep.subr.mxu0 0.0
    %969 = vmatpush1.msra.mxu0 0.0
    %970 = vmatprep.subr.mxu0 0.0
    %971 = vmatpush1.msra.mxu0 0.0
    %972 = vmatprep.subr.mxu0 0.0
    %973 = vmatpush1.msra.mxu0 0.0
    %974 = vmatprep.subr.mxu0 0.0
    %975 = vmatpush1.msra.mxu0 0.0
    %976 = vmatprep.subr.mxu0 0.0
    %977 = vmatpush1.msra.mxu0 0.0
    %978 = vmatprep.subr.mxu0 0.0
    %979 = vmatpush1.msra.mxu0 0.0
    %980 = vmatprep.subr.mxu0 0.0
    %981 = vmatpush1.msra.mxu0 0.0
    %982 = vmatprep.subr.mxu0 0.0
    %983 = vmatpush1.msra.mxu0 0.0
    %984 = vmatprep.subr.mxu0 0.0
    %985 = vmatpush1.msra.mxu0 0.0
    %986 = vmatprep.subr.mxu0 0.0
    %987 = vmatpush1.msra.mxu0 0.0
    %988 = vmatprep.subr.mxu0 0.0
    %989 = vmatpush1.msra.mxu0 0.0
    %990 = vmatprep.subr.mxu0 0.0
    %991 = vmatpush1.msra.mxu0 0.0
    %992 = vmatprep.subr.mxu0 0.0
    %993 = vmatpush1.msra.mxu0 0.0
    %994 = vmatprep.subr.mxu0 0.0
    %995 = vmatpush1.msra.mxu0 0.0
    %996 = vmatprep.subr.mxu0 0.0
    %997 = vmatpush1.msra.mxu0 0.0
    %998 = vmatprep.subr.mxu0 0.0
    %999 = vmatpush1.msra.mxu0 0.0
    %1000 = vmatprep.subr.mxu0 0.0
    %1001 = vmatpush1.msra.mxu0 0.0
    %1002 = vmatprep.subr.mxu0 0.0
    %1003 = vmatpush1.msra.mxu0 0.0
    %1004 = vmatprep.subr.mxu0 0.0
    %1005 = vmatpush1.msra.mxu0 0.0
    %1006 = vmatprep.subr.mxu0 0.0
    %1007 = vmatpush1.msra.mxu0 0.0
    %1008 = vmatprep.subr.mxu0 0.0
    %1009 = vmatpush1.msra.mxu0 0.0
    %1010 = vmatprep.subr.mxu0 0.0
    %1011 = vmatpush1.msra.mxu0 0.0
    %1012 = vmatprep.subr.mxu0 0.0
    %1013 = vmatpush1.msra.mxu0 0.0
    %1014 = vmatprep.subr.mxu0 0.0
    %1015 = vmatpush1.msra.mxu0 0.0
    %1016 = vmatprep.subr.mxu0 0.0
    %1017 = vmatpush1.msra.mxu0 0.0
    %1018 = vmatprep.subr.mxu0 0.0
    %1019 = vmatpush1.msra.mxu0 0.0
    %1020 = vmatprep.mubr.f32.mxu0 0.0
    %1021 = vmatmul.mubr.f32.gmra.mrb[0].mxu0 %v954
    %v1022 = vpop.f32.mrb[0].mxu0
    %v1023 = vadd.f32 0.0, %v1022
    %v1024 = vpop.f32.mrb[0].mxu0
    %1025 = vdwg.mxu0
    %v1026 = vadd.f32 %v196, %v1023
    %v1027 = vxor.u32 %v1026, 2147483648
    %v1028 = vmul.f32 %v1027, 1.442695
    %v1029 = vpow.pop %v1028
    %v1030 = vadd.f32 %v1029, 1.0
    %v1031 = vrcp.pop %v1030
    %v1032 = vmul.f32 1.0, %v1031
    %v1033 = vtanh.pop %v1026
    %v1034 = vmul.f32 %v1032, %v377
    %1036 = vrot.lane.b32.xlu0 %v1033, 92
    %v1037 = vpop.permute.xlu0 %1036
    %v1039 = vmul.f32 %v1032, %v1037
    %1041 = vrot.lane.b32.xlu0 %v1039, 12
    %v1042 = vpop.permute.xlu0 %1041
    %v1044 = vadd.f32 %v1034, %v1042
    %v1045 = vtanh.pop %v1044
    %1047 = vrot.lane.b32.xlu0 %v1045, 12
    %v1048 = vpop.permute.xlu0 %1047
    %v1050 = vmul.f32 %v1032, %v1048
    %1052 = vrot.lane.b32.xlu0 %v1050, 104
    %v1053 = vpop.permute.xlu0 %1052
    %1055 = vrot.lane.b32.xlu0 %v497, 116
    %v1056 = vpop.permute.xlu0 %1055
    %v1058 = vsel %vm277, %v1053, %v1056
    %v1060 = vsel %vm396, %v1058, 0
    %1062 = vmatprep.subr.mxu0 0.0
    %1063 = vmatpush1.msra.mxu0 %v393
    %1064 = vmatprep.subr.mxu0 0.0
    %1065 = vmatpush1.msra.mxu0 %v394
    %1066 = vmatprep.subr.mxu0 0.0
    %1067 = vmatpush1.msra.mxu0 %v395
    %1068 = vmatprep.subr.mxu0 0.0
    %1069 = vmatpush1.msra.mxu0 0.0
    %1070 = vmatprep.subr.mxu0 0.0
    %1071 = vmatpush1.msra.mxu0 0.0
    %1072 = vmatprep.subr.mxu0 0.0
    %1073 = vmatpush1.msra.mxu0 0.0
    %1074 = vmatprep.subr.mxu0 0.0
    %1075 = vmatpush1.msra.mxu0 0.0
    %1076 = vmatprep.subr.mxu0 0.0
    %1077 = vmatpush1.msra.mxu0 0.0
    %1078 = vmatprep.subr.mxu0 0.0
    %1079 = vmatpush1.msra.mxu0 0.0
    %1080 = vmatprep.subr.mxu0 0.0
    %1081 = vmatpush1.msra.mxu0 0.0
    %1082 = vmatprep.subr.mxu0 0.0
    %1083 = vmatpush1.msra.mxu0 0.0
    %1084 = vmatprep.subr.mxu0 0.0
    %1085 = vmatpush1.msra.mxu0 0.0
    %1086 = vmatprep.subr.mxu0 0.0
    %1087 = vmatpush1.msra.mxu0 0.0
    %1088 = vmatprep.subr.mxu0 0.0
    %1089 = vmatpush1.msra.mxu0 0.0
    %1090 = vmatprep.subr.mxu0 0.0
    %1091 = vmatpush1.msra.mxu0 0.0
    %1092 = vmatprep.subr.mxu0 0.0
    %1093 = vmatpush1.msra.mxu0 0.0
    %1094 = vmatprep.subr.mxu0 0.0
    %1095 = vmatpush1.msra.mxu0 0.0
    %1096 = vmatprep.subr.mxu0 0.0
    %1097 = vmatpush1.msra.mxu0 0.0
    %1098 = vmatprep.subr.mxu0 0.0
    %1099 = vmatpush1.msra.mxu0 0.0
    %1100 = vmatprep.subr.mxu0 0.0
    %1101 = vmatpush1.msra.mxu0 0.0
    %1102 = vmatprep.subr.mxu0 0.0
    %1103 = vmatpush1.msra.mxu0 0.0
    %1104 = vmatprep.subr.mxu0 0.0
    %1105 = vmatpush1.msra.mxu0 0.0
    %1106 = vmatprep.subr.mxu0 0.0
    %1107 = vmatpush1.msra.mxu0 0.0
    %1108 = vmatprep.subr.mxu0 0.0
    %1109 = vmatpush1.msra.mxu0 0.0
    %1110 = vmatprep.subr.mxu0 0.0
    %1111 = vmatpush1.msra.mxu0 0.0
    %1112 = vmatprep.subr.mxu0 0.0
    %1113 = vmatpush1.msra.mxu0 0.0
    %1114 = vmatprep.subr.mxu0 0.0
    %1115 = vmatpush1.msra.mxu0 0.0
    %1116 = vmatprep.subr.mxu0 0.0
    %1117 = vmatpush1.msra.mxu0 0.0
    %1118 = vmatprep.subr.mxu0 0.0
    %1119 = vmatpush1.msra.mxu0 0.0
    %1120 = vmatprep.subr.mxu0 0.0
    %1121 = vmatpush1.msra.mxu0 0.0
    %1122 = vmatprep.subr.mxu0 0.0
    %1123 = vmatpush1.msra.mxu0 0.0
    %1124 = vmatprep.subr.mxu0 0.0
    %1125 = vmatpush1.msra.mxu0 0.0
    %1126 = vmatprep.mubr.f32.mxu0 0.0
    %1127 = vmatmul.mubr.f32.gmra.mrb[0].mxu0 %v1060
    %v1128 = vpop.f32.mrb[0].mxu0
    %v1129 = vadd.f32 %v221, %v1128
    %v1130 = vpop.f32.mrb[0].mxu0
    %1131 = vdwg.mxu0
    %v1132 = vxor.u32 %v1129, 2147483648
    %v1133 = vmul.f32 %v1132, 1.442695
    %v1134 = vpow.pop %v1133
    %v1135 = vadd.f32 %v1134, 1.0
    %v1136 = vrcp.pop %v1135
    %v1137 = vmul.f32 1.0, %v1136
    %v1138 = vtanh.pop %v1129
    %v1139 = vmul.f32 %v1137, %v491
    %1141 = vrot.lane.b32.xlu0 %v1138, 92
    %v1142 = vpop.permute.xlu0 %1141
    %v1144 = vmul.f32 %v1137, %v1142
    %1146 = vrot.lane.b32.xlu0 %v1144, 12
    %v1147 = vpop.permute.xlu0 %1146
    %v1149 = vadd.f32 %v1139, %v1147
    %v1150 = vtanh.pop %v1149
    %1152 = vrot.lane.b32.xlu0 %v1150, 12
    %v1153 = vpop.permute.xlu0 %1152
    %v1155 = vmul.f32 %v1137, %v1153
    %1157 = vrot.lane.b32.xlu0 %v1155, 104
    %v1158 = vpop.permute.xlu0 %1157
    %1160 = vrot.lane.b32.xlu0 %v611, 116
    %v1161 = vpop.permute.xlu0 %1160
    %v1163 = vsel %vm277, %v1158, %v1161
    %v1165 = vsel %vm396, %v1163, 0
    %1167 = vmatprep.subr.mxu0 0.0
    %1168 = vmatpush1.msra.mxu0 %v508
    %1169 = vmatprep.subr.mxu0 0.0
    %1170 = vmatpush1.msra.mxu0 %v509
    %1171 = vmatprep.subr.mxu0 0.0
    %1172 = vmatpush1.msra.mxu0 %v510
    %1173 = vmatprep.subr.mxu0 0.0
    %1174 = vmatpush1.msra.mxu0 0.0
    %1175 = vmatprep.subr.mxu0 0.0
    %1176 = vmatpush1.msra.mxu0 0.0
    %1177 = vmatprep.subr.mxu0 0.0
    %1178 = vmatpush1.msra.mxu0 0.0
    %1179 = vmatprep.subr.mxu0 0.0
    %1180 = vmatpush1.msra.mxu0 0.0
    %1181 = vmatprep.subr.mxu0 0.0
    %1182 = vmatpush1.msra.mxu0 0.0
    %1183 = vmatprep.subr.mxu0 0.0
    %1184 = vmatpush1.msra.mxu0 0.0
    %1185 = vmatprep.subr.mxu0 0.0
    %1186 = vmatpush1.msra.mxu0 0.0
    %1187 = vmatprep.subr.mxu0 0.0
    %1188 = vmatpush1.msra.mxu0 0.0
    %1189 = vmatprep.subr.mxu0 0.0
    %1190 = vmatpush1.msra.mxu0 0.0
    %1191 = vmatprep.subr.mxu0 0.0
    %1192 = vmatpush1.msra.mxu0 0.0
    %1193 = vmatprep.subr.mxu0 0.0
    %1194 = vmatpush1.msra.mxu0 0.0
    %1195 = vmatprep.subr.mxu0 0.0
    %1196 = vmatpush1.msra.mxu0 0.0
    %1197 = vmatprep.subr.mxu0 0.0
    %1198 = vmatpush1.msra.mxu0 0.0
    %1199 = vmatprep.subr.mxu0 0.0
    %1200 = vmatpush1.msra.mxu0 0.0
    %1201 = vmatprep.subr.mxu0 0.0
    %1202 = vmatpush1.msra.mxu0 0.0
    %1203 = vmatprep.subr.mxu0 0.0
    %1204 = vmatpush1.msra.mxu0 0.0
    %1205 = vmatprep.subr.mxu0 0.0
    %1206 = vmatpush1.msra.mxu0 0.0
    %1207 = vmatprep.subr.mxu0 0.0
    %1208 = vmatpush1.msra.mxu0 0.0
    %1209 = vmatprep.subr.mxu0 0.0
    %1210 = vmatpush1.msra.mxu0 0.0
    %1211 = vmatprep.subr.mxu0 0.0
    %1212 = vmatpush1.msra.mxu0 0.0
    %1213 = vmatprep.subr.mxu0 0.0
    %1214 = vmatpush1.msra.mxu0 0.0
    %1215 = vmatprep.subr.mxu0 0.0
    %1216 = vmatpush1.msra.mxu0 0.0
    %1217 = vmatprep.subr.mxu0 0.0
    %1218 = vmatpush1.msra.mxu0 0.0
    %1219 = vmatprep.subr.mxu0 0.0
    %1220 = vmatpush1.msra.mxu0 0.0
    %1221 = vmatprep.subr.mxu0 0.0
    %1222 = vmatpush1.msra.mxu0 0.0
    %1223 = vmatprep.subr.mxu0 0.0
    %1224 = vmatpush1.msra.mxu0 0.0
    %1225 = vmatprep.subr.mxu0 0.0
    %1226 = vmatpush1.msra.mxu0 0.0
    %1227 = vmatprep.subr.mxu0 0.0
    %1228 = vmatpush1.msra.mxu0 0.0
    %1229 = vmatprep.subr.mxu0 0.0
    %1230 = vmatpush1.msra.mxu0 0.0
    %1231 = vmatprep.mubr.f32.mxu0 0.0
    %1232 = vmatmul.mubr.f32.gmra.mrb[0].mxu0 %v1165
    %v1233 = vpop.f32.mrb[0].mxu0
    %v1234 = vadd.f32 %v229, %v1233
    %v1235 = vpop.f32.mrb[0].mxu0
    %1236 = vdwg.mxu0
    %v1237 = vxor.u32 %v1234, 2147483648
    %v1238 = vmul.f32 %v1237, 1.442695
    %v1239 = vpow.pop %v1238
    %v1240 = vadd.f32 %v1239, 1.0
    %v1241 = vrcp.pop %v1240
    %v1242 = vmul.f32 1.0, %v1241
    %v1243 = vtanh.pop %v1234
    %v1244 = vmul.f32 %v1242, %v605
    %1246 = vrot.lane.b32.xlu0 %v1243, 92
    %v1247 = vpop.permute.xlu0 %1246
    %v1249 = vmul.f32 %v1242, %v1247
    %1251 = vrot.lane.b32.xlu0 %v1249, 12
    %v1252 = vpop.permute.xlu0 %1251
    %v1254 = vadd.f32 %v1244, %v1252
    %v1255 = vtanh.pop %v1254
    %1257 = vrot.lane.b32.xlu0 %v1255, 12
    %v1258 = vpop.permute.xlu0 %1257
    %v1260 = vmul.f32 %v1242, %v1258
    %1262 = vrot.lane.b32.xlu0 %v1260, 104
    %v1263 = vpop.permute.xlu0 %1262
    %1265 = vrot.lane.b32.xlu0 %v725, 116
    %v1266 = vpop.permute.xlu0 %1265
    %v1268 = vsel %vm277, %v1263, %v1266
    %v1270 = vsel %vm396, %v1268, 0
    %1272 = vmatprep.subr.mxu0 0.0
    %1273 = vmatpush1.msra.mxu0 %v622
    %1274 = vmatprep.subr.mxu0 0.0
    %1275 = vmatpush1.msra.mxu0 %v623
    %1276 = vmatprep.subr.mxu0 0.0
    %1277 = vmatpush1.msra.mxu0 %v624
    %1278 = vmatprep.subr.mxu0 0.0
    %1279 = vmatpush1.msra.mxu0 0.0
    %1280 = vmatprep.subr.mxu0 0.0
    %1281 = vmatpush1.msra.mxu0 0.0
    %1282 = vmatprep.subr.mxu0 0.0
    %1283 = vmatpush1.msra.mxu0 0.0
    %1284 = vmatprep.subr.mxu0 0.0
    %1285 = vmatpush1.msra.mxu0 0.0
    %1286 = vmatprep.subr.mxu0 0.0
    %1287 = vmatpush1.msra.mxu0 0.0
    %1288 = vmatprep.subr.mxu0 0.0
    %1289 = vmatpush1.msra.mxu0 0.0
    %1290 = vmatprep.subr.mxu0 0.0
    %1291 = vmatpush1.msra.mxu0 0.0
    %1292 = vmatprep.subr.mxu0 0.0
    %1293 = vmatpush1.msra.mxu0 0.0
    %1294 = vmatprep.subr.mxu0 0.0
    %1295 = vmatpush1.msra.mxu0 0.0
    %1296 = vmatprep.subr.mxu0 0.0
    %1297 = vmatpush1.msra.mxu0 0.0
    %1298 = vmatprep.subr.mxu0 0.0
    %1299 = vmatpush1.msra.mxu0 0.0
    %1300 = vmatprep.subr.mxu0 0.0
    %1301 = vmatpush1.msra.mxu0 0.0
    %1302 = vmatprep.subr.mxu0 0.0
    %1303 = vmatpush1.msra.mxu0 0.0
    %1304 = vmatprep.subr.mxu0 0.0
    %1305 = vmatpush1.msra.mxu0 0.0
    %1306 = vmatprep.subr.mxu0 0.0
    %1307 = vmatpush1.msra.mxu0 0.0
    %1308 = vmatprep.subr.mxu0 0.0
    %1309 = vmatpush1.msra.mxu0 0.0
    %1310 = vmatprep.subr.mxu0 0.0
    %1311 = vmatpush1.msra.mxu0 0.0
    %1312 = vmatprep.subr.mxu0 0.0
    %1313 = vmatpush1.msra.mxu0 0.0
    %1314 = vmatprep.subr.mxu0 0.0
    %1315 = vmatpush1.msra.mxu0 0.0
    %1316 = vmatprep.subr.mxu0 0.0
    %1317 = vmatpush1.msra.mxu0 0.0
    %1318 = vmatprep.subr.mxu0 0.0
    %1319 = vmatpush1.msra.mxu0 0.0
    %1320 = vmatprep.subr.mxu0 0.0
    %1321 = vmatpush1.msra.mxu0 0.0
    %1322 = vmatprep.subr.mxu0 0.0
    %1323 = vmatpush1.msra.mxu0 0.0
    %1324 = vmatprep.subr.mxu0 0.0
    %1325 = vmatpush1.msra.mxu0 0.0
    %1326 = vmatprep.subr.mxu0 0.0
    %1327 = vmatpush1.msra.mxu0 0.0
    %1328 = vmatprep.subr.mxu0 0.0
    %1329 = vmatpush1.msra.mxu0 0.0
    %1330 = vmatprep.subr.mxu0 0.0
    %1331 = vmatpush1.msra.mxu0 0.0
    %1332 = vmatprep.subr.mxu0 0.0
    %1333 = vmatpush1.msra.mxu0 0.0
    %1334 = vmatprep.subr.mxu0 0.0
    %1335 = vmatpush1.msra.mxu0 0.0
    %1336 = vmatprep.mubr.f32.mxu0 0.0
    %1337 = vmatmul.mubr.f32.gmra.mrb[0].mxu0 %v1270
    %v1338 = vpop.f32.mrb[0].mxu0
    %v1339 = vadd.f32 %v237, %v1338
    %v1340 = vpop.f32.mrb[0].mxu0
    %1341 = vdwg.mxu0
    %v1342 = vxor.u32 %v1339, 2147483648
    %v1343 = vmul.f32 %v1342, 1.442695
    %v1344 = vpow.pop %v1343
    %v1345 = vadd.f32 %v1344, 1.0
    %v1346 = vrcp.pop %v1345
    %v1347 = vmul.f32 1.0, %v1346
    %v1348 = vtanh.pop %v1339
    %v1349 = vmul.f32 %v1347, %v719
    %1351 = vrot.lane.b32.xlu0 %v1348, 92
    %v1352 = vpop.permute.xlu0 %1351
    %v1354 = vmul.f32 %v1347, %v1352
    %1356 = vrot.lane.b32.xlu0 %v1354, 12
    %v1357 = vpop.permute.xlu0 %1356
    %v1359 = vadd.f32 %v1349, %v1357
    %v1360 = vtanh.pop %v1359
    %1362 = vrot.lane.b32.xlu0 %v1360, 12
    %v1363 = vpop.permute.xlu0 %1362
    %v1365 = vmul.f32 %v1347, %v1363
    %1367 = vrot.lane.b32.xlu0 %v1365, 104
    %v1368 = vpop.permute.xlu0 %1367
    %1370 = vrot.lane.b32.xlu0 %v839, 116
    %v1371 = vpop.permute.xlu0 %1370
    %v1373 = vsel %vm277, %v1368, %v1371
    %v1375 = vsel %vm396, %v1373, 0
    %1377 = vmatprep.subr.mxu0 0.0
    %1378 = vmatpush1.msra.mxu0 %v736
    %1379 = vmatprep.subr.mxu0 0.0
    %1380 = vmatpush1.msra.mxu0 %v737
    %1381 = vmatprep.subr.mxu0 0.0
    %1382 = vmatpush1.msra.mxu0 %v738
    %1383 = vmatprep.subr.mxu0 0.0
    %1384 = vmatpush1.msra.mxu0 0.0
    %1385 = vmatprep.subr.mxu0 0.0
    %1386 = vmatpush1.msra.mxu0 0.0
    %1387 = vmatprep.subr.mxu0 0.0
    %1388 = vmatpush1.msra.mxu0 0.0
    %1389 = vmatprep.subr.mxu0 0.0
    %1390 = vmatpush1.msra.mxu0 0.0
    %1391 = vmatprep.subr.mxu0 0.0
    %1392 = vmatpush1.msra.mxu0 0.0
    %1393 = vmatprep.subr.mxu0 0.0
    %1394 = vmatpush1.msra.mxu0 0.0
    %1395 = vmatprep.subr.mxu0 0.0
    %1396 = vmatpush1.msra.mxu0 0.0
    %1397 = vmatprep.subr.mxu0 0.0
    %1398 = vmatpush1.msra.mxu0 0.0
    %1399 = vmatprep.subr.mxu0 0.0
    %1400 = vmatpush1.msra.mxu0 0.0
    %1401 = vmatprep.subr.mxu0 0.0
    %1402 = vmatpush1.msra.mxu0 0.0
    %1403 = vmatprep.subr.mxu0 0.0
    %1404 = vmatpush1.msra.mxu0 0.0
    %1405 = vmatprep.subr.mxu0 0.0
    %1406 = vmatpush1.msra.mxu0 0.0
    %1407 = vmatprep.subr.mxu0 0.0
    %1408 = vmatpush1.msra.mxu0 0.0
    %1409 = vmatprep.subr.mxu0 0.0
    %1410 = vmatpush1.msra.mxu0 0.0
    %1411 = vmatprep.subr.mxu0 0.0
    %1412 = vmatpush1.msra.mxu0 0.0
    %1413 = vmatprep.subr.mxu0 0.0
    %1414 = vmatpush1.msra.mxu0 0.0
    %1415 = vmatprep.subr.mxu0 0.0
    %1416 = vmatpush1.msra.mxu0 0.0
    %1417 = vmatprep.subr.mxu0 0.0
    %1418 = vmatpush1.msra.mxu0 0.0
    %1419 = vmatprep.subr.mxu0 0.0
    %1420 = vmatpush1.msra.mxu0 0.0
    %1421 = vmatprep.subr.mxu0 0.0
    %1422 = vmatpush1.msra.mxu0 0.0
    %1423 = vmatprep.subr.mxu0 0.0
    %1424 = vmatpush1.msra.mxu0 0.0
    %1425 = vmatprep.subr.mxu0 0.0
    %1426 = vmatpush1.msra.mxu0 0.0
    %1427 = vmatprep.subr.mxu0 0.0
    %1428 = vmatpush1.msra.mxu0 0.0
    %1429 = vmatprep.subr.mxu0 0.0
    %1430 = vmatpush1.msra.mxu0 0.0
    %1431 = vmatprep.subr.mxu0 0.0
    %1432 = vmatpush1.msra.mxu0 0.0
    %1433 = vmatprep.subr.mxu0 0.0
    %1434 = vmatpush1.msra.mxu0 0.0
    %1435 = vmatprep.subr.mxu0 0.0
    %1436 = vmatpush1.msra.mxu0 0.0
    %1437 = vmatprep.subr.mxu0 0.0
    %1438 = vmatpush1.msra.mxu0 0.0
    %1439 = vmatprep.subr.mxu0 0.0
    %1440 = vmatpush1.msra.mxu0 0.0
    %1441 = vmatprep.mubr.f32.mxu0 0.0
    %1442 = vmatmul.mubr.f32.gmra.mrb[0].mxu0 %v1375
    %v1443 = vpop.f32.mrb[0].mxu0
    %v1444 = vadd.f32 %v245, %v1443
    %v1445 = vpop.f32.mrb[0].mxu0
    %1446 = vdwg.mxu0
    %v1447 = vxor.u32 %v1444, 2147483648
    %v1448 = vmul.f32 %v1447, 1.442695
    %v1449 = vpow.pop %v1448
    %v1450 = vadd.f32 %v1449, 1.0
    %v1451 = vrcp.pop %v1450
    %v1452 = vmul.f32 1.0, %v1451
    %v1453 = vtanh.pop %v1444
    %v1454 = vmul.f32 %v1452, %v833
    %1456 = vrot.lane.b32.xlu0 %v1453, 92
    %v1457 = vpop.permute.xlu0 %1456
    %v1459 = vmul.f32 %v1452, %v1457
    %1461 = vrot.lane.b32.xlu0 %v1459, 12
    %v1462 = vpop.permute.xlu0 %1461
    %v1464 = vadd.f32 %v1454, %v1462
    %v1465 = vtanh.pop %v1464
    %1467 = vrot.lane.b32.xlu0 %v1465, 12
    %v1468 = vpop.permute.xlu0 %1467
    %v1470 = vmul.f32 %v1452, %v1468
    %1472 = vrot.lane.b32.xlu0 %v1470, 104
    %v1473 = vpop.permute.xlu0 %1472
    %1476 = vrot.lane.b32.xlu0 %v953, 116
    %v1477 = vpop.permute.xlu0 %1476
    %v1479 = vsel %vm277, %v1473, %v1477
    %v1481 = vsel %vm396, %v1479, 0
    %1483 = vmatprep.subr.mxu0 0.0
    %1484 = vmatpush1.msra.mxu0 %v850
    %1485 = vmatprep.subr.mxu0 0.0
    %1486 = vmatpush1.msra.mxu0 %v851
    %1487 = vmatprep.subr.mxu0 0.0
    %1488 = vmatpush1.msra.mxu0 %v852
    %1489 = vmatprep.subr.mxu0 0.0
    %1490 = vmatpush1.msra.mxu0 0.0
    %1491 = vmatprep.subr.mxu0 0.0
    %1492 = vmatpush1.msra.mxu0 0.0
    %1493 = vmatprep.subr.mxu0 0.0
    %1494 = vmatpush1.msra.mxu0 0.0
    %1495 = vmatprep.subr.mxu0 0.0
    %1496 = vmatpush1.msra.mxu0 0.0
    %1497 = vmatprep.subr.mxu0 0.0
    %1498 = vmatpush1.msra.mxu0 0.0
    %1499 = vmatprep.subr.mxu0 0.0
    %1500 = vmatpush1.msra.mxu0 0.0
    %1501 = vmatprep.subr.mxu0 0.0
    %1502 = vmatpush1.msra.mxu0 0.0
    %1503 = vmatprep.subr.mxu0 0.0
    %1504 = vmatpush1.msra.mxu0 0.0
    %1505 = vmatprep.subr.mxu0 0.0
    %1506 = vmatpush1.msra.mxu0 0.0
    %1507 = vmatprep.subr.mxu0 0.0
    %1508 = vmatpush1.msra.mxu0 0.0
    %1509 = vmatprep.subr.mxu0 0.0
    %1510 = vmatpush1.msra.mxu0 0.0
    %1511 = vmatprep.subr.mxu0 0.0
    %1512 = vmatpush1.msra.mxu0 0.0
    %1513 = vmatprep.subr.mxu0 0.0
    %1514 = vmatpush1.msra.mxu0 0.0
    %1515 = vmatprep.subr.mxu0 0.0
    %1516 = vmatpush1.msra.mxu0 0.0
    %1517 = vmatprep.subr.mxu0 0.0
    %1518 = vmatpush1.msra.mxu0 0.0
    %1519 = vmatprep.subr.mxu0 0.0
    %1520 = vmatpush1.msra.mxu0 0.0
    %1521 = vmatprep.subr.mxu0 0.0
    %1522 = vmatpush1.msra.mxu0 0.0
    %1523 = vmatprep.subr.mxu0 0.0
    %1524 = vmatpush1.msra.mxu0 0.0
    %1525 = vmatprep.subr.mxu0 0.0
    %1526 = vmatpush1.msra.mxu0 0.0
    %1527 = vmatprep.subr.mxu0 0.0
    %1528 = vmatpush1.msra.mxu0 0.0
    %1529 = vmatprep.subr.mxu0 0.0
    %1530 = vmatpush1.msra.mxu0 0.0
    %1531 = vmatprep.subr.mxu0 0.0
    %1532 = vmatpush1.msra.mxu0 0.0
    %1533 = vmatprep.subr.mxu0 0.0
    %1534 = vmatpush1.msra.mxu0 0.0
    %1535 = vmatprep.subr.mxu0 0.0
    %1536 = vmatpush1.msra.mxu0 0.0
    %1537 = vmatprep.subr.mxu0 0.0
    %1538 = vmatpush1.msra.mxu0 0.0
    %1539 = vmatprep.subr.mxu0 0.0
    %1540 = vmatpush1.msra.mxu0 0.0
    %1541 = vmatprep.subr.mxu0 0.0
    %1542 = vmatpush1.msra.mxu0 0.0
    %1543 = vmatprep.subr.mxu0 0.0
    %1544 = vmatpush1.msra.mxu0 0.0
    %1545 = vmatprep.subr.mxu0 0.0
    %1546 = vmatpush1.msra.mxu0 0.0
    %1547 = vmatprep.mubr.f32.mxu0 0.0
    %1548 = vmatmul.mubr.f32.gmra.mrb[0].mxu0 %v1481
    %v1549 = vpop.f32.mrb[0].mxu0
    %v1550 = vadd.f32 %v253, %v1549
    %v1551 = vpop.f32.mrb[0].mxu0
    %1552 = vdwg.mxu0
    %v1553 = vxor.u32 %v1550, 2147483648
    %v1554 = vmul.f32 %v1553, 1.442695
    %v1555 = vpow.pop %v1554
    %v1556 = vadd.f32 %v1555, 1.0
    %v1557 = vrcp.pop %v1556
    %v1558 = vmul.f32 1.0, %v1557
    %v1559 = vtanh.pop %v1550
    %v1560 = vmul.f32 %v1558, %v947
    %1562 = vrot.lane.b32.xlu0 %v1559, 92
    %v1563 = vpop.permute.xlu0 %1562
    %v1565 = vmul.f32 %v1558, %v1563
    %1567 = vrot.lane.b32.xlu0 %v1565, 12
    %v1568 = vpop.permute.xlu0 %1567
    %v1570 = vadd.f32 %v1560, %v1568
    %v1571 = vtanh.pop %v1570
    %1573 = vrot.lane.b32.xlu0 %v1571, 12
    %v1574 = vpop.permute.xlu0 %1573
    %v1576 = vmul.f32 %v1558, %v1574
    %v1577 = vsel %vm277, %v1053, 0
    %1579 = vmatprep.subr.mxu0 0.0
    %1580 = vmatpush1.msra.mxu0 %v214
    %1581 = vmatprep.subr.mxu0 0.0
    %1582 = vmatpush1.msra.mxu0 %v283
    %1583 = vmatprep.subr.mxu0 0.0
    %1584 = vmatpush1.msra.mxu0 0.0
    %1585 = vmatprep.subr.mxu0 0.0
    %1586 = vmatpush1.msra.mxu0 0.0
    %1587 = vmatprep.subr.mxu0 0.0
    %1588 = vmatpush1.msra.mxu0 0.0
    %1589 = vmatprep.subr.mxu0 0.0
    %1590 = vmatpush1.msra.mxu0 0.0
    %1591 = vmatprep.subr.mxu0 0.0
    %1592 = vmatpush1.msra.mxu0 0.0
    %1593 = vmatprep.subr.mxu0 0.0
    %1594 = vmatpush1.msra.mxu0 0.0
    %1595 = vmatprep.subr.mxu0 0.0
    %1596 = vmatpush1.msra.mxu0 0.0
    %1597 = vmatprep.subr.mxu0 0.0
    %1598 = vmatpush1.msra.mxu0 0.0
    %1599 = vmatprep.subr.mxu0 0.0
    %1600 = vmatpush1.msra.mxu0 0.0
    %1601 = vmatprep.subr.mxu0 0.0
    %1602 = vmatpush1.msra.mxu0 0.0
    %1603 = vmatprep.subr.mxu0 0.0
    %1604 = vmatpush1.msra.mxu0 0.0
    %1605 = vmatprep.subr.mxu0 0.0
    %1606 = vmatpush1.msra.mxu0 0.0
    %1607 = vmatprep.subr.mxu0 0.0
    %1608 = vmatpush1.msra.mxu0 0.0
    %1609 = vmatprep.subr.mxu0 0.0
    %1610 = vmatpush1.msra.mxu0 0.0
    %1611 = vmatprep.subr.mxu0 0.0
    %1612 = vmatpush1.msra.mxu0 0.0
    %1613 = vmatprep.subr.mxu0 0.0
    %1614 = vmatpush1.msra.mxu0 0.0
    %1615 = vmatprep.subr.mxu0 0.0
    %1616 = vmatpush1.msra.mxu0 0.0
    %1617 = vmatprep.subr.mxu0 0.0
    %1618 = vmatpush1.msra.mxu0 0.0
    %1619 = vmatprep.subr.mxu0 0.0
    %1620 = vmatpush1.msra.mxu0 0.0
    %1621 = vmatprep.subr.mxu0 0.0
    %1622 = vmatpush1.msra.mxu0 0.0
    %1623 = vmatprep.subr.mxu0 0.0
    %1624 = vmatpush1.msra.mxu0 0.0
    %1625 = vmatprep.subr.mxu0 0.0
    %1626 = vmatpush1.msra.mxu0 0.0
    %1627 = vmatprep.subr.mxu0 0.0
    %1628 = vmatpush1.msra.mxu0 0.0
    %1629 = vmatprep.subr.mxu0 0.0
    %1630 = vmatpush1.msra.mxu0 0.0
    %1631 = vmatprep.subr.mxu0 0.0
    %1632 = vmatpush1.msra.mxu0 0.0
    %1633 = vmatprep.subr.mxu0 0.0
    %1634 = vmatpush1.msra.mxu0 0.0
    %1635 = vmatprep.subr.mxu0 0.0
    %1636 = vmatpush1.msra.mxu0 0.0
    %1637 = vmatprep.subr.mxu0 0.0
    %1638 = vmatpush1.msra.mxu0 0.0
    %1639 = vmatprep.subr.mxu0 0.0
    %1640 = vmatpush1.msra.mxu0 0.0
    %1641 = vmatprep.subr.mxu0 0.0
    %1642 = vmatpush1.msra.mxu0 0.0
    %1643 = vmatprep.mubr.f32.mxu0 0.0
    %1644 = vmatmul.mubr.f32.gmra.mrb[0].mxu0 %v1577
    %v1645 = vpop.f32.mrb[0].mxu0
    %v1646 = vadd.f32 0.0, %v1645
    %v1647 = vpop.f32.mrb[0].mxu0
    %1648 = vdwg.mxu0
    %v1649 = vadd.f32 %v201, %v1646
    %v1650 = vxor.u32 %v1649, 2147483648
    %v1651 = vmul.f32 %v1650, 1.442695
    %v1652 = vpow.pop %v1651
    %v1653 = vadd.f32 %v1652, 1.0
    %v1654 = vrcp.pop %v1653
    %v1655 = vmul.f32 1.0, %v1654
    %v1656 = vtanh.pop %v1649
    %v1657 = vmul.f32 %v1655, %v1044
    %1659 = vrot.lane.b32.xlu0 %v1656, 92
    %v1660 = vpop.permute.xlu0 %1659
    %v1662 = vmul.f32 %v1655, %v1660
    %1664 = vrot.lane.b32.xlu0 %v1662, 12
    %v1665 = vpop.permute.xlu0 %1664
    %v1667 = vadd.f32 %v1657, %v1665
    %v1668 = vtanh.pop %v1667
    %1670 = vrot.lane.b32.xlu0 %v1668, 12
    %v1671 = vpop.permute.xlu0 %1670
    %v1673 = vmul.f32 %v1655, %v1671
    %1675 = vrot.lane.b32.xlu0 %v1673, 104
    %v1676 = vpop.permute.xlu0 %1675
    %1678 = vrot.lane.b32.xlu0 %v1155, 116
    %v1679 = vpop.permute.xlu0 %1678
    %v1681 = vsel %vm277, %v1676, %v1679
    %v1683 = vsel %vm396, %v1681, 0
    %1685 = vmatprep.subr.mxu0 0.0
    %1686 = vmatpush1.msra.mxu0 %v393
    %1687 = vmatprep.subr.mxu0 0.0
    %1688 = vmatpush1.msra.mxu0 %v394
    %1689 = vmatprep.subr.mxu0 0.0
    %1690 = vmatpush1.msra.mxu0 %v395
    %1691 = vmatprep.subr.mxu0 0.0
    %1692 = vmatpush1.msra.mxu0 0.0
    %1693 = vmatprep.subr.mxu0 0.0
    %1694 = vmatpush1.msra.mxu0 0.0
    %1695 = vmatprep.subr.mxu0 0.0
    %1696 = vmatpush1.msra.mxu0 0.0
    %1697 = vmatprep.subr.mxu0 0.0
    %1698 = vmatpush1.msra.mxu0 0.0
    %1699 = vmatprep.subr.mxu0 0.0
    %1700 = vmatpush1.msra.mxu0 0.0
    %1701 = vmatprep.subr.mxu0 0.0
    %1702 = vmatpush1.msra.mxu0 0.0
    %1703 = vmatprep.subr.mxu0 0.0
    %1704 = vmatpush1.msra.mxu0 0.0
    %1705 = vmatprep.subr.mxu0 0.0
    %1706 = vmatpush1.msra.mxu0 0.0
    %1707 = vmatprep.subr.mxu0 0.0
    %1708 = vmatpush1.msra.mxu0 0.0
    %1709 = vmatprep.subr.mxu0 0.0
    %1710 = vmatpush1.msra.mxu0 0.0
    %1711 = vmatprep.subr.mxu0 0.0
    %1712 = vmatpush1.msra.mxu0 0.0
    %1713 = vmatprep.subr.mxu0 0.0
    %1714 = vmatpush1.msra.mxu0 0.0
    %1715 = vmatprep.subr.mxu0 0.0
    %1716 = vmatpush1.msra.mxu0 0.0
    %1717 = vmatprep.subr.mxu0 0.0
    %1718 = vmatpush1.msra.mxu0 0.0
    %1719 = vmatprep.subr.mxu0 0.0
    %1720 = vmatpush1.msra.mxu0 0.0
    %1721 = vmatprep.subr.mxu0 0.0
    %1722 = vmatpush1.msra.mxu0 0.0
    %1723 = vmatprep.subr.mxu0 0.0
    %1724 = vmatpush1.msra.mxu0 0.0
    %1725 = vmatprep.subr.mxu0 0.0
    %1726 = vmatpush1.msra.mxu0 0.0
    %1727 = vmatprep.subr.mxu0 0.0
    %1728 = vmatpush1.msra.mxu0 0.0
    %1729 = vmatprep.subr.mxu0 0.0
    %1730 = vmatpush1.msra.mxu0 0.0
    %1731 = vmatprep.subr.mxu0 0.0
    %1732 = vmatpush1.msra.mxu0 0.0
    %1733 = vmatprep.subr.mxu0 0.0
    %1734 = vmatpush1.msra.mxu0 0.0
    %1735 = vmatprep.subr.mxu0 0.0
    %1736 = vmatpush1.msra.mxu0 0.0
    %1737 = vmatprep.subr.mxu0 0.0
    %1738 = vmatpush1.msra.mxu0 0.0
    %1739 = vmatprep.subr.mxu0 0.0
    %1740 = vmatpush1.msra.mxu0 0.0
    %1741 = vmatprep.subr.mxu0 0.0
    %1742 = vmatpush1.msra.mxu0 0.0
    %1743 = vmatprep.subr.mxu0 0.0
    %1744 = vmatpush1.msra.mxu0 0.0
    %1745 = vmatprep.subr.mxu0 0.0
    %1746 = vmatpush1.msra.mxu0 0.0
    %1747 = vmatprep.subr.mxu0 0.0
    %1748 = vmatpush1.msra.mxu0 0.0
    %1749 = vmatprep.mubr.f32.mxu0 0.0
    %1750 = vmatmul.mubr.f32.gmra.mrb[0].mxu0 %v1683
    %v1751 = vpop.f32.mrb[0].mxu0
    %v1752 = vadd.f32 %v221, %v1751
    %v1753 = vpop.f32.mrb[0].mxu0
    %1754 = vdwg.mxu0
    %v1755 = vxor.u32 %v1752, 2147483648
    %v1756 = vmul.f32 %v1755, 1.442695
    %v1757 = vpow.pop %v1756
    %v1758 = vadd.f32 %v1757, 1.0
    %v1759 = vrcp.pop %v1758
    %v1760 = vmul.f32 1.0, %v1759
    %v1761 = vtanh.pop %v1752
    %v1762 = vmul.f32 %v1760, %v1149
    %1764 = vrot.lane.b32.xlu0 %v1761, 92
    %v1765 = vpop.permute.xlu0 %1764
    %v1767 = vmul.f32 %v1760, %v1765
    %1769 = vrot.lane.b32.xlu0 %v1767, 12
    %v1770 = vpop.permute.xlu0 %1769
    %v1772 = vadd.f32 %v1762, %v1770
    %v1773 = vtanh.pop %v1772
    %1775 = vrot.lane.b32.xlu0 %v1773, 12
    %v1776 = vpop.permute.xlu0 %1775
    %v1778 = vmul.f32 %v1760, %v1776
    %1780 = vrot.lane.b32.xlu0 %v1778, 104
    %v1781 = vpop.permute.xlu0 %1780
    %1783 = vrot.lane.b32.xlu0 %v1260, 116
    %v1784 = vpop.permute.xlu0 %1783
    %v1786 = vsel %vm277, %v1781, %v1784
    %v1788 = vsel %vm396, %v1786, 0
    %1790 = vmatprep.subr.mxu0 0.0
    %1791 = vmatpush1.msra.mxu0 %v508
    %1792 = vmatprep.subr.mxu0 0.0
    %1793 = vmatpush1.msra.mxu0 %v509
    %1794 = vmatprep.subr.mxu0 0.0
    %1795 = vmatpush1.msra.mxu0 %v510
    %1796 = vmatprep.subr.mxu0 0.0
    %1797 = vmatpush1.msra.mxu0 0.0
    %1798 = vmatprep.subr.mxu0 0.0
    %1799 = vmatpush1.msra.mxu0 0.0
    %1800 = vmatprep.subr.mxu0 0.0
    %1801 = vmatpush1.msra.mxu0 0.0
    %1802 = vmatprep.subr.mxu0 0.0
    %1803 = vmatpush1.msra.mxu0 0.0
    %1804 = vmatprep.subr.mxu0 0.0
    %1805 = vmatpush1.msra.mxu0 0.0
    %1806 = vmatprep.subr.mxu0 0.0
    %1807 = vmatpush1.msra.mxu0 0.0
    %1808 = vmatprep.subr.mxu0 0.0
    %1809 = vmatpush1.msra.mxu0 0.0
    %1810 = vmatprep.subr.mxu0 0.0
    %1811 = vmatpush1.msra.mxu0 0.0
    %1812 = vmatprep.subr.mxu0 0.0
    %1813 = vmatpush1.msra.mxu0 0.0
    %1814 = vmatprep.subr.mxu0 0.0
    %1815 = vmatpush1.msra.mxu0 0.0
    %1816 = vmatprep.subr.mxu0 0.0
    %1817 = vmatpush1.msra.mxu0 0.0
    %1818 = vmatprep.subr.mxu0 0.0
    %1819 = vmatpush1.msra.mxu0 0.0
    %1820 = vmatprep.subr.mxu0 0.0
    %1821 = vmatpush1.msra.mxu0 0.0
    %1822 = vmatprep.subr.mxu0 0.0
    %1823 = vmatpush1.msra.mxu0 0.0
    %1824 = vmatprep.subr.mxu0 0.0
    %1825 = vmatpush1.msra.mxu0 0.0
    %1826 = vmatprep.subr.mxu0 0.0
    %1827 = vmatpush1.msra.mxu0 0.0
    %1828 = vmatprep.subr.mxu0 0.0
    %1829 = vmatpush1.msra.mxu0 0.0
    %1830 = vmatprep.subr.mxu0 0.0
    %1831 = vmatpush1.msra.mxu0 0.0
    %1832 = vmatprep.subr.mxu0 0.0
    %1833 = vmatpush1.msra.mxu0 0.0
    %1834 = vmatprep.subr.mxu0 0.0
    %1835 = vmatpush1.msra.mxu0 0.0
    %1836 = vmatprep.subr.mxu0 0.0
    %1837 = vmatpush1.msra.mxu0 0.0
    %1838 = vmatprep.subr.mxu0 0.0
    %1839 = vmatpush1.msra.mxu0 0.0
    %1840 = vmatprep.subr.mxu0 0.0
    %1841 = vmatpush1.msra.mxu0 0.0
    %1842 = vmatprep.subr.mxu0 0.0
    %1843 = vmatpush1.msra.mxu0 0.0
    %1844 = vmatprep.subr.mxu0 0.0
    %1845 = vmatpush1.msra.mxu0 0.0
    %1846 = vmatprep.subr.mxu0 0.0
    %1847 = vmatpush1.msra.mxu0 0.0
    %1848 = vmatprep.subr.mxu0 0.0
    %1849 = vmatpush1.msra.mxu0 0.0
    %1850 = vmatprep.subr.mxu0 0.0
    %1851 = vmatpush1.msra.mxu0 0.0
    %1852 = vmatprep.subr.mxu0 0.0
    %1853 = vmatpush1.msra.mxu0 0.0
    %1854 = vmatprep.mubr.f32.mxu0 0.0
    %1855 = vmatmul.mubr.f32.gmra.mrb[0].mxu0 %v1788
    %v1856 = vpop.f32.mrb[0].mxu0
    %v1857 = vadd.f32 %v229, %v1856
    %v1858 = vpop.f32.mrb[0].mxu0
    %1859 = vdwg.mxu0
    %v1860 = vxor.u32 %v1857, 2147483648
    %v1861 = vmul.f32 %v1860, 1.442695
    %v1862 = vpow.pop %v1861
    %v1863 = vadd.f32 %v1862, 1.0
    %v1864 = vrcp.pop %v1863
    %v1865 = vmul.f32 1.0, %v1864
    %v1866 = vtanh.pop %v1857
    %v1867 = vmul.f32 %v1865, %v1254
    %1869 = vrot.lane.b32.xlu0 %v1866, 92
    %v1870 = vpop.permute.xlu0 %1869
    %v1872 = vmul.f32 %v1865, %v1870
    %1874 = vrot.lane.b32.xlu0 %v1872, 12
    %v1875 = vpop.permute.xlu0 %1874
    %v1877 = vadd.f32 %v1867, %v1875
    %v1878 = vtanh.pop %v1877
    %1880 = vrot.lane.b32.xlu0 %v1878, 12
    %v1881 = vpop.permute.xlu0 %1880
    %v1883 = vmul.f32 %v1865, %v1881
    %1885 = vrot.lane.b32.xlu0 %v1883, 104
    %v1886 = vpop.permute.xlu0 %1885
    %1888 = vrot.lane.b32.xlu0 %v1365, 116
    %v1889 = vpop.permute.xlu0 %1888
    %v1891 = vsel %vm277, %v1886, %v1889
    %v1893 = vsel %vm396, %v1891, 0
    %1895 = vmatprep.subr.mxu0 0.0
    %1896 = vmatpush1.msra.mxu0 %v622
    %1897 = vmatprep.subr.mxu0 0.0
    %1898 = vmatpush1.msra.mxu0 %v623
    %1899 = vmatprep.subr.mxu0 0.0
    %1900 = vmatpush1.msra.mxu0 %v624
    %1901 = vmatprep.subr.mxu0 0.0
    %1902 = vmatpush1.msra.mxu0 0.0
    %1903 = vmatprep.subr.mxu0 0.0
    %1904 = vmatpush1.msra.mxu0 0.0
    %1905 = vmatprep.subr.mxu0 0.0
    %1906 = vmatpush1.msra.mxu0 0.0
    %1907 = vmatprep.subr.mxu0 0.0
    %1908 = vmatpush1.msra.mxu0 0.0
    %1909 = vmatprep.subr.mxu0 0.0
    %1910 = vmatpush1.msra.mxu0 0.0
    %1911 = vmatprep.subr.mxu0 0.0
    %1912 = vmatpush1.msra.mxu0 0.0
    %1913 = vmatprep.subr.mxu0 0.0
    %1914 = vmatpush1.msra.mxu0 0.0
    %1915 = vmatprep.subr.mxu0 0.0
    %1916 = vmatpush1.msra.mxu0 0.0
    %1917 = vmatprep.subr.mxu0 0.0
    %1918 = vmatpush1.msra.mxu0 0.0
    %1919 = vmatprep.subr.mxu0 0.0
    %1920 = vmatpush1.msra.mxu0 0.0
    %1921 = vmatprep.subr.mxu0 0.0
    %1922 = vmatpush1.msra.mxu0 0.0
    %1923 = vmatprep.subr.mxu0 0.0
    %1924 = vmatpush1.msra.mxu0 0.0
    %1925 = vmatprep.subr.mxu0 0.0
    %1926 = vmatpush1.msra.mxu0 0.0
    %1927 = vmatprep.subr.mxu0 0.0
    %1928 = vmatpush1.msra.mxu0 0.0
    %1929 = vmatprep.subr.mxu0 0.0
    %1930 = vmatpush1.msra.mxu0 0.0
    %1931 = vmatprep.subr.mxu0 0.0
    %1932 = vmatpush1.msra.mxu0 0.0
    %1933 = vmatprep.subr.mxu0 0.0
    %1934 = vmatpush1.msra.mxu0 0.0
    %1935 = vmatprep.subr.mxu0 0.0
    %1936 = vmatpush1.msra.mxu0 0.0
    %1937 = vmatprep.subr.mxu0 0.0
    %1938 = vmatpush1.msra.mxu0 0.0
    %1939 = vmatprep.subr.mxu0 0.0
    %1940 = vmatpush1.msra.mxu0 0.0
    %1941 = vmatprep.subr.mxu0 0.0
    %1942 = vmatpush1.msra.mxu0 0.0
    %1943 = vmatprep.subr.mxu0 0.0
    %1944 = vmatpush1.msra.mxu0 0.0
    %1945 = vmatprep.subr.mxu0 0.0
    %1946 = vmatpush1.msra.mxu0 0.0
    %1947 = vmatprep.subr.mxu0 0.0
    %1948 = vmatpush1.msra.mxu0 0.0
    %1949 = vmatprep.subr.mxu0 0.0
    %1950 = vmatpush1.msra.mxu0 0.0
    %1951 = vmatprep.subr.mxu0 0.0
    %1952 = vmatpush1.msra.mxu0 0.0
    %1953 = vmatprep.subr.mxu0 0.0
    %1954 = vmatpush1.msra.mxu0 0.0
    %1955 = vmatprep.subr.mxu0 0.0
    %1956 = vmatpush1.msra.mxu0 0.0
    %1957 = vmatprep.subr.mxu0 0.0
    %1958 = vmatpush1.msra.mxu0 0.0
    %1959 = vmatprep.mubr.f32.mxu0 0.0
    %1960 = vmatmul.mubr.f32.gmra.mrb[0].mxu0 %v1893
    %v1961 = vpop.f32.mrb[0].mxu0
    %v1962 = vadd.f32 %v237, %v1961
    %v1963 = vpop.f32.mrb[0].mxu0
    %1964 = vdwg.mxu0
    %v1965 = vxor.u32 %v1962, 2147483648
    %v1966 = vmul.f32 %v1965, 1.442695
    %v1967 = vpow.pop %v1966
    %v1968 = vadd.f32 %v1967, 1.0
    %v1969 = vrcp.pop %v1968
    %v1970 = vmul.f32 1.0, %v1969
    %v1971 = vtanh.pop %v1962
    %v1972 = vmul.f32 %v1970, %v1359
    %1974 = vrot.lane.b32.xlu0 %v1971, 92
    %v1975 = vpop.permute.xlu0 %1974
    %v1977 = vmul.f32 %v1970, %v1975
    %1979 = vrot.lane.b32.xlu0 %v1977, 12
    %v1980 = vpop.permute.xlu0 %1979
    %v1982 = vadd.f32 %v1972, %v1980
    %v1983 = vtanh.pop %v1982
    %1985 = vrot.lane.b32.xlu0 %v1983, 12
    %v1986 = vpop.permute.xlu0 %1985
    %v1988 = vmul.f32 %v1970, %v1986
    %1990 = vrot.lane.b32.xlu0 %v1988, 104
    %v1991 = vpop.permute.xlu0 %1990
    %1993 = vrot.lane.b32.xlu0 %v1470, 116
    %v1994 = vpop.permute.xlu0 %1993
    %v1996 = vsel %vm277, %v1991, %v1994
    %v1998 = vsel %vm396, %v1996, 0
    %2000 = vmatprep.subr.mxu0 0.0
    %2001 = vmatpush1.msra.mxu0 %v736
    %2002 = vmatprep.subr.mxu0 0.0
    %2003 = vmatpush1.msra.mxu0 %v737
    %2004 = vmatprep.subr.mxu0 0.0
    %2005 = vmatpush1.msra.mxu0 %v738
    %2006 = vmatprep.subr.mxu0 0.0
    %2007 = vmatpush1.msra.mxu0 0.0
    %2008 = vmatprep.subr.mxu0 0.0
    %2009 = vmatpush1.msra.mxu0 0.0
    %2010 = vmatprep.subr.mxu0 0.0
    %2011 = vmatpush1.msra.mxu0 0.0
    %2012 = vmatprep.subr.mxu0 0.0
    %2013 = vmatpush1.msra.mxu0 0.0
    %2014 = vmatprep.subr.mxu0 0.0
    %2015 = vmatpush1.msra.mxu0 0.0
    %2016 = vmatprep.subr.mxu0 0.0
    %2017 = vmatpush1.msra.mxu0 0.0
    %2018 = vmatprep.subr.mxu0 0.0
    %2019 = vmatpush1.msra.mxu0 0.0
    %2020 = vmatprep.subr.mxu0 0.0
    %2021 = vmatpush1.msra.mxu0 0.0
    %2022 = vmatprep.subr.mxu0 0.0
    %2023 = vmatpush1.msra.mxu0 0.0
    %2024 = vmatprep.subr.mxu0 0.0
    %2025 = vmatpush1.msra.mxu0 0.0
    %2026 = vmatprep.subr.mxu0 0.0
    %2027 = vmatpush1.msra.mxu0 0.0
    %2028 = vmatprep.subr.mxu0 0.0
    %2029 = vmatpush1.msra.mxu0 0.0
    %2030 = vmatprep.subr.mxu0 0.0
    %2031 = vmatpush1.msra.mxu0 0.0
    %2032 = vmatprep.subr.mxu0 0.0
    %2033 = vmatpush1.msra.mxu0 0.0
    %2034 = vmatprep.subr.mxu0 0.0
    %2035 = vmatpush1.msra.mxu0 0.0
    %2036 = vmatprep.subr.mxu0 0.0
    %2037 = vmatpush1.msra.mxu0 0.0
    %2038 = vmatprep.subr.mxu0 0.0
    %2039 = vmatpush1.msra.mxu0 0.0
    %2040 = vmatprep.subr.mxu0 0.0
    %2041 = vmatpush1.msra.mxu0 0.0
    %2042 = vmatprep.subr.mxu0 0.0
    %2043 = vmatpush1.msra.mxu0 0.0
    %2044 = vmatprep.subr.mxu0 0.0
    %2045 = vmatpush1.msra.mxu0 0.0
    %2046 = vmatprep.subr.mxu0 0.0
    %2047 = vmatpush1.msra.mxu0 0.0
    %2048 = vmatprep.subr.mxu0 0.0
    %2049 = vmatpush1.msra.mxu0 0.0
    %2050 = vmatprep.subr.mxu0 0.0
    %2051 = vmatpush1.msra.mxu0 0.0
    %2052 = vmatprep.subr.mxu0 0.0
    %2053 = vmatpush1.msra.mxu0 0.0
    %2054 = vmatprep.subr.mxu0 0.0
    %2055 = vmatpush1.msra.mxu0 0.0
    %2056 = vmatprep.subr.mxu0 0.0
    %2057 = vmatpush1.msra.mxu0 0.0
    %2058 = vmatprep.subr.mxu0 0.0
    %2059 = vmatpush1.msra.mxu0 0.0
    %2060 = vmatprep.subr.mxu0 0.0
    %2061 = vmatpush1.msra.mxu0 0.0
    %2062 = vmatprep.subr.mxu0 0.0
    %2063 = vmatpush1.msra.mxu0 0.0
    %2064 = vmatprep.mubr.f32.mxu0 0.0
    %2065 = vmatmul.mubr.f32.gmra.mrb[0].mxu0 %v1998
    %v2066 = vpop.f32.mrb[0].mxu0
    %v2067 = vadd.f32 %v245, %v2066
    %v2068 = vpop.f32.mrb[0].mxu0
    %2069 = vdwg.mxu0
    %v2070 = vxor.u32 %v2067, 2147483648
    %v2071 = vmul.f32 %v2070, 1.442695
    %v2072 = vpow.pop %v2071
    %v2073 = vadd.f32 %v2072, 1.0
    %v2074 = vrcp.pop %v2073
    %v2075 = vmul.f32 1.0, %v2074
    %v2076 = vtanh.pop %v2067
    %v2077 = vmul.f32 %v2075, %v1464
    %2079 = vrot.lane.b32.xlu0 %v2076, 92
    %v2080 = vpop.permute.xlu0 %2079
    %v2082 = vmul.f32 %v2075, %v2080
    %2084 = vrot.lane.b32.xlu0 %v2082, 12
    %v2085 = vpop.permute.xlu0 %2084
    %v2087 = vadd.f32 %v2077, %v2085
    %v2088 = vtanh.pop %v2087
    %2090 = vrot.lane.b32.xlu0 %v2088, 12
    %v2091 = vpop.permute.xlu0 %2090
    %v2093 = vmul.f32 %v2075, %v2091
    %2095 = vrot.lane.b32.xlu0 %v2093, 104
    %v2096 = vpop.permute.xlu0 %2095
    %2099 = vrot.lane.b32.xlu0 %v1576, 116
    %v2100 = vpop.permute.xlu0 %2099
    %v2102 = vsel %vm277, %v2096, %v2100
    %v2104 = vsel %vm396, %v2102, 0
    %2106 = vmatprep.subr.mxu0 0.0
    %2107 = vmatpush1.msra.mxu0 %v850
    %2108 = vmatprep.subr.mxu0 0.0
    %2109 = vmatpush1.msra.mxu0 %v851
    %2110 = vmatprep.subr.mxu0 0.0
    %2111 = vmatpush1.msra.mxu0 %v852
    %2112 = vmatprep.subr.mxu0 0.0
    %2113 = vmatpush1.msra.mxu0 0.0
    %2114 = vmatprep.subr.mxu0 0.0
    %2115 = vmatpush1.msra.mxu0 0.0
    %2116 = vmatprep.subr.mxu0 0.0
    %2117 = vmatpush1.msra.mxu0 0.0
    %2118 = vmatprep.subr.mxu0 0.0
    %2119 = vmatpush1.msra.mxu0 0.0
    %2120 = vmatprep.subr.mxu0 0.0
    %2121 = vmatpush1.msra.mxu0 0.0
    %2122 = vmatprep.subr.mxu0 0.0
    %2123 = vmatpush1.msra.mxu0 0.0
    %2124 = vmatprep.subr.mxu0 0.0
    %2125 = vmatpush1.msra.mxu0 0.0
    %2126 = vmatprep.subr.mxu0 0.0
    %2127 = vmatpush1.msra.mxu0 0.0
    %2128 = vmatprep.subr.mxu0 0.0
    %2129 = vmatpush1.msra.mxu0 0.0
    %2130 = vmatprep.subr.mxu0 0.0
    %2131 = vmatpush1.msra.mxu0 0.0
    %2132 = vmatprep.subr.mxu0 0.0
    %2133 = vmatpush1.msra.mxu0 0.0
    %2134 = vmatprep.subr.mxu0 0.0
    %2135 = vmatpush1.msra.mxu0 0.0
    %2136 = vmatprep.subr.mxu0 0.0
    %2137 = vmatpush1.msra.mxu0 0.0
    %2138 = vmatprep.subr.mxu0 0.0
    %2139 = vmatpush1.msra.mxu0 0.0
    %2140 = vmatprep.subr.mxu0 0.0
    %2141 = vmatpush1.msra.mxu0 0.0
    %2142 = vmatprep.subr.mxu0 0.0
    %2143 = vmatpush1.msra.mxu0 0.0
    %2144 = vmatprep.subr.mxu0 0.0
    %2145 = vmatpush1.msra.mxu0 0.0
    %2146 = vmatprep.subr.mxu0 0.0
    %2147 = vmatpush1.msra.mxu0 0.0
    %2148 = vmatprep.subr.mxu0 0.0
    %2149 = vmatpush1.msra.mxu0 0.0
    %2150 = vmatprep.subr.mxu0 0.0
    %2151 = vmatpush1.msra.mxu0 0.0
    %2152 = vmatprep.subr.mxu0 0.0
    %2153 = vmatpush1.msra.mxu0 0.0
    %2154 = vmatprep.subr.mxu0 0.0
    %2155 = vmatpush1.msra.mxu0 0.0
    %2156 = vmatprep.subr.mxu0 0.0
    %2157 = vmatpush1.msra.mxu0 0.0
    %2158 = vmatprep.subr.mxu0 0.0
    %2159 = vmatpush1.msra.mxu0 0.0
    %2160 = vmatprep.subr.mxu0 0.0
    %2161 = vmatpush1.msra.mxu0 0.0
    %2162 = vmatprep.subr.mxu0 0.0
    %2163 = vmatpush1.msra.mxu0 0.0
    %2164 = vmatprep.subr.mxu0 0.0
    %2165 = vmatpush1.msra.mxu0 0.0
    %2166 = vmatprep.subr.mxu0 0.0
    %2167 = vmatpush1.msra.mxu0 0.0
    %2168 = vmatprep.subr.mxu0 0.0
    %2169 = vmatpush1.msra.mxu0 0.0
    %2170 = vmatprep.mubr.f32.mxu0 0.0
    %2171 = vmatmul.mubr.f32.gmra.mrb[0].mxu0 %v2104
    %v2172 = vpop.f32.mrb[0].mxu0
    %v2173 = vadd.f32 %v253, %v2172
    %v2174 = vpop.f32.mrb[0].mxu0
    %2175 = vdwg.mxu0
    %v2176 = vxor.u32 %v2173, 2147483648
    %v2177 = vmul.f32 %v2176, 1.442695
    %v2178 = vpow.pop %v2177
    %v2179 = vadd.f32 %v2178, 1.0
    %v2180 = vrcp.pop %v2179
    %v2181 = vmul.f32 1.0, %v2180
    %v2182 = vtanh.pop %v2173
    %v2183 = vmul.f32 %v2181, %v1570
    %2185 = vrot.lane.b32.xlu0 %v2182, 92
    %v2186 = vpop.permute.xlu0 %2185
    %v2188 = vmul.f32 %v2181, %v2186
    %2190 = vrot.lane.b32.xlu0 %v2188, 12
    %v2191 = vpop.permute.xlu0 %2190
    %v2193 = vadd.f32 %v2183, %v2191
    %v2194 = vtanh.pop %v2193
    %2196 = vrot.lane.b32.xlu0 %v2194, 12
    %v2197 = vpop.permute.xlu0 %2196
    %v2199 = vmul.f32 %v2181, %v2197
    %v2200 = vsel %vm277, %v1676, 0
    %2202 = vmatprep.subr.mxu0 0.0
    %2203 = vmatpush1.msra.mxu0 %v214
    %2204 = vmatprep.subr.mxu0 0.0
    %2205 = vmatpush1.msra.mxu0 %v283
    %2206 = vmatprep.subr.mxu0 0.0
    %2207 = vmatpush1.msra.mxu0 0.0
    %2208 = vmatprep.subr.mxu0 0.0
    %2209 = vmatpush1.msra.mxu0 0.0
    %2210 = vmatprep.subr.mxu0 0.0
    %2211 = vmatpush1.msra.mxu0 0.0
    %2212 = vmatprep.subr.mxu0 0.0
    %2213 = vmatpush1.msra.mxu0 0.0
    %2214 = vmatprep.subr.mxu0 0.0
    %2215 = vmatpush1.msra.mxu0 0.0
    %2216 = vmatprep.subr.mxu0 0.0
    %2217 = vmatpush1.msra.mxu0 0.0
    %2218 = vmatprep.subr.mxu0 0.0
    %2219 = vmatpush1.msra.mxu0 0.0
    %2220 = vmatprep.subr.mxu0 0.0
    %2221 = vmatpush1.msra.mxu0 0.0
    %2222 = vmatprep.subr.mxu0 0.0
    %2223 = vmatpush1.msra.mxu0 0.0
    %2224 = vmatprep.subr.mxu0 0.0
    %2225 = vmatpush1.msra.mxu0 0.0
    %2226 = vmatprep.subr.mxu0 0.0
    %2227 = vmatpush1.msra.mxu0 0.0
    %2228 = vmatprep.subr.mxu0 0.0
    %2229 = vmatpush1.msra.mxu0 0.0
    %2230 = vmatprep.subr.mxu0 0.0
    %2231 = vmatpush1.msra.mxu0 0.0
    %2232 = vmatprep.subr.mxu0 0.0
    %2233 = vmatpush1.msra.mxu0 0.0
    %2234 = vmatprep.subr.mxu0 0.0
    %2235 = vmatpush1.msra.mxu0 0.0
    %2236 = vmatprep.subr.mxu0 0.0
    %2237 = vmatpush1.msra.mxu0 0.0
    %2238 = vmatprep.subr.mxu0 0.0
    %2239 = vmatpush1.msra.mxu0 0.0
    %2240 = vmatprep.subr.mxu0 0.0
    %2241 = vmatpush1.msra.mxu0 0.0
    %2242 = vmatprep.subr.mxu0 0.0
    %2243 = vmatpush1.msra.mxu0 0.0
    %2244 = vmatprep.subr.mxu0 0.0
    %2245 = vmatpush1.msra.mxu0 0.0
    %2246 = vmatprep.subr.mxu0 0.0
    %2247 = vmatpush1.msra.mxu0 0.0
    %2248 = vmatprep.subr.mxu0 0.0
    %2249 = vmatpush1.msra.mxu0 0.0
    %2250 = vmatprep.subr.mxu0 0.0
    %2251 = vmatpush1.msra.mxu0 0.0
    %2252 = vmatprep.subr.mxu0 0.0
    %2253 = vmatpush1.msra.mxu0 0.0
    %2254 = vmatprep.subr.mxu0 0.0
    %2255 = vmatpush1.msra.mxu0 0.0
    %2256 = vmatprep.subr.mxu0 0.0
    %2257 = vmatpush1.msra.mxu0 0.0
    %2258 = vmatprep.subr.mxu0 0.0
    %2259 = vmatpush1.msra.mxu0 0.0
    %2260 = vmatprep.subr.mxu0 0.0
    %2261 = vmatpush1.msra.mxu0 0.0
    %2262 = vmatprep.subr.mxu0 0.0
    %2263 = vmatpush1.msra.mxu0 0.0
    %2264 = vmatprep.subr.mxu0 0.0
    %2265 = vmatpush1.msra.mxu0 0.0
    %2266 = vmatprep.mubr.f32.mxu0 0.0
    %2267 = vmatmul.mubr.f32.gmra.mrb[0].mxu0 %v2200
    %v2268 = vpop.f32.mrb[0].mxu0
    %v2269 = vadd.f32 0.0, %v2268
    %v2270 = vpop.f32.mrb[0].mxu0
    %2271 = vdwg.mxu0
    %v2272 = vadd.f32 %v206, %v2269
    %v2273 = vxor.u32 %v2272, 2147483648
    %v2274 = vmul.f32 %v2273, 1.442695
    %v2275 = vpow.pop %v2274
    %v2276 = vadd.f32 %v2275, 1.0
    %v2277 = vrcp.pop %v2276
    %v2278 = vmul.f32 1.0, %v2277
    %v2279 = vtanh.pop %v2272
    %v2280 = vmul.f32 %v2278, %v1667
    %2282 = vrot.lane.b32.xlu0 %v2279, 92
    %v2283 = vpop.permute.xlu0 %2282
    %v2285 = vmul.f32 %v2278, %v2283
    %2287 = vrot.lane.b32.xlu0 %v2285, 12
    %v2288 = vpop.permute.xlu0 %2287
    %v2290 = vadd.f32 %v2280, %v2288
    %v2291 = vtanh.pop %v2290
    %2293 = vrot.lane.b32.xlu0 %v2291, 12
    %v2294 = vpop.permute.xlu0 %2293
    %v2296 = vmul.f32 %v2278, %v2294
    %2298 = vrot.lane.b32.xlu0 %v2296, 104
    %v2299 = vpop.permute.xlu0 %2298
    %2301 = vrot.lane.b32.xlu0 %v1778, 116
    %v2302 = vpop.permute.xlu0 %2301
    %v2304 = vsel %vm277, %v2299, %v2302
    %v2306 = vsel %vm396, %v2304, 0
    %2308 = vmatprep.subr.mxu0 0.0
    %2309 = vmatpush1.msra.mxu0 %v393
    %2310 = vmatprep.subr.mxu0 0.0
    %2311 = vmatpush1.msra.mxu0 %v394
    %2312 = vmatprep.subr.mxu0 0.0
    %2313 = vmatpush1.msra.mxu0 %v395
    %2314 = vmatprep.subr.mxu0 0.0
    %2315 = vmatpush1.msra.mxu0 0.0
    %2316 = vmatprep.subr.mxu0 0.0
    %2317 = vmatpush1.msra.mxu0 0.0
    %2318 = vmatprep.subr.mxu0 0.0
    %2319 = vmatpush1.msra.mxu0 0.0
    %2320 = vmatprep.subr.mxu0 0.0
    %2321 = vmatpush1.msra.mxu0 0.0
    %2322 = vmatprep.subr.mxu0 0.0
    %2323 = vmatpush1.msra.mxu0 0.0
    %2324 = vmatprep.subr.mxu0 0.0
    %2325 = vmatpush1.msra.mxu0 0.0
    %2326 = vmatprep.subr.mxu0 0.0
    %2327 = vmatpush1.msra.mxu0 0.0
    %2328 = vmatprep.subr.mxu0 0.0
    %2329 = vmatpush1.msra.mxu0 0.0
    %2330 = vmatprep.subr.mxu0 0.0
    %2331 = vmatpush1.msra.mxu0 0.0
    %2332 = vmatprep.subr.mxu0 0.0
    %2333 = vmatpush1.msra.mxu0 0.0
    %2334 = vmatprep.subr.mxu0 0.0
    %2335 = vmatpush1.msra.mxu0 0.0
    %2336 = vmatprep.subr.mxu0 0.0
    %2337 = vmatpush1.msra.mxu0 0.0
    %2338 = vmatprep.subr.mxu0 0.0
    %2339 = vmatpush1.msra.mxu0 0.0
    %2340 = vmatprep.subr.mxu0 0.0
    %2341 = vmatpush1.msra.mxu0 0.0
    %2342 = vmatprep.subr.mxu0 0.0
    %2343 = vmatpush1.msra.mxu0 0.0
    %2344 = vmatprep.subr.mxu0 0.0
    %2345 = vmatpush1.msra.mxu0 0.0
    %2346 = vmatprep.subr.mxu0 0.0
    %2347 = vmatpush1.msra.mxu0 0.0
    %2348 = vmatprep.subr.mxu0 0.0
    %2349 = vmatpush1.msra.mxu0 0.0
    %2350 = vmatprep.subr.mxu0 0.0
    %2351 = vmatpush1.msra.mxu0 0.0
    %2352 = vmatprep.subr.mxu0 0.0
    %2353 = vmatpush1.msra.mxu0 0.0
    %2354 = vmatprep.subr.mxu0 0.0
    %2355 = vmatpush1.msra.mxu0 0.0
    %2356 = vmatprep.subr.mxu0 0.0
    %2357 = vmatpush1.msra.mxu0 0.0
    %2358 = vmatprep.subr.mxu0 0.0
    %2359 = vmatpush1.msra.mxu0 0.0
    %2360 = vmatprep.subr.mxu0 0.0
    %2361 = vmatpush1.msra.mxu0 0.0
    %2362 = vmatprep.subr.mxu0 0.0
    %2363 = vmatpush1.msra.mxu0 0.0
    %2364 = vmatprep.subr.mxu0 0.0
    %2365 = vmatpush1.msra.mxu0 0.0
    %2366 = vmatprep.subr.mxu0 0.0
    %2367 = vmatpush1.msra.mxu0 0.0
    %2368 = vmatprep.subr.mxu0 0.0
    %2369 = vmatpush1.msra.mxu0 0.0
    %2370 = vmatprep.subr.mxu0 0.0
    %2371 = vmatpush1.msra.mxu0 0.0
    %2372 = vmatprep.mubr.f32.mxu0 0.0
    %2373 = vmatmul.mubr.f32.gmra.mrb[0].mxu0 %v2306
    %v2374 = vpop.f32.mrb[0].mxu0
    %v2375 = vadd.f32 %v221, %v2374
    %v2376 = vpop.f32.mrb[0].mxu0
    %2377 = vdwg.mxu0
    %v2378 = vxor.u32 %v2375, 2147483648
    %v2379 = vmul.f32 %v2378, 1.442695
    %v2380 = vpow.pop %v2379
    %v2381 = vadd.f32 %v2380, 1.0
    %v2382 = vrcp.pop %v2381
    %v2383 = vmul.f32 1.0, %v2382
    %v2384 = vtanh.pop %v2375
    %v2385 = vmul.f32 %v2383, %v1772
    %2387 = vrot.lane.b32.xlu0 %v2384, 92
    %v2388 = vpop.permute.xlu0 %2387
    %v2390 = vmul.f32 %v2383, %v2388
    %2392 = vrot.lane.b32.xlu0 %v2390, 12
    %v2393 = vpop.permute.xlu0 %2392
    %v2395 = vadd.f32 %v2385, %v2393
    %v2396 = vtanh.pop %v2395
    %2398 = vrot.lane.b32.xlu0 %v2396, 12
    %v2399 = vpop.permute.xlu0 %2398
    %v2401 = vmul.f32 %v2383, %v2399
    %2403 = vrot.lane.b32.xlu0 %v2401, 104
    %v2404 = vpop.permute.xlu0 %2403
    %2406 = vrot.lane.b32.xlu0 %v1883, 116
    %v2407 = vpop.permute.xlu0 %2406
    %v2409 = vsel %vm277, %v2404, %v2407
    %v2411 = vsel %vm396, %v2409, 0
    %2413 = vmatprep.subr.mxu0 0.0
    %2414 = vmatpush1.msra.mxu0 %v508
    %2415 = vmatprep.subr.mxu0 0.0
    %2416 = vmatpush1.msra.mxu0 %v509
    %2417 = vmatprep.subr.mxu0 0.0
    %2418 = vmatpush1.msra.mxu0 %v510
    %2419 = vmatprep.subr.mxu0 0.0
    %2420 = vmatpush1.msra.mxu0 0.0
    %2421 = vmatprep.subr.mxu0 0.0
    %2422 = vmatpush1.msra.mxu0 0.0
    %2423 = vmatprep.subr.mxu0 0.0
    %2424 = vmatpush1.msra.mxu0 0.0
    %2425 = vmatprep.subr.mxu0 0.0
    %2426 = vmatpush1.msra.mxu0 0.0
    %2427 = vmatprep.subr.mxu0 0.0
    %2428 = vmatpush1.msra.mxu0 0.0
    %2429 = vmatprep.subr.mxu0 0.0
    %2430 = vmatpush1.msra.mxu0 0.0
    %2431 = vmatprep.subr.mxu0 0.0
    %2432 = vmatpush1.msra.mxu0 0.0
    %2433 = vmatprep.subr.mxu0 0.0
    %2434 = vmatpush1.msra.mxu0 0.0
    %2435 = vmatprep.subr.mxu0 0.0
    %2436 = vmatpush1.msra.mxu0 0.0
    %2437 = vmatprep.subr.mxu0 0.0
    %2438 = vmatpush1.msra.mxu0 0.0
    %2439 = vmatprep.subr.mxu0 0.0
    %2440 = vmatpush1.msra.mxu0 0.0
    %2441 = vmatprep.subr.mxu0 0.0
    %2442 = vmatpush1.msra.mxu0 0.0
    %2443 = vmatprep.subr.mxu0 0.0
    %2444 = vmatpush1.msra.mxu0 0.0
    %2445 = vmatprep.subr.mxu0 0.0
    %2446 = vmatpush1.msra.mxu0 0.0
    %2447 = vmatprep.subr.mxu0 0.0
    %2448 = vmatpush1.msra.mxu0 0.0
    %2449 = vmatprep.subr.mxu0 0.0
    %2450 = vmatpush1.msra.mxu0 0.0
    %2451 = vmatprep.subr.mxu0 0.0
    %2452 = vmatpush1.msra.mxu0 0.0
    %2453 = vmatprep.subr.mxu0 0.0
    %2454 = vmatpush1.msra.mxu0 0.0
    %2455 = vmatprep.subr.mxu0 0.0
    %2456 = vmatpush1.msra.mxu0 0.0
    %2457 = vmatprep.subr.mxu0 0.0
    %2458 = vmatpush1.msra.mxu0 0.0
    %2459 = vmatprep.subr.mxu0 0.0
    %2460 = vmatpush1.msra.mxu0 0.0
    %2461 = vmatprep.subr.mxu0 0.0
    %2462 = vmatpush1.msra.mxu0 0.0
    %2463 = vmatprep.subr.mxu0 0.0
    %2464 = vmatpush1.msra.mxu0 0.0
    %2465 = vmatprep.subr.mxu0 0.0
    %2466 = vmatpush1.msra.mxu0 0.0
    %2467 = vmatprep.subr.mxu0 0.0
    %2468 = vmatpush1.msra.mxu0 0.0
    %2469 = vmatprep.subr.mxu0 0.0
    %2470 = vmatpush1.msra.mxu0 0.0
    %2471 = vmatprep.subr.mxu0 0.0
    %2472 = vmatpush1.msra.mxu0 0.0
    %2473 = vmatprep.subr.mxu0 0.0
    %2474 = vmatpush1.msra.mxu0 0.0
    %2475 = vmatprep.subr.mxu0 0.0
    %2476 = vmatpush1.msra.mxu0 0.0
    %2477 = vmatprep.mubr.f32.mxu0 0.0
    %2478 = vmatmul.mubr.f32.gmra.mrb[0].mxu0 %v2411
    %v2479 = vpop.f32.mrb[0].mxu0
    %v2480 = vadd.f32 %v229, %v2479
    %v2481 = vpop.f32.mrb[0].mxu0
    %2482 = vdwg.mxu0
    %v2483 = vxor.u32 %v2480, 2147483648
    %v2484 = vmul.f32 %v2483, 1.442695
    %v2485 = vpow.pop %v2484
    %v2486 = vadd.f32 %v2485, 1.0
    %v2487 = vrcp.pop %v2486
    %v2488 = vmul.f32 1.0, %v2487
    %v2489 = vtanh.pop %v2480
    %v2490 = vmul.f32 %v2488, %v1877
    %2492 = vrot.lane.b32.xlu0 %v2489, 92
    %v2493 = vpop.permute.xlu0 %2492
    %v2495 = vmul.f32 %v2488, %v2493
    %2497 = vrot.lane.b32.xlu0 %v2495, 12
    %v2498 = vpop.permute.xlu0 %2497
    %v2500 = vadd.f32 %v2490, %v2498
    %v2501 = vtanh.pop %v2500
    %2503 = vrot.lane.b32.xlu0 %v2501, 12
    %v2504 = vpop.permute.xlu0 %2503
    %v2506 = vmul.f32 %v2488, %v2504
    %2508 = vrot.lane.b32.xlu0 %v2506, 104
    %v2509 = vpop.permute.xlu0 %2508
    %2511 = vrot.lane.b32.xlu0 %v1988, 116
    %v2512 = vpop.permute.xlu0 %2511
    %v2514 = vsel %vm277, %v2509, %v2512
    %v2516 = vsel %vm396, %v2514, 0
    %2518 = vmatprep.subr.mxu0 0.0
    %2519 = vmatpush1.msra.mxu0 %v622
    %2520 = vmatprep.subr.mxu0 0.0
    %2521 = vmatpush1.msra.mxu0 %v623
    %2522 = vmatprep.subr.mxu0 0.0
    %2523 = vmatpush1.msra.mxu0 %v624
    %2524 = vmatprep.subr.mxu0 0.0
    %2525 = vmatpush1.msra.mxu0 0.0
    %2526 = vmatprep.subr.mxu0 0.0
    %2527 = vmatpush1.msra.mxu0 0.0
    %2528 = vmatprep.subr.mxu0 0.0
    %2529 = vmatpush1.msra.mxu0 0.0
    %2530 = vmatprep.subr.mxu0 0.0
    %2531 = vmatpush1.msra.mxu0 0.0
    %2532 = vmatprep.subr.mxu0 0.0
    %2533 = vmatpush1.msra.mxu0 0.0
    %2534 = vmatprep.subr.mxu0 0.0
    %2535 = vmatpush1.msra.mxu0 0.0
    %2536 = vmatprep.subr.mxu0 0.0
    %2537 = vmatpush1.msra.mxu0 0.0
    %2538 = vmatprep.subr.mxu0 0.0
    %2539 = vmatpush1.msra.mxu0 0.0
    %2540 = vmatprep.subr.mxu0 0.0
    %2541 = vmatpush1.msra.mxu0 0.0
    %2542 = vmatprep.subr.mxu0 0.0
    %2543 = vmatpush1.msra.mxu0 0.0
    %2544 = vmatprep.subr.mxu0 0.0
    %2545 = vmatpush1.msra.mxu0 0.0
    %2546 = vmatprep.subr.mxu0 0.0
    %2547 = vmatpush1.msra.mxu0 0.0
    %2548 = vmatprep.subr.mxu0 0.0
    %2549 = vmatpush1.msra.mxu0 0.0
    %2550 = vmatprep.subr.mxu0 0.0
    %2551 = vmatpush1.msra.mxu0 0.0
    %2552 = vmatprep.subr.mxu0 0.0
    %2553 = vmatpush1.msra.mxu0 0.0
    %2554 = vmatprep.subr.mxu0 0.0
    %2555 = vmatpush1.msra.mxu0 0.0
    %2556 = vmatprep.subr.mxu0 0.0
    %2557 = vmatpush1.msra.mxu0 0.0
    %2558 = vmatprep.subr.mxu0 0.0
    %2559 = vmatpush1.msra.mxu0 0.0
    %2560 = vmatprep.subr.mxu0 0.0
    %2561 = vmatpush1.msra.mxu0 0.0
    %2562 = vmatprep.subr.mxu0 0.0
    %2563 = vmatpush1.msra.mxu0 0.0
    %2564 = vmatprep.subr.mxu0 0.0
    %2565 = vmatpush1.msra.mxu0 0.0
    %2566 = vmatprep.subr.mxu0 0.0
    %2567 = vmatpush1.msra.mxu0 0.0
    %2568 = vmatprep.subr.mxu0 0.0
    %2569 = vmatpush1.msra.mxu0 0.0
    %2570 = vmatprep.subr.mxu0 0.0
    %2571 = vmatpush1.msra.mxu0 0.0
    %2572 = vmatprep.subr.mxu0 0.0
    %2573 = vmatpush1.msra.mxu0 0.0
    %2574 = vmatprep.subr.mxu0 0.0
    %2575 = vmatpush1.msra.mxu0 0.0
    %2576 = vmatprep.subr.mxu0 0.0
    %2577 = vmatpush1.msra.mxu0 0.0
    %2578 = vmatprep.subr.mxu0 0.0
    %2579 = vmatpush1.msra.mxu0 0.0
    %2580 = vmatprep.subr.mxu0 0.0
    %2581 = vmatpush1.msra.mxu0 0.0
    %2582 = vmatprep.mubr.f32.mxu0 0.0
    %2583 = vmatmul.mubr.f32.gmra.mrb[0].mxu0 %v2516
    %v2584 = vpop.f32.mrb[0].mxu0
    %v2585 = vadd.f32 %v237, %v2584
    %v2586 = vpop.f32.mrb[0].mxu0
    %2587 = vdwg.mxu0
    %v2588 = vxor.u32 %v2585, 2147483648
    %v2589 = vmul.f32 %v2588, 1.442695
    %v2590 = vpow.pop %v2589
    %v2591 = vadd.f32 %v2590, 1.0
    %v2592 = vrcp.pop %v2591
    %v2593 = vmul.f32 1.0, %v2592
    %v2594 = vtanh.pop %v2585
    %v2595 = vmul.f32 %v2593, %v1982
    %2597 = vrot.lane.b32.xlu0 %v2594, 92
    %v2598 = vpop.permute.xlu0 %2597
    %v2600 = vmul.f32 %v2593, %v2598
    %2602 = vrot.lane.b32.xlu0 %v2600, 12
    %v2603 = vpop.permute.xlu0 %2602
    %v2605 = vadd.f32 %v2595, %v2603
    %v2606 = vtanh.pop %v2605
    %2608 = vrot.lane.b32.xlu0 %v2606, 12
    %v2609 = vpop.permute.xlu0 %2608
    %v2611 = vmul.f32 %v2593, %v2609
    %2613 = vrot.lane.b32.xlu0 %v2611, 104
    %v2614 = vpop.permute.xlu0 %2613
    %2616 = vrot.lane.b32.xlu0 %v2093, 116
    %v2617 = vpop.permute.xlu0 %2616
    %v2619 = vsel %vm277, %v2614, %v2617
    %v2621 = vsel %vm396, %v2619, 0
    %2623 = vmatprep.subr.mxu0 0.0
    %2624 = vmatpush1.msra.mxu0 %v736
    %2625 = vmatprep.subr.mxu0 0.0
    %2626 = vmatpush1.msra.mxu0 %v737
    %2627 = vmatprep.subr.mxu0 0.0
    %2628 = vmatpush1.msra.mxu0 %v738
    %2629 = vmatprep.subr.mxu0 0.0
    %2630 = vmatpush1.msra.mxu0 0.0
    %2631 = vmatprep.subr.mxu0 0.0
    %2632 = vmatpush1.msra.mxu0 0.0
    %2633 = vmatprep.subr.mxu0 0.0
    %2634 = vmatpush1.msra.mxu0 0.0
    %2635 = vmatprep.subr.mxu0 0.0
    %2636 = vmatpush1.msra.mxu0 0.0
    %2637 = vmatprep.subr.mxu0 0.0
    %2638 = vmatpush1.msra.mxu0 0.0
    %2639 = vmatprep.subr.mxu0 0.0
    %2640 = vmatpush1.msra.mxu0 0.0
    %2641 = vmatprep.subr.mxu0 0.0
    %2642 = vmatpush1.msra.mxu0 0.0
    %2643 = vmatprep.subr.mxu0 0.0
    %2644 = vmatpush1.msra.mxu0 0.0
    %2645 = vmatprep.subr.mxu0 0.0
    %2646 = vmatpush1.msra.mxu0 0.0
    %2647 = vmatprep.subr.mxu0 0.0
    %2648 = vmatpush1.msra.mxu0 0.0
    %2649 = vmatprep.subr.mxu0 0.0
    %2650 = vmatpush1.msra.mxu0 0.0
    %2651 = vmatprep.subr.mxu0 0.0
    %2652 = vmatpush1.msra.mxu0 0.0
    %2653 = vmatprep.subr.mxu0 0.0
    %2654 = vmatpush1.msra.mxu0 0.0
    %2655 = vmatprep.subr.mxu0 0.0
    %2656 = vmatpush1.msra.mxu0 0.0
    %2657 = vmatprep.subr.mxu0 0.0
    %2658 = vmatpush1.msra.mxu0 0.0
    %2659 = vmatprep.subr.mxu0 0.0
    %2660 = vmatpush1.msra.mxu0 0.0
    %2661 = vmatprep.subr.mxu0 0.0
    %2662 = vmatpush1.msra.mxu0 0.0
    %2663 = vmatprep.subr.mxu0 0.0
    %2664 = vmatpush1.msra.mxu0 0.0
    %2665 = vmatprep.subr.mxu0 0.0
    %2666 = vmatpush1.msra.mxu0 0.0
    %2667 = vmatprep.subr.mxu0 0.0
    %2668 = vmatpush1.msra.mxu0 0.0
    %2669 = vmatprep.subr.mxu0 0.0
    %2670 = vmatpush1.msra.mxu0 0.0
    %2671 = vmatprep.subr.mxu0 0.0
    %2672 = vmatpush1.msra.mxu0 0.0
    %2673 = vmatprep.subr.mxu0 0.0
    %2674 = vmatpush1.msra.mxu0 0.0
    %2675 = vmatprep.subr.mxu0 0.0
    %2676 = vmatpush1.msra.mxu0 0.0
    %2677 = vmatprep.subr.mxu0 0.0
    %2678 = vmatpush1.msra.mxu0 0.0
    %2679 = vmatprep.subr.mxu0 0.0
    %2680 = vmatpush1.msra.mxu0 0.0
    %2681 = vmatprep.subr.mxu0 0.0
    %2682 = vmatpush1.msra.mxu0 0.0
    %2683 = vmatprep.subr.mxu0 0.0
    %2684 = vmatpush1.msra.mxu0 0.0
    %2685 = vmatprep.subr.mxu0 0.0
    %2686 = vmatpush1.msra.mxu0 0.0
    %2687 = vmatprep.mubr.f32.mxu0 0.0
    %2688 = vmatmul.mubr.f32.gmra.mrb[0].mxu0 %v2621
    %v2689 = vpop.f32.mrb[0].mxu0
    %v2690 = vadd.f32 %v245, %v2689
    %v2691 = vpop.f32.mrb[0].mxu0
    %2692 = vdwg.mxu0
    %v2693 = vxor.u32 %v2690, 2147483648
    %v2694 = vmul.f32 %v2693, 1.442695
    %v2695 = vpow.pop %v2694
    %v2696 = vadd.f32 %v2695, 1.0
    %v2697 = vrcp.pop %v2696
    %v2698 = vmul.f32 1.0, %v2697
    %v2699 = vtanh.pop %v2690
    %v2700 = vmul.f32 %v2698, %v2087
    %2702 = vrot.lane.b32.xlu0 %v2699, 92
    %v2703 = vpop.permute.xlu0 %2702
    %v2705 = vmul.f32 %v2698, %v2703
    %2707 = vrot.lane.b32.xlu0 %v2705, 12
    %v2708 = vpop.permute.xlu0 %2707
    %v2710 = vadd.f32 %v2700, %v2708
    %v2711 = vtanh.pop %v2710
    %2713 = vrot.lane.b32.xlu0 %v2711, 12
    %v2714 = vpop.permute.xlu0 %2713
    %v2716 = vmul.f32 %v2698, %v2714
    %2718 = vrot.lane.b32.xlu0 %v2716, 104
    %v2719 = vpop.permute.xlu0 %2718
    %2722 = vrot.lane.b32.xlu0 %v2199, 116
    %v2723 = vpop.permute.xlu0 %2722
    %v2725 = vsel %vm277, %v2719, %v2723
    %v2727 = vsel %vm396, %v2725, 0
    %2729 = vmatprep.subr.mxu0 0.0
    %2730 = vmatpush1.msra.mxu0 %v850
    %2731 = vmatprep.subr.mxu0 0.0
    %2732 = vmatpush1.msra.mxu0 %v851
    %2733 = vmatprep.subr.mxu0 0.0
    %2734 = vmatpush1.msra.mxu0 %v852
    %2735 = vmatprep.subr.mxu0 0.0
    %2736 = vmatpush1.msra.mxu0 0.0
    %2737 = vmatprep.subr.mxu0 0.0
    %2738 = vmatpush1.msra.mxu0 0.0
    %2739 = vmatprep.subr.mxu0 0.0
    %2740 = vmatpush1.msra.mxu0 0.0
    %2741 = vmatprep.subr.mxu0 0.0
    %2742 = vmatpush1.msra.mxu0 0.0
    %2743 = vmatprep.subr.mxu0 0.0
    %2744 = vmatpush1.msra.mxu0 0.0
    %2745 = vmatprep.subr.mxu0 0.0
    %2746 = vmatpush1.msra.mxu0 0.0
    %2747 = vmatprep.subr.mxu0 0.0
    %2748 = vmatpush1.msra.mxu0 0.0
    %2749 = vmatprep.subr.mxu0 0.0
    %2750 = vmatpush1.msra.mxu0 0.0
    %2751 = vmatprep.subr.mxu0 0.0
    %2752 = vmatpush1.msra.mxu0 0.0
    %2753 = vmatprep.subr.mxu0 0.0
    %2754 = vmatpush1.msra.mxu0 0.0
    %2755 = vmatprep.subr.mxu0 0.0
    %2756 = vmatpush1.msra.mxu0 0.0
    %2757 = vmatprep.subr.mxu0 0.0
    %2758 = vmatpush1.msra.mxu0 0.0
    %2759 = vmatprep.subr.mxu0 0.0
    %2760 = vmatpush1.msra.mxu0 0.0
    %2761 = vmatprep.subr.mxu0 0.0
    %2762 = vmatpush1.msra.mxu0 0.0
    %2763 = vmatprep.subr.mxu0 0.0
    %2764 = vmatpush1.msra.mxu0 0.0
    %2765 = vmatprep.subr.mxu0 0.0
    %2766 = vmatpush1.msra.mxu0 0.0
    %2767 = vmatprep.subr.mxu0 0.0
    %2768 = vmatpush1.msra.mxu0 0.0
    %2769 = vmatprep.subr.mxu0 0.0
    %2770 = vmatpush1.msra.mxu0 0.0
    %2771 = vmatprep.subr.mxu0 0.0
    %2772 = vmatpush1.msra.mxu0 0.0
    %2773 = vmatprep.subr.mxu0 0.0
    %2774 = vmatpush1.msra.mxu0 0.0
    %2775 = vmatprep.subr.mxu0 0.0
    %2776 = vmatpush1.msra.mxu0 0.0
    %2777 = vmatprep.subr.mxu0 0.0
    %2778 = vmatpush1.msra.mxu0 0.0
    %2779 = vmatprep.subr.mxu0 0.0
    %2780 = vmatpush1.msra.mxu0 0.0
    %2781 = vmatprep.subr.mxu0 0.0
    %2782 = vmatpush1.msra.mxu0 0.0
    %2783 = vmatprep.subr.mxu0 0.0
    %2784 = vmatpush1.msra.mxu0 0.0
    %2785 = vmatprep.subr.mxu0 0.0
    %2786 = vmatpush1.msra.mxu0 0.0
    %2787 = vmatprep.subr.mxu0 0.0
    %2788 = vmatpush1.msra.mxu0 0.0
    %2789 = vmatprep.subr.mxu0 0.0
    %2790 = vmatpush1.msra.mxu0 0.0
    %2791 = vmatprep.subr.mxu0 0.0
    %2792 = vmatpush1.msra.mxu0 0.0
    %2793 = vmatprep.mubr.f32.mxu0 0.0
    %2794 = vmatmul.mubr.f32.gmra.mrb[0].mxu0 %v2727
    %v2795 = vpop.f32.mrb[0].mxu0
    %v2796 = vadd.f32 %v253, %v2795
    %v2797 = vpop.f32.mrb[0].mxu0
    %2798 = vdwg.mxu0
    %v2799 = vxor.u32 %v2796, 2147483648
    %v2800 = vmul.f32 %v2799, 1.442695
    %v2801 = vpow.pop %v2800
    %v2802 = vadd.f32 %v2801, 1.0
    %v2803 = vrcp.pop %v2802
    %v2804 = vmul.f32 1.0, %v2803
    %v2805 = vtanh.pop %v2796
    %v2806 = vmul.f32 %v2804, %v2193
    %2808 = vrot.lane.b32.xlu0 %v2805, 92
    %v2809 = vpop.permute.xlu0 %2808
    %v2811 = vmul.f32 %v2804, %v2809
    %2813 = vrot.lane.b32.xlu0 %v2811, 12
    %v2814 = vpop.permute.xlu0 %2813
    %v2816 = vadd.f32 %v2806, %v2814
    %v2817 = vtanh.pop %v2816
    %2819 = vrot.lane.b32.xlu0 %v2817, 12
    %v2820 = vpop.permute.xlu0 %2819
    %v2822 = vmul.f32 %v2804, %v2820
    %v2823 = vsel %vm277, %v2299, 0
    %2825 = vmatprep.subr.mxu0 0.0
    %2826 = vmatpush1.msra.mxu0 %v214
    %2827 = vmatprep.subr.mxu0 0.0
    %2828 = vmatpush1.msra.mxu0 %v283
    %2829 = vmatprep.subr.mxu0 0.0
    %2830 = vmatpush1.msra.mxu0 0.0
    %2831 = vmatprep.subr.mxu0 0.0
    %2832 = vmatpush1.msra.mxu0 0.0
    %2833 = vmatprep.subr.mxu0 0.0
    %2834 = vmatpush1.msra.mxu0 0.0
    %2835 = vmatprep.subr.mxu0 0.0
    %2836 = vmatpush1.msra.mxu0 0.0
    %2837 = vmatprep.subr.mxu0 0.0
    %2838 = vmatpush1.msra.mxu0 0.0
    %2839 = vmatprep.subr.mxu0 0.0
    %2840 = vmatpush1.msra.mxu0 0.0
    %2841 = vmatprep.subr.mxu0 0.0
    %2842 = vmatpush1.msra.mxu0 0.0
    %2843 = vmatprep.subr.mxu0 0.0
    %2844 = vmatpush1.msra.mxu0 0.0
    %2845 = vmatprep.subr.mxu0 0.0
    %2846 = vmatpush1.msra.mxu0 0.0
    %2847 = vmatprep.subr.mxu0 0.0
    %2848 = vmatpush1.msra.mxu0 0.0
    %2849 = vmatprep.subr.mxu0 0.0
    %2850 = vmatpush1.msra.mxu0 0.0
    %2851 = vmatprep.subr.mxu0 0.0
    %2852 = vmatpush1.msra.mxu0 0.0
    %2853 = vmatprep.subr.mxu0 0.0
    %2854 = vmatpush1.msra.mxu0 0.0
    %2855 = vmatprep.subr.mxu0 0.0
    %2856 = vmatpush1.msra.mxu0 0.0
    %2857 = vmatprep.subr.mxu0 0.0
    %2858 = vmatpush1.msra.mxu0 0.0
    %2859 = vmatprep.subr.mxu0 0.0
    %2860 = vmatpush1.msra.mxu0 0.0
    %2861 = vmatprep.subr.mxu0 0.0
    %2862 = vmatpush1.msra.mxu0 0.0
    %2863 = vmatprep.subr.mxu0 0.0
    %2864 = vmatpush1.msra.mxu0 0.0
    %2865 = vmatprep.subr.mxu0 0.0
    %2866 = vmatpush1.msra.mxu0 0.0
    %2867 = vmatprep.subr.mxu0 0.0
    %2868 = vmatpush1.msra.mxu0 0.0
    %2869 = vmatprep.subr.mxu0 0.0
    %2870 = vmatpush1.msra.mxu0 0.0
    %2871 = vmatprep.subr.mxu0 0.0
    %2872 = vmatpush1.msra.mxu0 0.0
    %2873 = vmatprep.subr.mxu0 0.0
    %2874 = vmatpush1.msra.mxu0 0.0
    %2875 = vmatprep.subr.mxu0 0.0
    %2876 = vmatpush1.msra.mxu0 0.0
    %2877 = vmatprep.subr.mxu0 0.0
    %2878 = vmatpush1.msra.mxu0 0.0
    %2879 = vmatprep.subr.mxu0 0.0
    %2880 = vmatpush1.msra.mxu0 0.0
    %2881 = vmatprep.subr.mxu0 0.0
    %2882 = vmatpush1.msra.mxu0 0.0
    %2883 = vmatprep.subr.mxu0 0.0
    %2884 = vmatpush1.msra.mxu0 0.0
    %2885 = vmatprep.subr.mxu0 0.0
    %2886 = vmatpush1.msra.mxu0 0.0
    %2887 = vmatprep.subr.mxu0 0.0
    %2888 = vmatpush1.msra.mxu0 0.0
    %2889 = vmatprep.mubr.f32.mxu0 0.0
    %2890 = vmatmul.mubr.f32.gmra.mrb[0].mxu0 %v2823
    %v2891 = vpop.f32.mrb[0].mxu0
    %v2892 = vadd.f32 0.0, %v2891
    %v2893 = vpop.f32.mrb[0].mxu0
    %2894 = vdwg.mxu0
    %v2895 = vadd.f32 %v211, %v2892
    %v2896 = vxor.u32 %v2895, 2147483648
    %v2897 = vmul.f32 %v2896, 1.442695
    %v2898 = vpow.pop %v2897
    %v2899 = vadd.f32 %v2898, 1.0
    %v2900 = vrcp.pop %v2899
    %v2901 = vmul.f32 1.0, %v2900
    %v2902 = vtanh.pop %v2895
    %v2903 = vmul.f32 %v2901, %v2290
    %2905 = vrot.lane.b32.xlu0 %v2902, 92
    %v2906 = vpop.permute.xlu0 %2905
    %v2908 = vmul.f32 %v2901, %v2906
    %2910 = vrot.lane.b32.xlu0 %v2908, 12
    %v2911 = vpop.permute.xlu0 %2910
    %v2913 = vadd.f32 %v2903, %v2911
    %v2914 = vtanh.pop %v2913
    %2916 = vrot.lane.b32.xlu0 %v2914, 12
    %v2917 = vpop.permute.xlu0 %2916
    %v2919 = vmul.f32 %v2901, %v2917
    %2921 = vrot.lane.b32.xlu0 %v2919, 104
    %v2922 = vpop.permute.xlu0 %2921
    %2924 = vrot.lane.b32.xlu0 %v2401, 116
    %v2925 = vpop.permute.xlu0 %2924
    %v2927 = vsel %vm277, %v2922, %v2925
    %v2929 = vsel %vm396, %v2927, 0
    %2931 = vmatprep.subr.mxu0 0.0
    %2932 = vmatpush1.msra.mxu0 %v393
    %2933 = vmatprep.subr.mxu0 0.0
    %2934 = vmatpush1.msra.mxu0 %v394
    %2935 = vmatprep.subr.mxu0 0.0
    %2936 = vmatpush1.msra.mxu0 %v395
    %2937 = vmatprep.subr.mxu0 0.0
    %2938 = vmatpush1.msra.mxu0 0.0
    %2939 = vmatprep.subr.mxu0 0.0
    %2940 = vmatpush1.msra.mxu0 0.0
    %2941 = vmatprep.subr.mxu0 0.0
    %2942 = vmatpush1.msra.mxu0 0.0
    %2943 = vmatprep.subr.mxu0 0.0
    %2944 = vmatpush1.msra.mxu0 0.0
    %2945 = vmatprep.subr.mxu0 0.0
    %2946 = vmatpush1.msra.mxu0 0.0
    %2947 = vmatprep.subr.mxu0 0.0
    %2948 = vmatpush1.msra.mxu0 0.0
    %2949 = vmatprep.subr.mxu0 0.0
    %2950 = vmatpush1.msra.mxu0 0.0
    %2951 = vmatprep.subr.mxu0 0.0
    %2952 = vmatpush1.msra.mxu0 0.0
    %2953 = vmatprep.subr.mxu0 0.0
    %2954 = vmatpush1.msra.mxu0 0.0
    %2955 = vmatprep.subr.mxu0 0.0
    %2956 = vmatpush1.msra.mxu0 0.0
    %2957 = vmatprep.subr.mxu0 0.0
    %2958 = vmatpush1.msra.mxu0 0.0
    %2959 = vmatprep.subr.mxu0 0.0
    %2960 = vmatpush1.msra.mxu0 0.0
    %2961 = vmatprep.subr.mxu0 0.0
    %2962 = vmatpush1.msra.mxu0 0.0
    %2963 = vmatprep.subr.mxu0 0.0
    %2964 = vmatpush1.msra.mxu0 0.0
    %2965 = vmatprep.subr.mxu0 0.0
    %2966 = vmatpush1.msra.mxu0 0.0
    %2967 = vmatprep.subr.mxu0 0.0
    %2968 = vmatpush1.msra.mxu0 0.0
    %2969 = vmatprep.subr.mxu0 0.0
    %2970 = vmatpush1.msra.mxu0 0.0
    %2971 = vmatprep.subr.mxu0 0.0
    %2972 = vmatpush1.msra.mxu0 0.0
    %2973 = vmatprep.subr.mxu0 0.0
    %2974 = vmatpush1.msra.mxu0 0.0
    %2975 = vmatprep.subr.mxu0 0.0
    %2976 = vmatpush1.msra.mxu0 0.0
    %2977 = vmatprep.subr.mxu0 0.0
    %2978 = vmatpush1.msra.mxu0 0.0
    %2979 = vmatprep.subr.mxu0 0.0
    %2980 = vmatpush1.msra.mxu0 0.0
    %2981 = vmatprep.subr.mxu0 0.0
    %2982 = vmatpush1.msra.mxu0 0.0
    %2983 = vmatprep.subr.mxu0 0.0
    %2984 = vmatpush1.msra.mxu0 0.0
    %2985 = vmatprep.subr.mxu0 0.0
    %2986 = vmatpush1.msra.mxu0 0.0
    %2987 = vmatprep.subr.mxu0 0.0
    %2988 = vmatpush1.msra.mxu0 0.0
    %2989 = vmatprep.subr.mxu0 0.0
    %2990 = vmatpush1.msra.mxu0 0.0
    %2991 = vmatprep.subr.mxu0 0.0
    %2992 = vmatpush1.msra.mxu0 0.0
    %2993 = vmatprep.subr.mxu0 0.0
    %2994 = vmatpush1.msra.mxu0 0.0
    %2995 = vmatprep.mubr.f32.mxu0 0.0
    %2996 = vmatmul.mubr.f32.gmra.mrb[0].mxu0 %v2929
    %v2997 = vpop.f32.mrb[0].mxu0
    %v2998 = vadd.f32 %v221, %v2997
    %v2999 = vpop.f32.mrb[0].mxu0
    %3000 = vdwg.mxu0
    %v3001 = vxor.u32 %v2998, 2147483648
    %v3002 = vmul.f32 %v3001, 1.442695
    %v3003 = vpow.pop %v3002
    %v3004 = vadd.f32 %v3003, 1.0
    %v3005 = vrcp.pop %v3004
    %v3006 = vmul.f32 1.0, %v3005
    %v3007 = vtanh.pop %v2998
    %v3008 = vmul.f32 %v3006, %v2395
    %3010 = vrot.lane.b32.xlu0 %v3007, 92
    %v3011 = vpop.permute.xlu0 %3010
    %v3013 = vmul.f32 %v3006, %v3011
    %3015 = vrot.lane.b32.xlu0 %v3013, 12
    %v3016 = vpop.permute.xlu0 %3015
    %v3018 = vadd.f32 %v3008, %v3016
    %v3019 = vtanh.pop %v3018
    %3021 = vrot.lane.b32.xlu0 %v3019, 12
    %v3022 = vpop.permute.xlu0 %3021
    %v3024 = vmul.f32 %v3006, %v3022
    %3026 = vrot.lane.b32.xlu0 %v3024, 104
    %v3027 = vpop.permute.xlu0 %3026
    %3029 = vrot.lane.b32.xlu0 %v2506, 116
    %v3030 = vpop.permute.xlu0 %3029
    %v3032 = vsel %vm277, %v3027, %v3030
    %v3034 = vsel %vm396, %v3032, 0
    %3036 = vmatprep.subr.mxu0 0.0
    %3037 = vmatpush1.msra.mxu0 %v508
    %3038 = vmatprep.subr.mxu0 0.0
    %3039 = vmatpush1.msra.mxu0 %v509
    %3040 = vmatprep.subr.mxu0 0.0
    %3041 = vmatpush1.msra.mxu0 %v510
    %3042 = vmatprep.subr.mxu0 0.0
    %3043 = vmatpush1.msra.mxu0 0.0
    %3044 = vmatprep.subr.mxu0 0.0
    %3045 = vmatpush1.msra.mxu0 0.0
    %3046 = vmatprep.subr.mxu0 0.0
    %3047 = vmatpush1.msra.mxu0 0.0
    %3048 = vmatprep.subr.mxu0 0.0
    %3049 = vmatpush1.msra.mxu0 0.0
    %3050 = vmatprep.subr.mxu0 0.0
    %3051 = vmatpush1.msra.mxu0 0.0
    %3052 = vmatprep.subr.mxu0 0.0
    %3053 = vmatpush1.msra.mxu0 0.0
    %3054 = vmatprep.subr.mxu0 0.0
    %3055 = vmatpush1.msra.mxu0 0.0
    %3056 = vmatprep.subr.mxu0 0.0
    %3057 = vmatpush1.msra.mxu0 0.0
    %3058 = vmatprep.subr.mxu0 0.0
    %3059 = vmatpush1.msra.mxu0 0.0
    %3060 = vmatprep.subr.mxu0 0.0
    %3061 = vmatpush1.msra.mxu0 0.0
    %3062 = vmatprep.subr.mxu0 0.0
    %3063 = vmatpush1.msra.mxu0 0.0
    %3064 = vmatprep.subr.mxu0 0.0
    %3065 = vmatpush1.msra.mxu0 0.0
    %3066 = vmatprep.subr.mxu0 0.0
    %3067 = vmatpush1.msra.mxu0 0.0
    %3068 = vmatprep.subr.mxu0 0.0
    %3069 = vmatpush1.msra.mxu0 0.0
    %3070 = vmatprep.subr.mxu0 0.0
    %3071 = vmatpush1.msra.mxu0 0.0
    %3072 = vmatprep.subr.mxu0 0.0
    %3073 = vmatpush1.msra.mxu0 0.0
    %3074 = vmatprep.subr.mxu0 0.0
    %3075 = vmatpush1.msra.mxu0 0.0
    %3076 = vmatprep.subr.mxu0 0.0
    %3077 = vmatpush1.msra.mxu0 0.0
    %3078 = vmatprep.subr.mxu0 0.0
    %3079 = vmatpush1.msra.mxu0 0.0
    %3080 = vmatprep.subr.mxu0 0.0
    %3081 = vmatpush1.msra.mxu0 0.0
    %3082 = vmatprep.subr.mxu0 0.0
    %3083 = vmatpush1.msra.mxu0 0.0
    %3084 = vmatprep.subr.mxu0 0.0
    %3085 = vmatpush1.msra.mxu0 0.0
    %3086 = vmatprep.subr.mxu0 0.0
    %3087 = vmatpush1.msra.mxu0 0.0
    %3088 = vmatprep.subr.mxu0 0.0
    %3089 = vmatpush1.msra.mxu0 0.0
    %3090 = vmatprep.subr.mxu0 0.0
    %3091 = vmatpush1.msra.mxu0 0.0
    %3092 = vmatprep.subr.mxu0 0.0
    %3093 = vmatpush1.msra.mxu0 0.0
    %3094 = vmatprep.subr.mxu0 0.0
    %3095 = vmatpush1.msra.mxu0 0.0
    %3096 = vmatprep.subr.mxu0 0.0
    %3097 = vmatpush1.msra.mxu0 0.0
    %3098 = vmatprep.subr.mxu0 0.0
    %3099 = vmatpush1.msra.mxu0 0.0
    %3100 = vmatprep.mubr.f32.mxu0 0.0
    %3101 = vmatmul.mubr.f32.gmra.mrb[0].mxu0 %v3034
    %v3102 = vpop.f32.mrb[0].mxu0
    %v3103 = vadd.f32 %v229, %v3102
    %v3104 = vpop.f32.mrb[0].mxu0
    %3105 = vdwg.mxu0
    %v3106 = vxor.u32 %v3103, 2147483648
    %v3107 = vmul.f32 %v3106, 1.442695
    %v3108 = vpow.pop %v3107
    %v3109 = vadd.f32 %v3108, 1.0
    %v3110 = vrcp.pop %v3109
    %v3111 = vmul.f32 1.0, %v3110
    %v3112 = vtanh.pop %v3103
    %v3113 = vmul.f32 %v3111, %v2500
    %3115 = vrot.lane.b32.xlu0 %v3112, 92
    %v3116 = vpop.permute.xlu0 %3115
    %v3118 = vmul.f32 %v3111, %v3116
    %3120 = vrot.lane.b32.xlu0 %v3118, 12
    %v3121 = vpop.permute.xlu0 %3120
    %v3123 = vadd.f32 %v3113, %v3121
    %v3124 = vtanh.pop %v3123
    %3126 = vrot.lane.b32.xlu0 %v3124, 12
    %v3127 = vpop.permute.xlu0 %3126
    %v3129 = vmul.f32 %v3111, %v3127
    %3131 = vrot.lane.b32.xlu0 %v3129, 104
    %v3132 = vpop.permute.xlu0 %3131
    %3134 = vrot.lane.b32.xlu0 %v2611, 116
    %v3135 = vpop.permute.xlu0 %3134
    %v3137 = vsel %vm277, %v3132, %v3135
    %v3139 = vsel %vm396, %v3137, 0
    %3141 = vmatprep.subr.mxu0 0.0
    %3142 = vmatpush1.msra.mxu0 %v622
    %3143 = vmatprep.subr.mxu0 0.0
    %3144 = vmatpush1.msra.mxu0 %v623
    %3145 = vmatprep.subr.mxu0 0.0
    %3146 = vmatpush1.msra.mxu0 %v624
    %3147 = vmatprep.subr.mxu0 0.0
    %3148 = vmatpush1.msra.mxu0 0.0
    %3149 = vmatprep.subr.mxu0 0.0
    %3150 = vmatpush1.msra.mxu0 0.0
    %3151 = vmatprep.subr.mxu0 0.0
    %3152 = vmatpush1.msra.mxu0 0.0
    %3153 = vmatprep.subr.mxu0 0.0
    %3154 = vmatpush1.msra.mxu0 0.0
    %3155 = vmatprep.subr.mxu0 0.0
    %3156 = vmatpush1.msra.mxu0 0.0
    %3157 = vmatprep.subr.mxu0 0.0
    %3158 = vmatpush1.msra.mxu0 0.0
    %3159 = vmatprep.subr.mxu0 0.0
    %3160 = vmatpush1.msra.mxu0 0.0
    %3161 = vmatprep.subr.mxu0 0.0
    %3162 = vmatpush1.msra.mxu0 0.0
    %3163 = vmatprep.subr.mxu0 0.0
    %3164 = vmatpush1.msra.mxu0 0.0
    %3165 = vmatprep.subr.mxu0 0.0
    %3166 = vmatpush1.msra.mxu0 0.0
    %3167 = vmatprep.subr.mxu0 0.0
    %3168 = vmatpush1.msra.mxu0 0.0
    %3169 = vmatprep.subr.mxu0 0.0
    %3170 = vmatpush1.msra.mxu0 0.0
    %3171 = vmatprep.subr.mxu0 0.0
    %3172 = vmatpush1.msra.mxu0 0.0
    %3173 = vmatprep.subr.mxu0 0.0
    %3174 = vmatpush1.msra.mxu0 0.0
    %3175 = vmatprep.subr.mxu0 0.0
    %3176 = vmatpush1.msra.mxu0 0.0
    %3177 = vmatprep.subr.mxu0 0.0
    %3178 = vmatpush1.msra.mxu0 0.0
    %3179 = vmatprep.subr.mxu0 0.0
    %3180 = vmatpush1.msra.mxu0 0.0
    %3181 = vmatprep.subr.mxu0 0.0
    %3182 = vmatpush1.msra.mxu0 0.0
    %3183 = vmatprep.subr.mxu0 0.0
    %3184 = vmatpush1.msra.mxu0 0.0
    %3185 = vmatprep.subr.mxu0 0.0
    %3186 = vmatpush1.msra.mxu0 0.0
    %3187 = vmatprep.subr.mxu0 0.0
    %3188 = vmatpush1.msra.mxu0 0.0
    %3189 = vmatprep.subr.mxu0 0.0
    %3190 = vmatpush1.msra.mxu0 0.0
    %3191 = vmatprep.subr.mxu0 0.0
    %3192 = vmatpush1.msra.mxu0 0.0
    %3193 = vmatprep.subr.mxu0 0.0
    %3194 = vmatpush1.msra.mxu0 0.0
    %3195 = vmatprep.subr.mxu0 0.0
    %3196 = vmatpush1.msra.mxu0 0.0
    %3197 = vmatprep.subr.mxu0 0.0
    %3198 = vmatpush1.msra.mxu0 0.0
    %3199 = vmatprep.subr.mxu0 0.0
    %3200 = vmatpush1.msra.mxu0 0.0
    %3201 = vmatprep.subr.mxu0 0.0
    %3202 = vmatpush1.msra.mxu0 0.0
    %3203 = vmatprep.subr.mxu0 0.0
    %3204 = vmatpush1.msra.mxu0 0.0
    %3205 = vmatprep.mubr.f32.mxu0 0.0
    %3206 = vmatmul.mubr.f32.gmra.mrb[0].mxu0 %v3139
    %v3207 = vpop.f32.mrb[0].mxu0
    %v3208 = vadd.f32 %v237, %v3207
    %v3209 = vpop.f32.mrb[0].mxu0
    %3210 = vdwg.mxu0
    %v3211 = vxor.u32 %v3208, 2147483648
    %v3212 = vmul.f32 %v3211, 1.442695
    %v3213 = vpow.pop %v3212
    %v3214 = vadd.f32 %v3213, 1.0
    %v3215 = vrcp.pop %v3214
    %v3216 = vmul.f32 1.0, %v3215
    %v3217 = vtanh.pop %v3208
    %v3218 = vmul.f32 %v3216, %v2605
    %3220 = vrot.lane.b32.xlu0 %v3217, 92
    %v3221 = vpop.permute.xlu0 %3220
    %v3223 = vmul.f32 %v3216, %v3221
    %3225 = vrot.lane.b32.xlu0 %v3223, 12
    %v3226 = vpop.permute.xlu0 %3225
    %v3228 = vadd.f32 %v3218, %v3226
    %v3229 = vtanh.pop %v3228
    %3231 = vrot.lane.b32.xlu0 %v3229, 12
    %v3232 = vpop.permute.xlu0 %3231
    %v3234 = vmul.f32 %v3216, %v3232
    %3236 = vrot.lane.b32.xlu0 %v3234, 104
    %v3237 = vpop.permute.xlu0 %3236
    %3239 = vrot.lane.b32.xlu0 %v2716, 116
    %v3240 = vpop.permute.xlu0 %3239
    %v3242 = vsel %vm277, %v3237, %v3240
    %v3244 = vsel %vm396, %v3242, 0
    %3246 = vmatprep.subr.mxu0 0.0
    %3247 = vmatpush1.msra.mxu0 %v736
    %3248 = vmatprep.subr.mxu0 0.0
    %3249 = vmatpush1.msra.mxu0 %v737
    %3250 = vmatprep.subr.mxu0 0.0
    %3251 = vmatpush1.msra.mxu0 %v738
    %3252 = vmatprep.subr.mxu0 0.0
    %3253 = vmatpush1.msra.mxu0 0.0
    %3254 = vmatprep.subr.mxu0 0.0
    %3255 = vmatpush1.msra.mxu0 0.0
    %3256 = vmatprep.subr.mxu0 0.0
    %3257 = vmatpush1.msra.mxu0 0.0
    %3258 = vmatprep.subr.mxu0 0.0
    %3259 = vmatpush1.msra.mxu0 0.0
    %3260 = vmatprep.subr.mxu0 0.0
    %3261 = vmatpush1.msra.mxu0 0.0
    %3262 = vmatprep.subr.mxu0 0.0
    %3263 = vmatpush1.msra.mxu0 0.0
    %3264 = vmatprep.subr.mxu0 0.0
    %3265 = vmatpush1.msra.mxu0 0.0
    %3266 = vmatprep.subr.mxu0 0.0
    %3267 = vmatpush1.msra.mxu0 0.0
    %3268 = vmatprep.subr.mxu0 0.0
    %3269 = vmatpush1.msra.mxu0 0.0
    %3270 = vmatprep.subr.mxu0 0.0
    %3271 = vmatpush1.msra.mxu0 0.0
    %3272 = vmatprep.subr.mxu0 0.0
    %3273 = vmatpush1.msra.mxu0 0.0
    %3274 = vmatprep.subr.mxu0 0.0
    %3275 = vmatpush1.msra.mxu0 0.0
    %3276 = vmatprep.subr.mxu0 0.0
    %3277 = vmatpush1.msra.mxu0 0.0
    %3278 = vmatprep.subr.mxu0 0.0
    %3279 = vmatpush1.msra.mxu0 0.0
    %3280 = vmatprep.subr.mxu0 0.0
    %3281 = vmatpush1.msra.mxu0 0.0
    %3282 = vmatprep.subr.mxu0 0.0
    %3283 = vmatpush1.msra.mxu0 0.0
    %3284 = vmatprep.subr.mxu0 0.0
    %3285 = vmatpush1.msra.mxu0 0.0
    %3286 = vmatprep.subr.mxu0 0.0
    %3287 = vmatpush1.msra.mxu0 0.0
    %3288 = vmatprep.subr.mxu0 0.0
    %3289 = vmatpush1.msra.mxu0 0.0
    %3290 = vmatprep.subr.mxu0 0.0
    %3291 = vmatpush1.msra.mxu0 0.0
    %3292 = vmatprep.subr.mxu0 0.0
    %3293 = vmatpush1.msra.mxu0 0.0
    %3294 = vmatprep.subr.mxu0 0.0
    %3295 = vmatpush1.msra.mxu0 0.0
    %3296 = vmatprep.subr.mxu0 0.0
    %3297 = vmatpush1.msra.mxu0 0.0
    %3298 = vmatprep.subr.mxu0 0.0
    %3299 = vmatpush1.msra.mxu0 0.0
    %3300 = vmatprep.subr.mxu0 0.0
    %3301 = vmatpush1.msra.mxu0 0.0
    %3302 = vmatprep.subr.mxu0 0.0
    %3303 = vmatpush1.msra.mxu0 0.0
    %3304 = vmatprep.subr.mxu0 0.0
    %3305 = vmatpush1.msra.mxu0 0.0
    %3306 = vmatprep.subr.mxu0 0.0
    %3307 = vmatpush1.msra.mxu0 0.0
    %3308 = vmatprep.subr.mxu0 0.0
    %3309 = vmatpush1.msra.mxu0 0.0
    %3310 = vmatprep.mubr.f32.mxu0 0.0
    %3311 = vmatmul.mubr.f32.gmra.mrb[0].mxu0 %v3244
    %v3312 = vpop.f32.mrb[0].mxu0
    %v3313 = vadd.f32 %v245, %v3312
    %v3314 = vpop.f32.mrb[0].mxu0
    %3315 = vdwg.mxu0
    %v3316 = vxor.u32 %v3313, 2147483648
    %v3317 = vmul.f32 %v3316, 1.442695
    %v3318 = vpow.pop %v3317
    %v3319 = vadd.f32 %v3318, 1.0
    %v3320 = vrcp.pop %v3319
    %v3321 = vmul.f32 1.0, %v3320
    %v3322 = vtanh.pop %v3313
    %v3323 = vmul.f32 %v3321, %v2710
    %3325 = vrot.lane.b32.xlu0 %v3322, 92
    %v3326 = vpop.permute.xlu0 %3325
    %v3328 = vmul.f32 %v3321, %v3326
    %3330 = vrot.lane.b32.xlu0 %v3328, 12
    %v3331 = vpop.permute.xlu0 %3330
    %v3333 = vadd.f32 %v3323, %v3331
    %v3334 = vtanh.pop %v3333
    %3336 = vrot.lane.b32.xlu0 %v3334, 12
    %v3337 = vpop.permute.xlu0 %3336
    %v3339 = vmul.f32 %v3321, %v3337
    %3341 = vrot.lane.b32.xlu0 %v3339, 104
    %v3342 = vpop.permute.xlu0 %3341
    %3345 = vrot.lane.b32.xlu0 %v2822, 116
    %v3346 = vpop.permute.xlu0 %3345
    %v3348 = vsel %vm277, %v3342, %v3346
    %v3350 = vsel %vm396, %v3348, 0
    %3352 = vmatprep.subr.mxu0 0.0
    %3353 = vmatpush1.msra.mxu0 %v850
    %3354 = vmatprep.subr.mxu0 0.0
    %3355 = vmatpush1.msra.mxu0 %v851
    %3356 = vmatprep.subr.mxu0 0.0
    %3357 = vmatpush1.msra.mxu0 %v852
    %3358 = vmatprep.subr.mxu0 0.0
    %3359 = vmatpush1.msra.mxu0 0.0
    %3360 = vmatprep.subr.mxu0 0.0
    %3361 = vmatpush1.msra.mxu0 0.0
    %3362 = vmatprep.subr.mxu0 0.0
    %3363 = vmatpush1.msra.mxu0 0.0
    %3364 = vmatprep.subr.mxu0 0.0
    %3365 = vmatpush1.msra.mxu0 0.0
    %3366 = vmatprep.subr.mxu0 0.0
    %3367 = vmatpush1.msra.mxu0 0.0
    %3368 = vmatprep.subr.mxu0 0.0
    %3369 = vmatpush1.msra.mxu0 0.0
    %3370 = vmatprep.subr.mxu0 0.0
    %3371 = vmatpush1.msra.mxu0 0.0
    %3372 = vmatprep.subr.mxu0 0.0
    %3373 = vmatpush1.msra.mxu0 0.0
    %3374 = vmatprep.subr.mxu0 0.0
    %3375 = vmatpush1.msra.mxu0 0.0
    %3376 = vmatprep.subr.mxu0 0.0
    %3377 = vmatpush1.msra.mxu0 0.0
    %3378 = vmatprep.subr.mxu0 0.0
    %3379 = vmatpush1.msra.mxu0 0.0
    %3380 = vmatprep.subr.mxu0 0.0
    %3381 = vmatpush1.msra.mxu0 0.0
    %3382 = vmatprep.subr.mxu0 0.0
    %3383 = vmatpush1.msra.mxu0 0.0
    %3384 = vmatprep.subr.mxu0 0.0
    %3385 = vmatpush1.msra.mxu0 0.0
    %3386 = vmatprep.subr.mxu0 0.0
    %3387 = vmatpush1.msra.mxu0 0.0
    %3388 = vmatprep.subr.mxu0 0.0
    %3389 = vmatpush1.msra.mxu0 0.0
    %3390 = vmatprep.subr.mxu0 0.0
    %3391 = vmatpush1.msra.mxu0 0.0
    %3392 = vmatprep.subr.mxu0 0.0
    %3393 = vmatpush1.msra.mxu0 0.0
    %3394 = vmatprep.subr.mxu0 0.0
    %3395 = vmatpush1.msra.mxu0 0.0
    %3396 = vmatprep.subr.mxu0 0.0
    %3397 = vmatpush1.msra.mxu0 0.0
    %3398 = vmatprep.subr.mxu0 0.0
    %3399 = vmatpush1.msra.mxu0 0.0
    %3400 = vmatprep.subr.mxu0 0.0
    %3401 = vmatpush1.msra.mxu0 0.0
    %3402 = vmatprep.subr.mxu0 0.0
    %3403 = vmatpush1.msra.mxu0 0.0
    %3404 = vmatprep.subr.mxu0 0.0
    %3405 = vmatpush1.msra.mxu0 0.0
    %3406 = vmatprep.subr.mxu0 0.0
    %3407 = vmatpush1.msra.mxu0 0.0
    %3408 = vmatprep.subr.mxu0 0.0
    %3409 = vmatpush1.msra.mxu0 0.0
    %3410 = vmatprep.subr.mxu0 0.0
    %3411 = vmatpush1.msra.mxu0 0.0
    %3412 = vmatprep.subr.mxu0 0.0
    %3413 = vmatpush1.msra.mxu0 0.0
    %3414 = vmatprep.subr.mxu0 0.0
    %3415 = vmatpush1.msra.mxu0 0.0
    %3416 = vmatprep.mubr.f32.mxu0 0.0
    %3417 = vmatmul.mubr.f32.gmra.mrb[0].mxu0 %v3350
    %v3418 = vpop.f32.mrb[0].mxu0
    %v3419 = vadd.f32 %v253, %v3418
    %v3420 = vpop.f32.mrb[0].mxu0
    %3421 = vdwg.mxu0
    %v3422 = vxor.u32 %v3419, 2147483648
    %v3423 = vmul.f32 %v3422, 1.442695
    %v3424 = vpow.pop %v3423
    %v3425 = vadd.f32 %v3424, 1.0
    %v3426 = vrcp.pop %v3425
    %v3427 = vmul.f32 1.0, %v3426
    %v3428 = vtanh.pop %v3419
    %v3429 = vmul.f32 %v3427, %v2816
    %3431 = vrot.lane.b32.xlu0 %v3428, 92
    %v3432 = vpop.permute.xlu0 %3431
    %v3434 = vmul.f32 %v3427, %v3432
    %3436 = vrot.lane.b32.xlu0 %v3434, 12
    %v3437 = vpop.permute.xlu0 %3436
    %v3439 = vadd.f32 %v3429, %v3437
    %v3440 = vtanh.pop %v3439
    %3442 = vrot.lane.b32.xlu0 %v3440, 12
    %v3443 = vpop.permute.xlu0 %3442
    %v3445 = vmul.f32 %v3427, %v3443
    %v3446 = vld [vmem:[%s8] sm:$0xff]
    %v3447 = vld [vmem:[%s8 + $0x8] sm:$0xf]
    %v3448 = vld [vmem:[#allocation2] sm:$0x1]
    %v3450 = vlaneseq
    %v3451 = vshrl.u32 %v3450, 7
    %v3452 = vsub.s32 0, %v3451
    %v3453 = vrot.slane %v3448, %v3452
    %3456 = vrot.lane.b32.xlu0 %v3445, 104
    %v3457 = vpop.permute.xlu0 %3456
    %v3458 = vsel %vm277, %v3457, 0
    %v3461 = vsel %vm281, %v3447, 0
    %3463 = vmatprep.subr.mxu0 0.0
    %3464 = vmatpush1.msra.mxu0 %v3446
    %3465 = vmatprep.subr.mxu0 0.0
    %3466 = vmatpush1.msra.mxu0 %v3461
    %3467 = vmatprep.subr.mxu0 0.0
    %3468 = vmatpush1.msra.mxu0 0.0
    %3469 = vmatprep.subr.mxu0 0.0
    %3470 = vmatpush1.msra.mxu0 0.0
    %3471 = vmatprep.subr.mxu0 0.0
    %3472 = vmatpush1.msra.mxu0 0.0
    %3473 = vmatprep.subr.mxu0 0.0
    %3474 = vmatpush1.msra.mxu0 0.0
    %3475 = vmatprep.subr.mxu0 0.0
    %3476 = vmatpush1.msra.mxu0 0.0
    %3477 = vmatprep.subr.mxu0 0.0
    %3478 = vmatpush1.msra.mxu0 0.0
    %3479 = vmatprep.subr.mxu0 0.0
    %3480 = vmatpush1.msra.mxu0 0.0
    %3481 = vmatprep.subr.mxu0 0.0
    %3482 = vmatpush1.msra.mxu0 0.0
    %3483 = vmatprep.subr.mxu0 0.0
    %3484 = vmatpush1.msra.mxu0 0.0
    %3485 = vmatprep.subr.mxu0 0.0
    %3486 = vmatpush1.msra.mxu0 0.0
    %3487 = vmatprep.subr.mxu0 0.0
    %3488 = vmatpush1.msra.mxu0 0.0
    %3489 = vmatprep.subr.mxu0 0.0
    %3490 = vmatpush1.msra.mxu0 0.0
    %3491 = vmatprep.subr.mxu0 0.0
    %3492 = vmatpush1.msra.mxu0 0.0
    %3493 = vmatprep.subr.mxu0 0.0
    %3494 = vmatpush1.msra.mxu0 0.0
    %3495 = vmatprep.subr.mxu0 0.0
    %3496 = vmatpush1.msra.mxu0 0.0
    %3497 = vmatprep.subr.mxu0 0.0
    %3498 = vmatpush1.msra.mxu0 0.0
    %3499 = vmatprep.subr.mxu0 0.0
    %3500 = vmatpush1.msra.mxu0 0.0
    %3501 = vmatprep.subr.mxu0 0.0
    %3502 = vmatpush1.msra.mxu0 0.0
    %3503 = vmatprep.subr.mxu0 0.0
    %3504 = vmatpush1.msra.mxu0 0.0
    %3505 = vmatprep.subr.mxu0 0.0
    %3506 = vmatpush1.msra.mxu0 0.0
    %3507 = vmatprep.subr.mxu0 0.0
    %3508 = vmatpush1.msra.mxu0 0.0
    %3509 = vmatprep.subr.mxu0 0.0
    %3510 = vmatpush1.msra.mxu0 0.0
    %3511 = vmatprep.subr.mxu0 0.0
    %3512 = vmatpush1.msra.mxu0 0.0
    %3513 = vmatprep.subr.mxu0 0.0
    %3514 = vmatpush1.msra.mxu0 0.0
    %3515 = vmatprep.subr.mxu0 0.0
    %3516 = vmatpush1.msra.mxu0 0.0
    %3517 = vmatprep.subr.mxu0 0.0
    %3518 = vmatpush1.msra.mxu0 0.0
    %3519 = vmatprep.subr.mxu0 0.0
    %3520 = vmatpush1.msra.mxu0 0.0
    %3521 = vmatprep.subr.mxu0 0.0
    %3522 = vmatpush1.msra.mxu0 0.0
    %3523 = vmatprep.subr.mxu0 0.0
    %3524 = vmatpush1.msra.mxu0 0.0
    %3525 = vmatprep.subr.mxu0 0.0
    %3526 = vmatpush1.msra.mxu0 0.0
    %3527 = vmatprep.mubr.f32.mxu0 0.0
    %3528 = vmatmul.mubr.f32.gmra.mrb[0].mxu0 %v3458
    %v3529 = vpop.f32.mrb[0].mxu0
    %v3530 = vadd.f32 %v3453, %v3529
    %v3531 = vpop.f32.mrb[0].mxu0
    %3532 = vdwg.mxu0
    %vm3533 = vcmask 7168
    %3534 = vst.msk [vmem:[%s10] sm:$0xff] %vm3533, %v3530
    // Predicated region
    $region58: #{cnn_multi_lstm_forward.1} parent=1 // pred_check
      _
    $region59: #{cnn_multi_lstm_forward.1} parent=1 // pred_check_branch
      %3536 = sbr.rel (0) target = $region61
    $region60: #{cnn_multi_lstm_forward.1} parent=1 // pred_region
      _
    $region61: #{cnn_multi_lstm_forward.1} parent=1 // pred_fallthru
      _
    // Predicated region
    $region62: #{cnn_multi_lstm_forward.1} parent=1 // pred_check
      _
    $region63: #{cnn_multi_lstm_forward.1} parent=1 // pred_check_branch
      %3538 = sbr.rel (0) target = $region65
    $region64: #{cnn_multi_lstm_forward.1} parent=1 // pred_region
      _
    $region65: #{cnn_multi_lstm_forward.1} parent=1 // pred_fallthru
      _
    %3539 = vsyncpa [#allocation4], 1
    %3540 = vsyncpa [#allocation6], 1
    %3541 = vsyncpa [#allocation9], 1

</llo_original>
